<compile_context>
chip_gen: v7x
topology: tpu7x:2x2x1
jax: 0.10.0
libtpu: 0.0.40
codegen_flags: <defaults>
</compile_context>

<pallas_src>
import jax
import jax.numpy as jnp
import numpy as np
from jax.experimental import pallas as pl
from jax.experimental.pallas import tpu as pltpu


# ----------------------------------------------------------------------------
# Single fused kernel: 2x LSTM recurrence + image head + attention pooling +
# exam head.
# ----------------------------------------------------------------------------
def fused_kernel(x_ref, wih1_ref, whh1_ref, wih2_ref, whh2_ref,
                 wimg1_ref, wimg2_ref, watt1_ref, watt2_ref,
                 wex1_ref, wex2_ref, batt1_ref, batt2_ref,
                 img_out_ref, exam_out_ref,
                 xp_scr, h1_scr, h2_scr):
    B, T, D = x_ref.shape
    H = whh1_ref.shape[0]

    # ---- recurrence weights loaded once (hoisted out of the loop) ----
    w_hh1 = whh1_ref[...]
    w_ih2 = wih2_ref[...]
    w_hh2 = whh2_ref[...]

    # ---- layer-1 input projection hoisted out of the serial loop:
    #      one (B*T, D) @ (D, 4H) matmul instead of T tiny ones. ----
    xp_scr[...] = jnp.dot(
        x_ref[...].reshape(B * T, D), wih1_ref[...],
        preferred_element_type=jnp.float32,
    ).reshape(B, T, 4 * H)

    # Lane mask selecting the tanh gate g inside the fused [i|f|g|o] vector so
    # the nonlinearity runs once over the full 4H-lane width.
    lane = jax.lax.broadcasted_iota(jnp.int32, (B, 4 * H), 1)
    tanh_mask = (lane >= 2 * H) & (lane < 3 * H)

    def lstm_cell(gates, c_prev):
        act = jnp.where(tanh_mask, jnp.tanh(gates), jax.nn.sigmoid(gates))
        i_g = act[:, 0 * H:1 * H]
        f_g = act[:, 1 * H:2 * H]
        g_g = act[:, 2 * H:3 * H]
        o_g = act[:, 3 * H:4 * H]
        c_new = f_g * c_prev + i_g * g_g
        h_new = o_g * jnp.tanh(c_new)
        return h_new, c_new

    h1 = jnp.zeros((B, H), jnp.float32)
    c1 = jnp.zeros((B, H), jnp.float32)
    h2 = jnp.zeros((B, H), jnp.float32)
    c2 = jnp.zeros((B, H), jnp.float32)

    # Fully-unrolled recurrence (T small & static); both LSTM layers advance
    # together inside the same loop.
    for t in range(T):
        g1 = xp_scr[:, t, :] + jnp.dot(h1, w_hh1,
                                       preferred_element_type=jnp.float32)
        h1, c1 = lstm_cell(g1, c1)
        h1_scr[:, t, :] = h1

        g2 = (jnp.dot(h1, w_ih2, preferred_element_type=jnp.float32)
              + jnp.dot(h2, w_hh2, preferred_element_type=jnp.float32))
        h2, c2 = lstm_cell(g2, c2)
        h2_scr[:, t, :] = h2

    # -------------------------------- heads --------------------------------
    h1_all = h1_scr[...]          # (B, T, H)
    h2_all = h2_scr[...]
    h_sum = h1_all + h2_all

    # image-level head: relu(h @ W1), then VPU multiply + lane reduce instead
    # of a width-1 MXU matmul.
    img_hid = jnp.maximum(
        jnp.dot(h_sum.reshape(B * T, H), wimg1_ref[...],
                preferred_element_type=jnp.float32), 0.0)            # (B*T, F)
    img = jnp.sum(img_hid * wimg2_ref[...], axis=-1, keepdims=True)  # (B*T, 1)
    img_out_ref[...] = img.reshape(B, T)

    # attention logits as VPU multiply + lane reduce; scalar biases from SMEM.
    s1 = jnp.sum(h1_all * watt1_ref[...], axis=-1, keepdims=True) + batt1_ref[0, 0]
    s2 = jnp.sum(h2_all * watt2_ref[...], axis=-1, keepdims=True) + batt2_ref[0, 0]

    def softmax_over_seq(s):                       # (B, T, 1), softmax over T
        m = jnp.max(s, axis=1, keepdims=True)
        e = jnp.exp(s - m)
        return e / jnp.sum(e, axis=1, keepdims=True)

    a1 = softmax_over_seq(s1)
    a2 = softmax_over_seq(s2)
    hc = jnp.sum(a1 * h1_all + a2 * h2_all, axis=1)                  # (B, H)

    # exam-level head
    ex_hid = jnp.maximum(
        jnp.dot(hc, wex1_ref[...], preferred_element_type=jnp.float32), 0.0)
    exam_out_ref[...] = jnp.dot(ex_hid, wex2_ref[...],
                                preferred_element_type=jnp.float32)


# ----------------------------------------------------------------------------
# Wrapper: single pallas_call, whole arrays resident in VMEM/SMEM, no grid.
# ----------------------------------------------------------------------------
@jax.jit
def sequence_model_forward(x, params):
    B, T, _ = x.shape
    H = params["lstm1_whh"].shape[0]
    n_out = params["w_ex2"].shape[1]
    vmem = pl.BlockSpec(memory_space=pltpu.MemorySpace.VMEM)
    smem = pl.BlockSpec(memory_space=pltpu.MemorySpace.SMEM)
    img, exam = pl.pallas_call(
        fused_kernel,
        out_shape=(
            jax.ShapeDtypeStruct((B, T), jnp.float32),
            jax.ShapeDtypeStruct((B, n_out), jnp.float32),
        ),
        in_specs=[vmem] * 11 + [smem] * 2,
        out_specs=(vmem, vmem),
        scratch_shapes=[
            pltpu.VMEM((B, T, 4 * H), jnp.float32),   # hoisted x @ W_ih1
            pltpu.VMEM((B, T, H), jnp.float32),       # h1 sequence
            pltpu.VMEM((B, T, H), jnp.float32),       # h2 sequence
        ],
    )(x,
      params["lstm1_wih"], params["lstm1_whh"],
      params["lstm2_wih"], params["lstm2_whh"],
      params["w_img1"], params["w_img2"],
      params["w_att1"], params["w_att2"],
      params["w_ex1"], params["w_ex2"],
      params["b_att1"], params["b_att2"])
    return img, exam


# ----------------------------------------------------------------------------
# Pure-JAX reference (f32-exact matmuls) for validating the Pallas kernel.
# ----------------------------------------------------------------------------
def _forward_ref(x, p):
    prec = jax.lax.Precision.HIGHEST

    def lstm(xseq, w_ih, w_hh):
        B = xseq.shape[0]
        H = w_hh.shape[0]

        def step(carry, x_t):
            h, c = carry
            g = (jnp.dot(x_t, w_ih, precision=prec)
                 + jnp.dot(h, w_hh, precision=prec))
            i = jax.nn.sigmoid(g[:, 0 * H:1 * H])
            f = jax.nn.sigmoid(g[:, 1 * H:2 * H])
            gg = jnp.tanh(g[:, 2 * H:3 * H])
            o = jax.nn.sigmoid(g[:, 3 * H:4 * H])
            c = f * c + i * gg
            h = o * jnp.tanh(c)
            return (h, c), h

        init = (jnp.zeros((B, H), jnp.float32), jnp.zeros((B, H), jnp.float32))
        _, hs = jax.lax.scan(step, init, jnp.transpose(xseq, (1, 0, 2)))
        return jnp.transpose(hs, (1, 0, 2))

    h1 = lstm(x, p["lstm1_wih"], p["lstm1_whh"])
    h2 = lstm(h1, p["lstm2_wih"], p["lstm2_whh"])
    h = h1 + h2
    img_hid = jnp.maximum(
        jnp.einsum("bth,hf->btf", h, p["w_img1"], precision=prec), 0.0)
    img = jnp.sum(img_hid * p["w_img2"][0], axis=-1)
    s1 = jnp.sum(h1 * p["w_att1"][0], axis=-1) + p["b_att1"][0, 0]
    s2 = jnp.sum(h2 * p["w_att2"][0], axis=-1) + p["b_att2"][0, 0]
    a1 = jax.nn.softmax(s1, axis=1)[:, :, None]
    a2 = jax.nn.softmax(s2, axis=1)[:, :, None]
    hc = jnp.sum(a1 * h1 + a2 * h2, axis=1)
    exam = jnp.dot(jnp.maximum(jnp.dot(hc, p["w_ex1"], precision=prec), 0.0),
                   p["w_ex2"], precision=prec)
    return img, exam


# ----------------------------------------------------------------------------
# Deterministic parameter init (shapes implied by DoubleLSTMModel.__init__)
# ----------------------------------------------------------------------------
def init_params(key, n_emb, n_hid, n_fc, n_classes):
    ks = jax.random.split(key, 10)
    scale = 0.1
    return {
        # nn.LSTM(input_size, hidden_size, bias=False) weights, stored
        # transposed: (in, 4H) / (H, 4H), gate order [i, f, g, o].
        "lstm1_wih": scale * jax.random.normal(ks[0], (n_emb, 4 * n_hid), jnp.float32),
        "lstm1_whh": scale * jax.random.normal(ks[1], (n_hid, 4 * n_hid), jnp.float32),
        "lstm2_wih": scale * jax.random.normal(ks[2], (n_hid, 4 * n_hid), jnp.float32),
        "lstm2_whh": scale * jax.random.normal(ks[3], (n_hid, 4 * n_hid), jnp.float32),
        # nn.Linear weights: (in, out) for the matmul layers; the width-1
        # output layers are stored as (1, in) row vectors (used as VPU
        # multiply + lane-reduce instead of N=1 matmuls).
        "w_img1": scale * jax.random.normal(ks[4], (n_hid, n_fc), jnp.float32),
        "w_img2": scale * jax.random.normal(ks[5], (1, n_fc), jnp.float32),
        "w_att1": scale * jax.random.normal(ks[6], (1, n_hid), jnp.float32),
        "b_att1": jnp.full((1, 1), 0.01, jnp.float32),
        "w_att2": scale * jax.random.normal(ks[7], (1, n_hid), jnp.float32),
        "b_att2": jnp.full((1, 1), -0.01, jnp.float32),
        "w_ex1": scale * jax.random.normal(ks[8], (n_hid, n_fc), jnp.float32),
        "w_ex2": scale * jax.random.normal(ks[9], (n_fc, n_classes - 1), jnp.float32),
    }


if __name__ == "__main__":
    # SequenceModel config
    n_embeddings = 32
    n_lstm_hidden = 32
    n_fc_hidden = 32
    n_classes = 10  # -> exam-level output has 9 logits
    B, T = 2, 8

    key = jax.random.PRNGKey(0)
    k_x, k_p = jax.random.split(key)
    x = jax.random.normal(k_x, (B, T, n_embeddings), jnp.float32)
    params = init_params(k_p, n_embeddings, n_lstm_hidden, n_fc_hidden, n_classes)

    img, exam = sequence_model_forward(x, params)
    img, exam = jax.block_until_ready((img, exam))

    assert img.shape == (B, T), img.shape
    assert exam.shape == (B, n_classes - 1), exam.shape

    # cross-check against a pure-JAX reference (tight f32 tolerance)
    img_ref, exam_ref = _forward_ref(x, params)
    np.testing.assert_allclose(np.asarray(img), np.asarray(img_ref),
                               rtol=1e-5, atol=1e-5)
    np.testing.assert_allclose(np.asarray(exam), np.asarray(exam_ref),
                               rtol=1e-5, atol=1e-5)

    print("KERNEL_OK")
</pallas_src>

<mosaic_0001>
module attributes {stable_mosaic.version = 11 : i64} {
  func.func @fused_kernel(%arg0: memref<2x8x32xf32, #tpu.memory_space<vmem>>, %arg1: memref<32x128xf32, #tpu.memory_space<vmem>>, %arg2: memref<32x128xf32, #tpu.memory_space<vmem>>, %arg3: memref<32x128xf32, #tpu.memory_space<vmem>>, %arg4: memref<32x128xf32, #tpu.memory_space<vmem>>, %arg5: memref<32x32xf32, #tpu.memory_space<vmem>>, %arg6: memref<1x32xf32, #tpu.memory_space<vmem>>, %arg7: memref<1x32xf32, #tpu.memory_space<vmem>>, %arg8: memref<1x32xf32, #tpu.memory_space<vmem>>, %arg9: memref<32x32xf32, #tpu.memory_space<vmem>>, %arg10: memref<32x9xf32, #tpu.memory_space<vmem>>, %arg11: memref<1x1xf32, #tpu.memory_space<smem>>, %arg12: memref<1x1xf32, #tpu.memory_space<smem>>, %arg13: memref<2x8xf32, #tpu.memory_space<vmem>>, %arg14: memref<2x9xf32, #tpu.memory_space<vmem>>, %arg15: memref<2x8x128xf32, #tpu.memory_space<vmem>>, %arg16: memref<2x8x32xf32, #tpu.memory_space<vmem>>, %arg17: memref<2x8x32xf32, #tpu.memory_space<vmem>>) attributes {dimension_semantics = [], scalar_prefetch = 0 : i64, scratch_operands = 3 : i64, tpu.core_type = #tpu.core_type<tc>} {
    %c0 = arith.constant 0 : index
    %c0_0 = arith.constant 0 : index
    %0 = vector.load %arg2[%c0, %c0_0] : memref<32x128xf32, #tpu.memory_space<vmem>>, vector<32x128xf32>
    %c0_1 = arith.constant 0 : index
    %c0_2 = arith.constant 0 : index
    %1 = vector.load %arg3[%c0_1, %c0_2] : memref<32x128xf32, #tpu.memory_space<vmem>>, vector<32x128xf32>
    %c0_3 = arith.constant 0 : index
    %c0_4 = arith.constant 0 : index
    %2 = vector.load %arg4[%c0_3, %c0_4] : memref<32x128xf32, #tpu.memory_space<vmem>>, vector<32x128xf32>
    %c0_5 = arith.constant 0 : index
    %c0_6 = arith.constant 0 : index
    %c0_7 = arith.constant 0 : index
    %3 = vector.load %arg0[%c0_5, %c0_6, %c0_7] : memref<2x8x32xf32, #tpu.memory_space<vmem>>, vector<2x8x32xf32>
    %4 = vector.shape_cast %3 : vector<2x8x32xf32> to vector<16x32xf32>
    %c0_8 = arith.constant 0 : index
    %c0_9 = arith.constant 0 : index
    %5 = vector.load %arg1[%c0_8, %c0_9] : memref<32x128xf32, #tpu.memory_space<vmem>>, vector<32x128xf32>
    %cst = arith.constant dense<0.000000e+00> : vector<16x128xf32>
    %6 = tpu.matmul %4, %5, %cst {dimension_numbers = #tpu.dot_dimension_numbers<[1], [0], [0], [1], [0, 0, 1, 1], [], []>} : vector<16x32xf32>, vector<32x128xf32>, vector<16x128xf32> -> vector<16x128xf32>
    %7 = vector.shape_cast %6 : vector<16x128xf32> to vector<2x8x128xf32>
    %c0_10 = arith.constant 0 : index
    %c0_11 = arith.constant 0 : index
    %c0_12 = arith.constant 0 : index
    %8 = vector.load %arg15[%c0_10, %c0_11, %c0_12] : memref<2x8x128xf32, #tpu.memory_space<vmem>>, vector<2x8x128xf32>
    tpu.vector_store %arg15[%c0_10, %c0_11, %c0_12], %7 {strides = array<i32>} : memref<2x8x128xf32, #tpu.memory_space<vmem>>, vector<2x8x128xf32>,
    %9 = tpu.iota {dimensions = array<i32: 1>} : vector<2x128xi32>
    %c64_i32 = arith.constant 64 : i32
    %10 = vector.broadcast %c64_i32 : i32 to vector<2x128xi32>
    %11 = arith.cmpi sge, %9, %10 : vector<2x128xi32>
    %c96_i32 = arith.constant 96 : i32
    %12 = vector.broadcast %c96_i32 : i32 to vector<2x128xi32>
    %13 = arith.cmpi slt, %9, %12 : vector<2x128xi32>
    %14 = arith.andi %11, %13 : vector<2x128xi1>
    %cst_13 = arith.constant 0.000000e+00 : f32
    %15 = vector.broadcast %cst_13 : f32 to vector<2x32xf32>
    %cst_14 = arith.constant 0.000000e+00 : f32
    %16 = vector.broadcast %cst_14 : f32 to vector<2x32xf32>
    %cst_15 = arith.constant 0.000000e+00 : f32
    %17 = vector.broadcast %cst_15 : f32 to vector<2x32xf32>
    %cst_16 = arith.constant 0.000000e+00 : f32
    %18 = vector.broadcast %cst_16 : f32 to vector<2x32xf32>
    %c0_17 = arith.constant 0 : index
    %c0_18 = arith.constant 0 : index
    %c0_19 = arith.constant 0 : index
    %19 = vector.load %arg15[%c0_17, %c0_18, %c0_19] : memref<2x8x128xf32, #tpu.memory_space<vmem>>, vector<2x1x128xf32>
    %20 = vector.shape_cast %19 : vector<2x1x128xf32> to vector<2x128xf32>
    %cst_20 = arith.constant dense<0.000000e+00> : vector<2x128xf32>
    %21 = tpu.matmul %15, %0, %cst_20 {dimension_numbers = #tpu.dot_dimension_numbers<[1], [0], [0], [1], [0, 0, 1, 1], [], []>} : vector<2x32xf32>, vector<32x128xf32>, vector<2x128xf32> -> vector<2x128xf32>
    %22 = arith.addf %20, %21 : vector<2x128xf32>
    %23 = math.tanh %22 : vector<2x128xf32>
    %24 = arith.negf %22 : vector<2x128xf32>
    %25 = math.exp %24 : vector<2x128xf32>
    %cst_21 = arith.constant 1.000000e+00 : f32
    %26 = vector.broadcast %cst_21 : f32 to vector<2x128xf32>
    %27 = arith.addf %26, %25 : vector<2x128xf32>
    %28 = arith.divf %26, %27 : vector<2x128xf32>
    %29 = arith.select %14, %23, %28 : vector<2x128xi1>, vector<2x128xf32>
    %30 = vector.extract_strided_slice %29 {offsets = [0, 0], sizes = [2, 32], strides = [1, 1]} : vector<2x128xf32> to vector<2x32xf32>
    %31 = vector.extract_strided_slice %29 {offsets = [0, 32], sizes = [2, 32], strides = [1, 1]} : vector<2x128xf32> to vector<2x32xf32>
    %32 = vector.extract_strided_slice %29 {offsets = [0, 64], sizes = [2, 32], strides = [1, 1]} : vector<2x128xf32> to vector<2x32xf32>
    %33 = vector.extract_strided_slice %29 {offsets = [0, 96], sizes = [2, 32], strides = [1, 1]} : vector<2x128xf32> to vector<2x32xf32>
    %34 = arith.mulf %31, %16 : vector<2x32xf32>
    %35 = arith.mulf %30, %32 : vector<2x32xf32>
    %36 = arith.addf %34, %35 : vector<2x32xf32>
    %37 = math.tanh %36 : vector<2x32xf32>
    %38 = arith.mulf %33, %37 : vector<2x32xf32>
    %c0_22 = arith.constant 0 : index
    %c0_23 = arith.constant 0 : index
    %c0_24 = arith.constant 0 : index
    %39 = vector.load %arg16[%c0_22, %c0_23, %c0_24] : memref<2x8x32xf32, #tpu.memory_space<vmem>>, vector<2x1x32xf32>
    %40 = vector.shape_cast %39 : vector<2x1x32xf32> to vector<2x32xf32>
    %41 = vector.shape_cast %38 : vector<2x32xf32> to vector<2x1x32xf32>
    tpu.vector_store %arg16[%c0_22, %c0_23, %c0_24], %41 {strides = array<i32>} : memref<2x8x32xf32, #tpu.memory_space<vmem>>, vector<2x1x32xf32>,
    %cst_25 = arith.constant dense<0.000000e+00> : vector<2x128xf32>
    %42 = tpu.matmul %38, %1, %cst_25 {dimension_numbers = #tpu.dot_dimension_numbers<[1], [0], [0], [1], [0, 0, 1, 1], [], []>} : vector<2x32xf32>, vector<32x128xf32>, vector<2x128xf32> -> vector<2x128xf32>
    %cst_26 = arith.constant dense<0.000000e+00> : vector<2x128xf32>
    %43 = tpu.matmul %17, %2, %cst_26 {dimension_numbers = #tpu.dot_dimension_numbers<[1], [0], [0], [1], [0, 0, 1, 1], [], []>} : vector<2x32xf32>, vector<32x128xf32>, vector<2x128xf32> -> vector<2x128xf32>
    %44 = arith.addf %42, %43 : vector<2x128xf32>
    %45 = math.tanh %44 : vector<2x128xf32>
    %46 = arith.negf %44 : vector<2x128xf32>
    %47 = math.exp %46 : vector<2x128xf32>
    %cst_27 = arith.constant 1.000000e+00 : f32
    %48 = vector.broadcast %cst_27 : f32 to vector<2x128xf32>
    %49 = arith.addf %48, %47 : vector<2x128xf32>
    %50 = arith.divf %48, %49 : vector<2x128xf32>
    %51 = arith.select %14, %45, %50 : vector<2x128xi1>, vector<2x128xf32>
    %52 = vector.extract_strided_slice %51 {offsets = [0, 0], sizes = [2, 32], strides = [1, 1]} : vector<2x128xf32> to vector<2x32xf32>
    %53 = vector.extract_strided_slice %51 {offsets = [0, 32], sizes = [2, 32], strides = [1, 1]} : vector<2x128xf32> to vector<2x32xf32>
    %54 = vector.extract_strided_slice %51 {offsets = [0, 64], sizes = [2, 32], strides = [1, 1]} : vector<2x128xf32> to vector<2x32xf32>
    %55 = vector.extract_strided_slice %51 {offsets = [0, 96], sizes = [2, 32], strides = [1, 1]} : vector<2x128xf32> to vector<2x32xf32>
    %56 = arith.mulf %53, %18 : vector<2x32xf32>
    %57 = arith.mulf %52, %54 : vector<2x32xf32>
    %58 = arith.addf %56, %57 : vector<2x32xf32>
    %59 = math.tanh %58 : vector<2x32xf32>
    %60 = arith.mulf %55, %59 : vector<2x32xf32>
    %c0_28 = arith.constant 0 : index
    %c0_29 = arith.constant 0 : index
    %c0_30 = arith.constant 0 : index
    %61 = vector.load %arg17[%c0_28, %c0_29, %c0_30] : memref<2x8x32xf32, #tpu.memory_space<vmem>>, vector<2x1x32xf32>
    %62 = vector.shape_cast %61 : vector<2x1x32xf32> to vector<2x32xf32>
    %63 = vector.shape_cast %60 : vector<2x32xf32> to vector<2x1x32xf32>
    tpu.vector_store %arg17[%c0_28, %c0_29, %c0_30], %63 {strides = array<i32>} : memref<2x8x32xf32, #tpu.memory_space<vmem>>, vector<2x1x32xf32>,
    %c0_31 = arith.constant 0 : index
    %c1 = arith.constant 1 : index
    %c0_32 = arith.constant 0 : index
    %64 = vector.load %arg15[%c0_31, %c1, %c0_32] : memref<2x8x128xf32, #tpu.memory_space<vmem>>, vector<2x1x128xf32>
    %65 = vector.shape_cast %64 : vector<2x1x128xf32> to vector<2x128xf32>
    %cst_33 = arith.constant dense<0.000000e+00> : vector<2x128xf32>
    %66 = tpu.matmul %38, %0, %cst_33 {dimension_numbers = #tpu.dot_dimension_numbers<[1], [0], [0], [1], [0, 0, 1, 1], [], []>} : vector<2x32xf32>, vector<32x128xf32>, vector<2x128xf32> -> vector<2x128xf32>
    %67 = arith.addf %65, %66 : vector<2x128xf32>
    %68 = math.tanh %67 : vector<2x128xf32>
    %69 = arith.negf %67 : vector<2x128xf32>
    %70 = math.exp %69 : vector<2x128xf32>
    %cst_34 = arith.constant 1.000000e+00 : f32
    %71 = vector.broadcast %cst_34 : f32 to vector<2x128xf32>
    %72 = arith.addf %71, %70 : vector<2x128xf32>
    %73 = arith.divf %71, %72 : vector<2x128xf32>
    %74 = arith.select %14, %68, %73 : vector<2x128xi1>, vector<2x128xf32>
    %75 = vector.extract_strided_slice %74 {offsets = [0, 0], sizes = [2, 32], strides = [1, 1]} : vector<2x128xf32> to vector<2x32xf32>
    %76 = vector.extract_strided_slice %74 {offsets = [0, 32], sizes = [2, 32], strides = [1, 1]} : vector<2x128xf32> to vector<2x32xf32>
    %77 = vector.extract_strided_slice %74 {offsets = [0, 64], sizes = [2, 32], strides = [1, 1]} : vector<2x128xf32> to vector<2x32xf32>
    %78 = vector.extract_strided_slice %74 {offsets = [0, 96], sizes = [2, 32], strides = [1, 1]} : vector<2x128xf32> to vector<2x32xf32>
    %79 = arith.mulf %76, %36 : vector<2x32xf32>
    %80 = arith.mulf %75, %77 : vector<2x32xf32>
    %81 = arith.addf %79, %80 : vector<2x32xf32>
    %82 = math.tanh %81 : vector<2x32xf32>
    %83 = arith.mulf %78, %82 : vector<2x32xf32>
    %c0_35 = arith.constant 0 : index
    %c1_36 = arith.constant 1 : index
    %c0_37 = arith.constant 0 : index
    %84 = vector.load %arg16[%c0_35, %c1_36, %c0_37] : memref<2x8x32xf32, #tpu.memory_space<vmem>>, vector<2x1x32xf32>
    %85 = vector.shape_cast %84 : vector<2x1x32xf32> to vector<2x32xf32>
    %86 = vector.shape_cast %83 : vector<2x32xf32> to vector<2x1x32xf32>
    tpu.vector_store %arg16[%c0_35, %c1_36, %c0_37], %86 {strides = array<i32>} : memref<2x8x32xf32, #tpu.memory_space<vmem>>, vector<2x1x32xf32>,
    %cst_38 = arith.constant dense<0.000000e+00> : vector<2x128xf32>
    %87 = tpu.matmul %83, %1, %cst_38 {dimension_numbers = #tpu.dot_dimension_numbers<[1], [0], [0], [1], [0, 0, 1, 1], [], []>} : vector<2x32xf32>, vector<32x128xf32>, vector<2x128xf32> -> vector<2x128xf32>
    %cst_39 = arith.constant dense<0.000000e+00> : vector<2x128xf32>
    %88 = tpu.matmul %60, %2, %cst_39 {dimension_numbers = #tpu.dot_dimension_numbers<[1], [0], [0], [1], [0, 0, 1, 1], [], []>} : vector<2x32xf32>, vector<32x128xf32>, vector<2x128xf32> -> vector<2x128xf32>
    %89 = arith.addf %87, %88 : vector<2x128xf32>
    %90 = math.tanh %89 : vector<2x128xf32>
    %91 = arith.negf %89 : vector<2x128xf32>
    %92 = math.exp %91 : vector<2x128xf32>
    %cst_40 = arith.constant 1.000000e+00 : f32
    %93 = vector.broadcast %cst_40 : f32 to vector<2x128xf32>
    %94 = arith.addf %93, %92 : vector<2x128xf32>
    %95 = arith.divf %93, %94 : vector<2x128xf32>
    %96 = arith.select %14, %90, %95 : vector<2x128xi1>, vector<2x128xf32>
    %97 = vector.extract_strided_slice %96 {offsets = [0, 0], sizes = [2, 32], strides = [1, 1]} : vector<2x128xf32> to vector<2x32xf32>
    %98 = vector.extract_strided_slice %96 {offsets = [0, 32], sizes = [2, 32], strides = [1, 1]} : vector<2x128xf32> to vector<2x32xf32>
    %99 = vector.extract_strided_slice %96 {offsets = [0, 64], sizes = [2, 32], strides = [1, 1]} : vector<2x128xf32> to vector<2x32xf32>
    %100 = vector.extract_strided_slice %96 {offsets = [0, 96], sizes = [2, 32], strides = [1, 1]} : vector<2x128xf32> to vector<2x32xf32>
    %101 = arith.mulf %98, %58 : vector<2x32xf32>
    %102 = arith.mulf %97, %99 : vector<2x32xf32>
    %103 = arith.addf %101, %102 : vector<2x32xf32>
    %104 = math.tanh %103 : vector<2x32xf32>
    %105 = arith.mulf %100, %104 : vector<2x32xf32>
    %c0_41 = arith.constant 0 : index
    %c1_42 = arith.constant 1 : index
    %c0_43 = arith.constant 0 : index
    %106 = vector.load %arg17[%c0_41, %c1_42, %c0_43] : memref<2x8x32xf32, #tpu.memory_space<vmem>>, vector<2x1x32xf32>
    %107 = vector.shape_cast %106 : vector<2x1x32xf32> to vector<2x32xf32>
    %108 = vector.shape_cast %105 : vector<2x32xf32> to vector<2x1x32xf32>
    tpu.vector_store %arg17[%c0_41, %c1_42, %c0_43], %108 {strides = array<i32>} : memref<2x8x32xf32, #tpu.memory_space<vmem>>, vector<2x1x32xf32>,
    %c0_44 = arith.constant 0 : index
    %c2 = arith.constant 2 : index
    %c0_45 = arith.constant 0 : index
    %109 = vector.load %arg15[%c0_44, %c2, %c0_45] : memref<2x8x128xf32, #tpu.memory_space<vmem>>, vector<2x1x128xf32>
    %110 = vector.shape_cast %109 : vector<2x1x128xf32> to vector<2x128xf32>
    %cst_46 = arith.constant dense<0.000000e+00> : vector<2x128xf32>
    %111 = tpu.matmul %83, %0, %cst_46 {dimension_numbers = #tpu.dot_dimension_numbers<[1], [0], [0], [1], [0, 0, 1, 1], [], []>} : vector<2x32xf32>, vector<32x128xf32>, vector<2x128xf32> -> vector<2x128xf32>
    %112 = arith.addf %110, %111 : vector<2x128xf32>
    %113 = math.tanh %112 : vector<2x128xf32>
    %114 = arith.negf %112 : vector<2x128xf32>
    %115 = math.exp %114 : vector<2x128xf32>
    %cst_47 = arith.constant 1.000000e+00 : f32
    %116 = vector.broadcast %cst_47 : f32 to vector<2x128xf32>
    %117 = arith.addf %116, %115 : vector<2x128xf32>
    %118 = arith.divf %116, %117 : vector<2x128xf32>
    %119 = arith.select %14, %113, %118 : vector<2x128xi1>, vector<2x128xf32>
    %120 = vector.extract_strided_slice %119 {offsets = [0, 0], sizes = [2, 32], strides = [1, 1]} : vector<2x128xf32> to vector<2x32xf32>
    %121 = vector.extract_strided_slice %119 {offsets = [0, 32], sizes = [2, 32], strides = [1, 1]} : vector<2x128xf32> to vector<2x32xf32>
    %122 = vector.extract_strided_slice %119 {offsets = [0, 64], sizes = [2, 32], strides = [1, 1]} : vector<2x128xf32> to vector<2x32xf32>
    %123 = vector.extract_strided_slice %119 {offsets = [0, 96], sizes = [2, 32], strides = [1, 1]} : vector<2x128xf32> to vector<2x32xf32>
    %124 = arith.mulf %121, %81 : vector<2x32xf32>
    %125 = arith.mulf %120, %122 : vector<2x32xf32>
    %126 = arith.addf %124, %125 : vector<2x32xf32>
    %127 = math.tanh %126 : vector<2x32xf32>
    %128 = arith.mulf %123, %127 : vector<2x32xf32>
    %c0_48 = arith.constant 0 : index
    %c2_49 = arith.constant 2 : index
    %c0_50 = arith.constant 0 : index
    %129 = vector.load %arg16[%c0_48, %c2_49, %c0_50] : memref<2x8x32xf32, #tpu.memory_space<vmem>>, vector<2x1x32xf32>
    %130 = vector.shape_cast %129 : vector<2x1x32xf32> to vector<2x32xf32>
    %131 = vector.shape_cast %128 : vector<2x32xf32> to vector<2x1x32xf32>
    tpu.vector_store %arg16[%c0_48, %c2_49, %c0_50], %131 {strides = array<i32>} : memref<2x8x32xf32, #tpu.memory_space<vmem>>, vector<2x1x32xf32>,
    %cst_51 = arith.constant dense<0.000000e+00> : vector<2x128xf32>
    %132 = tpu.matmul %128, %1, %cst_51 {dimension_numbers = #tpu.dot_dimension_numbers<[1], [0], [0], [1], [0, 0, 1, 1], [], []>} : vector<2x32xf32>, vector<32x128xf32>, vector<2x128xf32> -> vector<2x128xf32>
    %cst_52 = arith.constant dense<0.000000e+00> : vector<2x128xf32>
    %133 = tpu.matmul %105, %2, %cst_52 {dimension_numbers = #tpu.dot_dimension_numbers<[1], [0], [0], [1], [0, 0, 1, 1], [], []>} : vector<2x32xf32>, vector<32x128xf32>, vector<2x128xf32> -> vector<2x128xf32>
    %134 = arith.addf %132, %133 : vector<2x128xf32>
    %135 = math.tanh %134 : vector<2x128xf32>
    %136 = arith.negf %134 : vector<2x128xf32>
    %137 = math.exp %136 : vector<2x128xf32>
    %cst_53 = arith.constant 1.000000e+00 : f32
    %138 = vector.broadcast %cst_53 : f32 to vector<2x128xf32>
    %139 = arith.addf %138, %137 : vector<2x128xf32>
    %140 = arith.divf %138, %139 : vector<2x128xf32>
    %141 = arith.select %14, %135, %140 : vector<2x128xi1>, vector<2x128xf32>
    %142 = vector.extract_strided_slice %141 {offsets = [0, 0], sizes = [2, 32], strides = [1, 1]} : vector<2x128xf32> to vector<2x32xf32>
    %143 = vector.extract_strided_slice %141 {offsets = [0, 32], sizes = [2, 32], strides = [1, 1]} : vector<2x128xf32> to vector<2x32xf32>
    %144 = vector.extract_strided_slice %141 {offsets = [0, 64], sizes = [2, 32], strides = [1, 1]} : vector<2x128xf32> to vector<2x32xf32>
    %145 = vector.extract_strided_slice %141 {offsets = [0, 96], sizes = [2, 32], strides = [1, 1]} : vector<2x128xf32> to vector<2x32xf32>
    %146 = arith.mulf %143, %103 : vector<2x32xf32>
    %147 = arith.mulf %142, %144 : vector<2x32xf32>
    %148 = arith.addf %146, %147 : vector<2x32xf32>
    %149 = math.tanh %148 : vector<2x32xf32>
    %150 = arith.mulf %145, %149 : vector<2x32xf32>
    %c0_54 = arith.constant 0 : index
    %c2_55 = arith.constant 2 : index
    %c0_56 = arith.constant 0 : index
    %151 = vector.load %arg17[%c0_54, %c2_55, %c0_56] : memref<2x8x32xf32, #tpu.memory_space<vmem>>, vector<2x1x32xf32>
    %152 = vector.shape_cast %151 : vector<2x1x32xf32> to vector<2x32xf32>
    %153 = vector.shape_cast %150 : vector<2x32xf32> to vector<2x1x32xf32>
    tpu.vector_store %arg17[%c0_54, %c2_55, %c0_56], %153 {strides = array<i32>} : memref<2x8x32xf32, #tpu.memory_space<vmem>>, vector<2x1x32xf32>,
    %c0_57 = arith.constant 0 : index
    %c3 = arith.constant 3 : index
    %c0_58 = arith.constant 0 : index
    %154 = vector.load %arg15[%c0_57, %c3, %c0_58] : memref<2x8x128xf32, #tpu.memory_space<vmem>>, vector<2x1x128xf32>
    %155 = vector.shape_cast %154 : vector<2x1x128xf32> to vector<2x128xf32>
    %cst_59 = arith.constant dense<0.000000e+00> : vector<2x128xf32>
    %156 = tpu.matmul %128, %0, %cst_59 {dimension_numbers = #tpu.dot_dimension_numbers<[1], [0], [0], [1], [0, 0, 1, 1], [], []>} : vector<2x32xf32>, vector<32x128xf32>, vector<2x128xf32> -> vector<2x128xf32>
    %157 = arith.addf %155, %156 : vector<2x128xf32>
    %158 = math.tanh %157 : vector<2x128xf32>
    %159 = arith.negf %157 : vector<2x128xf32>
    %160 = math.exp %159 : vector<2x128xf32>
    %cst_60 = arith.constant 1.000000e+00 : f32
    %161 = vector.broadcast %cst_60 : f32 to vector<2x128xf32>
    %162 = arith.addf %161, %160 : vector<2x128xf32>
    %163 = arith.divf %161, %162 : vector<2x128xf32>
    %164 = arith.select %14, %158, %163 : vector<2x128xi1>, vector<2x128xf32>
    %165 = vector.extract_strided_slice %164 {offsets = [0, 0], sizes = [2, 32], strides = [1, 1]} : vector<2x128xf32> to vector<2x32xf32>
    %166 = vector.extract_strided_slice %164 {offsets = [0, 32], sizes = [2, 32], strides = [1, 1]} : vector<2x128xf32> to vector<2x32xf32>
    %167 = vector.extract_strided_slice %164 {offsets = [0, 64], sizes = [2, 32], strides = [1, 1]} : vector<2x128xf32> to vector<2x32xf32>
    %168 = vector.extract_strided_slice %164 {offsets = [0, 96], sizes = [2, 32], strides = [1, 1]} : vector<2x128xf32> to vector<2x32xf32>
    %169 = arith.mulf %166, %126 : vector<2x32xf32>
    %170 = arith.mulf %165, %167 : vector<2x32xf32>
    %171 = arith.addf %169, %170 : vector<2x32xf32>
    %172 = math.tanh %171 : vector<2x32xf32>
    %173 = arith.mulf %168, %172 : vector<2x32xf32>
    %c0_61 = arith.constant 0 : index
    %c3_62 = arith.constant 3 : index
    %c0_63 = arith.constant 0 : index
    %174 = vector.load %arg16[%c0_61, %c3_62, %c0_63] : memref<2x8x32xf32, #tpu.memory_space<vmem>>, vector<2x1x32xf32>
    %175 = vector.shape_cast %174 : vector<2x1x32xf32> to vector<2x32xf32>
    %176 = vector.shape_cast %173 : vector<2x32xf32> to vector<2x1x32xf32>
    tpu.vector_store %arg16[%c0_61, %c3_62, %c0_63], %176 {strides = array<i32>} : memref<2x8x32xf32, #tpu.memory_space<vmem>>, vector<2x1x32xf32>,
    %cst_64 = arith.constant dense<0.000000e+00> : vector<2x128xf32>
    %177 = tpu.matmul %173, %1, %cst_64 {dimension_numbers = #tpu.dot_dimension_numbers<[1], [0], [0], [1], [0, 0, 1, 1], [], []>} : vector<2x32xf32>, vector<32x128xf32>, vector<2x128xf32> -> vector<2x128xf32>
    %cst_65 = arith.constant dense<0.000000e+00> : vector<2x128xf32>
    %178 = tpu.matmul %150, %2, %cst_65 {dimension_numbers = #tpu.dot_dimension_numbers<[1], [0], [0], [1], [0, 0, 1, 1], [], []>} : vector<2x32xf32>, vector<32x128xf32>, vector<2x128xf32> -> vector<2x128xf32>
    %179 = arith.addf %177, %178 : vector<2x128xf32>
    %180 = math.tanh %179 : vector<2x128xf32>
    %181 = arith.negf %179 : vector<2x128xf32>
    %182 = math.exp %181 : vector<2x128xf32>
    %cst_66 = arith.constant 1.000000e+00 : f32
    %183 = vector.broadcast %cst_66 : f32 to vector<2x128xf32>
    %184 = arith.addf %183, %182 : vector<2x128xf32>
    %185 = arith.divf %183, %184 : vector<2x128xf32>
    %186 = arith.select %14, %180, %185 : vector<2x128xi1>, vector<2x128xf32>
    %187 = vector.extract_strided_slice %186 {offsets = [0, 0], sizes = [2, 32], strides = [1, 1]} : vector<2x128xf32> to vector<2x32xf32>
    %188 = vector.extract_strided_slice %186 {offsets = [0, 32], sizes = [2, 32], strides = [1, 1]} : vector<2x128xf32> to vector<2x32xf32>
    %189 = vector.extract_strided_slice %186 {offsets = [0, 64], sizes = [2, 32], strides = [1, 1]} : vector<2x128xf32> to vector<2x32xf32>
    %190 = vector.extract_strided_slice %186 {offsets = [0, 96], sizes = [2, 32], strides = [1, 1]} : vector<2x128xf32> to vector<2x32xf32>
    %191 = arith.mulf %188, %148 : vector<2x32xf32>
    %192 = arith.mulf %187, %189 : vector<2x32xf32>
    %193 = arith.addf %191, %192 : vector<2x32xf32>
    %194 = math.tanh %193 : vector<2x32xf32>
    %195 = arith.mulf %190, %194 : vector<2x32xf32>
    %c0_67 = arith.constant 0 : index
    %c3_68 = arith.constant 3 : index
    %c0_69 = arith.constant 0 : index
    %196 = vector.load %arg17[%c0_67, %c3_68, %c0_69] : memref<2x8x32xf32, #tpu.memory_space<vmem>>, vector<2x1x32xf32>
    %197 = vector.shape_cast %196 : vector<2x1x32xf32> to vector<2x32xf32>
    %198 = vector.shape_cast %195 : vector<2x32xf32> to vector<2x1x32xf32>
    tpu.vector_store %arg17[%c0_67, %c3_68, %c0_69], %198 {strides = array<i32>} : memref<2x8x32xf32, #tpu.memory_space<vmem>>, vector<2x1x32xf32>,
    %c0_70 = arith.constant 0 : index
    %c4 = arith.constant 4 : index
    %c0_71 = arith.constant 0 : index
    %199 = vector.load %arg15[%c0_70, %c4, %c0_71] : memref<2x8x128xf32, #tpu.memory_space<vmem>>, vector<2x1x128xf32>
    %200 = vector.shape_cast %199 : vector<2x1x128xf32> to vector<2x128xf32>
    %cst_72 = arith.constant dense<0.000000e+00> : vector<2x128xf32>
    %201 = tpu.matmul %173, %0, %cst_72 {dimension_numbers = #tpu.dot_dimension_numbers<[1], [0], [0], [1], [0, 0, 1, 1], [], []>} : vector<2x32xf32>, vector<32x128xf32>, vector<2x128xf32> -> vector<2x128xf32>
    %202 = arith.addf %200, %201 : vector<2x128xf32>
    %203 = math.tanh %202 : vector<2x128xf32>
    %204 = arith.negf %202 : vector<2x128xf32>
    %205 = math.exp %204 : vector<2x128xf32>
    %cst_73 = arith.constant 1.000000e+00 : f32
    %206 = vector.broadcast %cst_73 : f32 to vector<2x128xf32>
    %207 = arith.addf %206, %205 : vector<2x128xf32>
    %208 = arith.divf %206, %207 : vector<2x128xf32>
    %209 = arith.select %14, %203, %208 : vector<2x128xi1>, vector<2x128xf32>
    %210 = vector.extract_strided_slice %209 {offsets = [0, 0], sizes = [2, 32], strides = [1, 1]} : vector<2x128xf32> to vector<2x32xf32>
    %211 = vector.extract_strided_slice %209 {offsets = [0, 32], sizes = [2, 32], strides = [1, 1]} : vector<2x128xf32> to vector<2x32xf32>
    %212 = vector.extract_strided_slice %209 {offsets = [0, 64], sizes = [2, 32], strides = [1, 1]} : vector<2x128xf32> to vector<2x32xf32>
    %213 = vector.extract_strided_slice %209 {offsets = [0, 96], sizes = [2, 32], strides = [1, 1]} : vector<2x128xf32> to vector<2x32xf32>
    %214 = arith.mulf %211, %171 : vector<2x32xf32>
    %215 = arith.mulf %210, %212 : vector<2x32xf32>
    %216 = arith.addf %214, %215 : vector<2x32xf32>
    %217 = math.tanh %216 : vector<2x32xf32>
    %218 = arith.mulf %213, %217 : vector<2x32xf32>
    %c0_74 = arith.constant 0 : index
    %c4_75 = arith.constant 4 : index
    %c0_76 = arith.constant 0 : index
    %219 = vector.load %arg16[%c0_74, %c4_75, %c0_76] : memref<2x8x32xf32, #tpu.memory_space<vmem>>, vector<2x1x32xf32>
    %220 = vector.shape_cast %219 : vector<2x1x32xf32> to vector<2x32xf32>
    %221 = vector.shape_cast %218 : vector<2x32xf32> to vector<2x1x32xf32>
    tpu.vector_store %arg16[%c0_74, %c4_75, %c0_76], %221 {strides = array<i32>} : memref<2x8x32xf32, #tpu.memory_space<vmem>>, vector<2x1x32xf32>,
    %cst_77 = arith.constant dense<0.000000e+00> : vector<2x128xf32>
    %222 = tpu.matmul %218, %1, %cst_77 {dimension_numbers = #tpu.dot_dimension_numbers<[1], [0], [0], [1], [0, 0, 1, 1], [], []>} : vector<2x32xf32>, vector<32x128xf32>, vector<2x128xf32> -> vector<2x128xf32>
    %cst_78 = arith.constant dense<0.000000e+00> : vector<2x128xf32>
    %223 = tpu.matmul %195, %2, %cst_78 {dimension_numbers = #tpu.dot_dimension_numbers<[1], [0], [0], [1], [0, 0, 1, 1], [], []>} : vector<2x32xf32>, vector<32x128xf32>, vector<2x128xf32> -> vector<2x128xf32>
    %224 = arith.addf %222, %223 : vector<2x128xf32>
    %225 = math.tanh %224 : vector<2x128xf32>
    %226 = arith.negf %224 : vector<2x128xf32>
    %227 = math.exp %226 : vector<2x128xf32>
    %cst_79 = arith.constant 1.000000e+00 : f32
    %228 = vector.broadcast %cst_79 : f32 to vector<2x128xf32>
    %229 = arith.addf %228, %227 : vector<2x128xf32>
    %230 = arith.divf %228, %229 : vector<2x128xf32>
    %231 = arith.select %14, %225, %230 : vector<2x128xi1>, vector<2x128xf32>
    %232 = vector.extract_strided_slice %231 {offsets = [0, 0], sizes = [2, 32], strides = [1, 1]} : vector<2x128xf32> to vector<2x32xf32>
    %233 = vector.extract_strided_slice %231 {offsets = [0, 32], sizes = [2, 32], strides = [1, 1]} : vector<2x128xf32> to vector<2x32xf32>
    %234 = vector.extract_strided_slice %231 {offsets = [0, 64], sizes = [2, 32], strides = [1, 1]} : vector<2x128xf32> to vector<2x32xf32>
    %235 = vector.extract_strided_slice %231 {offsets = [0, 96], sizes = [2, 32], strides = [1, 1]} : vector<2x128xf32> to vector<2x32xf32>
    %236 = arith.mulf %233, %193 : vector<2x32xf32>
    %237 = arith.mulf %232, %234 : vector<2x32xf32>
    %238 = arith.addf %236, %237 : vector<2x32xf32>
    %239 = math.tanh %238 : vector<2x32xf32>
    %240 = arith.mulf %235, %239 : vector<2x32xf32>
    %c0_80 = arith.constant 0 : index
    %c4_81 = arith.constant 4 : index
    %c0_82 = arith.constant 0 : index
    %241 = vector.load %arg17[%c0_80, %c4_81, %c0_82] : memref<2x8x32xf32, #tpu.memory_space<vmem>>, vector<2x1x32xf32>
    %242 = vector.shape_cast %241 : vector<2x1x32xf32> to vector<2x32xf32>
    %243 = vector.shape_cast %240 : vector<2x32xf32> to vector<2x1x32xf32>
    tpu.vector_store %arg17[%c0_80, %c4_81, %c0_82], %243 {strides = array<i32>} : memref<2x8x32xf32, #tpu.memory_space<vmem>>, vector<2x1x32xf32>,
    %c0_83 = arith.constant 0 : index
    %c5 = arith.constant 5 : index
    %c0_84 = arith.constant 0 : index
    %244 = vector.load %arg15[%c0_83, %c5, %c0_84] : memref<2x8x128xf32, #tpu.memory_space<vmem>>, vector<2x1x128xf32>
    %245 = vector.shape_cast %244 : vector<2x1x128xf32> to vector<2x128xf32>
    %cst_85 = arith.constant dense<0.000000e+00> : vector<2x128xf32>
    %246 = tpu.matmul %218, %0, %cst_85 {dimension_numbers = #tpu.dot_dimension_numbers<[1], [0], [0], [1], [0, 0, 1, 1], [], []>} : vector<2x32xf32>, vector<32x128xf32>, vector<2x128xf32> -> vector<2x128xf32>
    %247 = arith.addf %245, %246 : vector<2x128xf32>
    %248 = math.tanh %247 : vector<2x128xf32>
    %249 = arith.negf %247 : vector<2x128xf32>
    %250 = math.exp %249 : vector<2x128xf32>
    %cst_86 = arith.constant 1.000000e+00 : f32
    %251 = vector.broadcast %cst_86 : f32 to vector<2x128xf32>
    %252 = arith.addf %251, %250 : vector<2x128xf32>
    %253 = arith.divf %251, %252 : vector<2x128xf32>
    %254 = arith.select %14, %248, %253 : vector<2x128xi1>, vector<2x128xf32>
    %255 = vector.extract_strided_slice %254 {offsets = [0, 0], sizes = [2, 32], strides = [1, 1]} : vector<2x128xf32> to vector<2x32xf32>
    %256 = vector.extract_strided_slice %254 {offsets = [0, 32], sizes = [2, 32], strides = [1, 1]} : vector<2x128xf32> to vector<2x32xf32>
    %257 = vector.extract_strided_slice %254 {offsets = [0, 64], sizes = [2, 32], strides = [1, 1]} : vector<2x128xf32> to vector<2x32xf32>
    %258 = vector.extract_strided_slice %254 {offsets = [0, 96], sizes = [2, 32], strides = [1, 1]} : vector<2x128xf32> to vector<2x32xf32>
    %259 = arith.mulf %256, %216 : vector<2x32xf32>
    %260 = arith.mulf %255, %257 : vector<2x32xf32>
    %261 = arith.addf %259, %260 : vector<2x32xf32>
    %262 = math.tanh %261 : vector<2x32xf32>
    %263 = arith.mulf %258, %262 : vector<2x32xf32>
    %c0_87 = arith.constant 0 : index
    %c5_88 = arith.constant 5 : index
    %c0_89 = arith.constant 0 : index
    %264 = vector.load %arg16[%c0_87, %c5_88, %c0_89] : memref<2x8x32xf32, #tpu.memory_space<vmem>>, vector<2x1x32xf32>
    %265 = vector.shape_cast %264 : vector<2x1x32xf32> to vector<2x32xf32>
    %266 = vector.shape_cast %263 : vector<2x32xf32> to vector<2x1x32xf32>
    tpu.vector_store %arg16[%c0_87, %c5_88, %c0_89], %266 {strides = array<i32>} : memref<2x8x32xf32, #tpu.memory_space<vmem>>, vector<2x1x32xf32>,
    %cst_90 = arith.constant dense<0.000000e+00> : vector<2x128xf32>
    %267 = tpu.matmul %263, %1, %cst_90 {dimension_numbers = #tpu.dot_dimension_numbers<[1], [0], [0], [1], [0, 0, 1, 1], [], []>} : vector<2x32xf32>, vector<32x128xf32>, vector<2x128xf32> -> vector<2x128xf32>
    %cst_91 = arith.constant dense<0.000000e+00> : vector<2x128xf32>
    %268 = tpu.matmul %240, %2, %cst_91 {dimension_numbers = #tpu.dot_dimension_numbers<[1], [0], [0], [1], [0, 0, 1, 1], [], []>} : vector<2x32xf32>, vector<32x128xf32>, vector<2x128xf32> -> vector<2x128xf32>
    %269 = arith.addf %267, %268 : vector<2x128xf32>
    %270 = math.tanh %269 : vector<2x128xf32>
    %271 = arith.negf %269 : vector<2x128xf32>
    %272 = math.exp %271 : vector<2x128xf32>
    %cst_92 = arith.constant 1.000000e+00 : f32
    %273 = vector.broadcast %cst_92 : f32 to vector<2x128xf32>
    %274 = arith.addf %273, %272 : vector<2x128xf32>
    %275 = arith.divf %273, %274 : vector<2x128xf32>
    %276 = arith.select %14, %270, %275 : vector<2x128xi1>, vector<2x128xf32>
    %277 = vector.extract_strided_slice %276 {offsets = [0, 0], sizes = [2, 32], strides = [1, 1]} : vector<2x128xf32> to vector<2x32xf32>
    %278 = vector.extract_strided_slice %276 {offsets = [0, 32], sizes = [2, 32], strides = [1, 1]} : vector<2x128xf32> to vector<2x32xf32>
    %279 = vector.extract_strided_slice %276 {offsets = [0, 64], sizes = [2, 32], strides = [1, 1]} : vector<2x128xf32> to vector<2x32xf32>
    %280 = vector.extract_strided_slice %276 {offsets = [0, 96], sizes = [2, 32], strides = [1, 1]} : vector<2x128xf32> to vector<2x32xf32>
    %281 = arith.mulf %278, %238 : vector<2x32xf32>
    %282 = arith.mulf %277, %279 : vector<2x32xf32>
    %283 = arith.addf %281, %282 : vector<2x32xf32>
    %284 = math.tanh %283 : vector<2x32xf32>
    %285 = arith.mulf %280, %284 : vector<2x32xf32>
    %c0_93 = arith.constant 0 : index
    %c5_94 = arith.constant 5 : index
    %c0_95 = arith.constant 0 : index
    %286 = vector.load %arg17[%c0_93, %c5_94, %c0_95] : memref<2x8x32xf32, #tpu.memory_space<vmem>>, vector<2x1x32xf32>
    %287 = vector.shape_cast %286 : vector<2x1x32xf32> to vector<2x32xf32>
    %288 = vector.shape_cast %285 : vector<2x32xf32> to vector<2x1x32xf32>
    tpu.vector_store %arg17[%c0_93, %c5_94, %c0_95], %288 {strides = array<i32>} : memref<2x8x32xf32, #tpu.memory_space<vmem>>, vector<2x1x32xf32>,
    %c0_96 = arith.constant 0 : index
    %c6 = arith.constant 6 : index
    %c0_97 = arith.constant 0 : index
    %289 = vector.load %arg15[%c0_96, %c6, %c0_97] : memref<2x8x128xf32, #tpu.memory_space<vmem>>, vector<2x1x128xf32>
    %290 = vector.shape_cast %289 : vector<2x1x128xf32> to vector<2x128xf32>
    %cst_98 = arith.constant dense<0.000000e+00> : vector<2x128xf32>
    %291 = tpu.matmul %263, %0, %cst_98 {dimension_numbers = #tpu.dot_dimension_numbers<[1], [0], [0], [1], [0, 0, 1, 1], [], []>} : vector<2x32xf32>, vector<32x128xf32>, vector<2x128xf32> -> vector<2x128xf32>
    %292 = arith.addf %290, %291 : vector<2x128xf32>
    %293 = math.tanh %292 : vector<2x128xf32>
    %294 = arith.negf %292 : vector<2x128xf32>
    %295 = math.exp %294 : vector<2x128xf32>
    %cst_99 = arith.constant 1.000000e+00 : f32
    %296 = vector.broadcast %cst_99 : f32 to vector<2x128xf32>
    %297 = arith.addf %296, %295 : vector<2x128xf32>
    %298 = arith.divf %296, %297 : vector<2x128xf32>
    %299 = arith.select %14, %293, %298 : vector<2x128xi1>, vector<2x128xf32>
    %300 = vector.extract_strided_slice %299 {offsets = [0, 0], sizes = [2, 32], strides = [1, 1]} : vector<2x128xf32> to vector<2x32xf32>
    %301 = vector.extract_strided_slice %299 {offsets = [0, 32], sizes = [2, 32], strides = [1, 1]} : vector<2x128xf32> to vector<2x32xf32>
    %302 = vector.extract_strided_slice %299 {offsets = [0, 64], sizes = [2, 32], strides = [1, 1]} : vector<2x128xf32> to vector<2x32xf32>
    %303 = vector.extract_strided_slice %299 {offsets = [0, 96], sizes = [2, 32], strides = [1, 1]} : vector<2x128xf32> to vector<2x32xf32>
    %304 = arith.mulf %301, %261 : vector<2x32xf32>
    %305 = arith.mulf %300, %302 : vector<2x32xf32>
    %306 = arith.addf %304, %305 : vector<2x32xf32>
    %307 = math.tanh %306 : vector<2x32xf32>
    %308 = arith.mulf %303, %307 : vector<2x32xf32>
    %c0_100 = arith.constant 0 : index
    %c6_101 = arith.constant 6 : index
    %c0_102 = arith.constant 0 : index
    %309 = vector.load %arg16[%c0_100, %c6_101, %c0_102] : memref<2x8x32xf32, #tpu.memory_space<vmem>>, vector<2x1x32xf32>
    %310 = vector.shape_cast %309 : vector<2x1x32xf32> to vector<2x32xf32>
    %311 = vector.shape_cast %308 : vector<2x32xf32> to vector<2x1x32xf32>
    tpu.vector_store %arg16[%c0_100, %c6_101, %c0_102], %311 {strides = array<i32>} : memref<2x8x32xf32, #tpu.memory_space<vmem>>, vector<2x1x32xf32>,
    %cst_103 = arith.constant dense<0.000000e+00> : vector<2x128xf32>
    %312 = tpu.matmul %308, %1, %cst_103 {dimension_numbers = #tpu.dot_dimension_numbers<[1], [0], [0], [1], [0, 0, 1, 1], [], []>} : vector<2x32xf32>, vector<32x128xf32>, vector<2x128xf32> -> vector<2x128xf32>
    %cst_104 = arith.constant dense<0.000000e+00> : vector<2x128xf32>
    %313 = tpu.matmul %285, %2, %cst_104 {dimension_numbers = #tpu.dot_dimension_numbers<[1], [0], [0], [1], [0, 0, 1, 1], [], []>} : vector<2x32xf32>, vector<32x128xf32>, vector<2x128xf32> -> vector<2x128xf32>
    %314 = arith.addf %312, %313 : vector<2x128xf32>
    %315 = math.tanh %314 : vector<2x128xf32>
    %316 = arith.negf %314 : vector<2x128xf32>
    %317 = math.exp %316 : vector<2x128xf32>
    %cst_105 = arith.constant 1.000000e+00 : f32
    %318 = vector.broadcast %cst_105 : f32 to vector<2x128xf32>
    %319 = arith.addf %318, %317 : vector<2x128xf32>
    %320 = arith.divf %318, %319 : vector<2x128xf32>
    %321 = arith.select %14, %315, %320 : vector<2x128xi1>, vector<2x128xf32>
    %322 = vector.extract_strided_slice %321 {offsets = [0, 0], sizes = [2, 32], strides = [1, 1]} : vector<2x128xf32> to vector<2x32xf32>
    %323 = vector.extract_strided_slice %321 {offsets = [0, 32], sizes = [2, 32], strides = [1, 1]} : vector<2x128xf32> to vector<2x32xf32>
    %324 = vector.extract_strided_slice %321 {offsets = [0, 64], sizes = [2, 32], strides = [1, 1]} : vector<2x128xf32> to vector<2x32xf32>
    %325 = vector.extract_strided_slice %321 {offsets = [0, 96], sizes = [2, 32], strides = [1, 1]} : vector<2x128xf32> to vector<2x32xf32>
    %326 = arith.mulf %323, %283 : vector<2x32xf32>
    %327 = arith.mulf %322, %324 : vector<2x32xf32>
    %328 = arith.addf %326, %327 : vector<2x32xf32>
    %329 = math.tanh %328 : vector<2x32xf32>
    %330 = arith.mulf %325, %329 : vector<2x32xf32>
    %c0_106 = arith.constant 0 : index
    %c6_107 = arith.constant 6 : index
    %c0_108 = arith.constant 0 : index
    %331 = vector.load %arg17[%c0_106, %c6_107, %c0_108] : memref<2x8x32xf32, #tpu.memory_space<vmem>>, vector<2x1x32xf32>
    %332 = vector.shape_cast %331 : vector<2x1x32xf32> to vector<2x32xf32>
    %333 = vector.shape_cast %330 : vector<2x32xf32> to vector<2x1x32xf32>
    tpu.vector_store %arg17[%c0_106, %c6_107, %c0_108], %333 {strides = array<i32>} : memref<2x8x32xf32, #tpu.memory_space<vmem>>, vector<2x1x32xf32>,
    %c0_109 = arith.constant 0 : index
    %c7 = arith.constant 7 : index
    %c0_110 = arith.constant 0 : index
    %334 = vector.load %arg15[%c0_109, %c7, %c0_110] : memref<2x8x128xf32, #tpu.memory_space<vmem>>, vector<2x1x128xf32>
    %335 = vector.shape_cast %334 : vector<2x1x128xf32> to vector<2x128xf32>
    %cst_111 = arith.constant dense<0.000000e+00> : vector<2x128xf32>
    %336 = tpu.matmul %308, %0, %cst_111 {dimension_numbers = #tpu.dot_dimension_numbers<[1], [0], [0], [1], [0, 0, 1, 1], [], []>} : vector<2x32xf32>, vector<32x128xf32>, vector<2x128xf32> -> vector<2x128xf32>
    %337 = arith.addf %335, %336 : vector<2x128xf32>
    %338 = math.tanh %337 : vector<2x128xf32>
    %339 = arith.negf %337 : vector<2x128xf32>
    %340 = math.exp %339 : vector<2x128xf32>
    %cst_112 = arith.constant 1.000000e+00 : f32
    %341 = vector.broadcast %cst_112 : f32 to vector<2x128xf32>
    %342 = arith.addf %341, %340 : vector<2x128xf32>
    %343 = arith.divf %341, %342 : vector<2x128xf32>
    %344 = arith.select %14, %338, %343 : vector<2x128xi1>, vector<2x128xf32>
    %345 = vector.extract_strided_slice %344 {offsets = [0, 0], sizes = [2, 32], strides = [1, 1]} : vector<2x128xf32> to vector<2x32xf32>
    %346 = vector.extract_strided_slice %344 {offsets = [0, 32], sizes = [2, 32], strides = [1, 1]} : vector<2x128xf32> to vector<2x32xf32>
    %347 = vector.extract_strided_slice %344 {offsets = [0, 64], sizes = [2, 32], strides = [1, 1]} : vector<2x128xf32> to vector<2x32xf32>
    %348 = vector.extract_strided_slice %344 {offsets = [0, 96], sizes = [2, 32], strides = [1, 1]} : vector<2x128xf32> to vector<2x32xf32>
    %349 = arith.mulf %346, %306 : vector<2x32xf32>
    %350 = arith.mulf %345, %347 : vector<2x32xf32>
    %351 = arith.addf %349, %350 : vector<2x32xf32>
    %352 = math.tanh %351 : vector<2x32xf32>
    %353 = arith.mulf %348, %352 : vector<2x32xf32>
    %c0_113 = arith.constant 0 : index
    %c7_114 = arith.constant 7 : index
    %c0_115 = arith.constant 0 : index
    %354 = vector.load %arg16[%c0_113, %c7_114, %c0_115] : memref<2x8x32xf32, #tpu.memory_space<vmem>>, vector<2x1x32xf32>
    %355 = vector.shape_cast %354 : vector<2x1x32xf32> to vector<2x32xf32>
    %356 = vector.shape_cast %353 : vector<2x32xf32> to vector<2x1x32xf32>
    tpu.vector_store %arg16[%c0_113, %c7_114, %c0_115], %356 {strides = array<i32>} : memref<2x8x32xf32, #tpu.memory_space<vmem>>, vector<2x1x32xf32>,
    %cst_116 = arith.constant dense<0.000000e+00> : vector<2x128xf32>
    %357 = tpu.matmul %353, %1, %cst_116 {dimension_numbers = #tpu.dot_dimension_numbers<[1], [0], [0], [1], [0, 0, 1, 1], [], []>} : vector<2x32xf32>, vector<32x128xf32>, vector<2x128xf32> -> vector<2x128xf32>
    %cst_117 = arith.constant dense<0.000000e+00> : vector<2x128xf32>
    %358 = tpu.matmul %330, %2, %cst_117 {dimension_numbers = #tpu.dot_dimension_numbers<[1], [0], [0], [1], [0, 0, 1, 1], [], []>} : vector<2x32xf32>, vector<32x128xf32>, vector<2x128xf32> -> vector<2x128xf32>
    %359 = arith.addf %357, %358 : vector<2x128xf32>
    %360 = math.tanh %359 : vector<2x128xf32>
    %361 = arith.negf %359 : vector<2x128xf32>
    %362 = math.exp %361 : vector<2x128xf32>
    %cst_118 = arith.constant 1.000000e+00 : f32
    %363 = vector.broadcast %cst_118 : f32 to vector<2x128xf32>
    %364 = arith.addf %363, %362 : vector<2x128xf32>
    %365 = arith.divf %363, %364 : vector<2x128xf32>
    %366 = arith.select %14, %360, %365 : vector<2x128xi1>, vector<2x128xf32>
    %367 = vector.extract_strided_slice %366 {offsets = [0, 0], sizes = [2, 32], strides = [1, 1]} : vector<2x128xf32> to vector<2x32xf32>
    %368 = vector.extract_strided_slice %366 {offsets = [0, 32], sizes = [2, 32], strides = [1, 1]} : vector<2x128xf32> to vector<2x32xf32>
    %369 = vector.extract_strided_slice %366 {offsets = [0, 64], sizes = [2, 32], strides = [1, 1]} : vector<2x128xf32> to vector<2x32xf32>
    %370 = vector.extract_strided_slice %366 {offsets = [0, 96], sizes = [2, 32], strides = [1, 1]} : vector<2x128xf32> to vector<2x32xf32>
    %371 = arith.mulf %368, %328 : vector<2x32xf32>
    %372 = arith.mulf %367, %369 : vector<2x32xf32>
    %373 = arith.addf %371, %372 : vector<2x32xf32>
    %374 = math.tanh %373 : vector<2x32xf32>
    %375 = arith.mulf %370, %374 : vector<2x32xf32>
    %c0_119 = arith.constant 0 : index
    %c7_120 = arith.constant 7 : index
    %c0_121 = arith.constant 0 : index
    %376 = vector.load %arg17[%c0_119, %c7_120, %c0_121] : memref<2x8x32xf32, #tpu.memory_space<vmem>>, vector<2x1x32xf32>
    %377 = vector.shape_cast %376 : vector<2x1x32xf32> to vector<2x32xf32>
    %378 = vector.shape_cast %375 : vector<2x32xf32> to vector<2x1x32xf32>
    tpu.vector_store %arg17[%c0_119, %c7_120, %c0_121], %378 {strides = array<i32>} : memref<2x8x32xf32, #tpu.memory_space<vmem>>, vector<2x1x32xf32>,
    %c0_122 = arith.constant 0 : index
    %c0_123 = arith.constant 0 : index
    %c0_124 = arith.constant 0 : index
    %379 = vector.load %arg16[%c0_122, %c0_123, %c0_124] : memref<2x8x32xf32, #tpu.memory_space<vmem>>, vector<2x8x32xf32>
    %c0_125 = arith.constant 0 : index
    %c0_126 = arith.constant 0 : index
    %c0_127 = arith.constant 0 : index
    %380 = vector.load %arg17[%c0_125, %c0_126, %c0_127] : memref<2x8x32xf32, #tpu.memory_space<vmem>>, vector<2x8x32xf32>
    %381 = arith.addf %379, %380 : vector<2x8x32xf32>
    %382 = vector.shape_cast %381 : vector<2x8x32xf32> to vector<16x32xf32>
    %c0_128 = arith.constant 0 : index
    %c0_129 = arith.constant 0 : index
    %383 = vector.load %arg5[%c0_128, %c0_129] : memref<32x32xf32, #tpu.memory_space<vmem>>, vector<32x32xf32>
    %cst_130 = arith.constant dense<0.000000e+00> : vector<16x32xf32>
    %384 = tpu.matmul %382, %383, %cst_130 {dimension_numbers = #tpu.dot_dimension_numbers<[1], [0], [0], [1], [0, 0, 1, 1], [], []>} : vector<16x32xf32>, vector<32x32xf32>, vector<16x32xf32> -> vector<16x32xf32>
    %cst_131 = arith.constant 0.000000e+00 : f32
    %385 = vector.broadcast %cst_131 : f32 to vector<16x32xf32>
    %386 = arith.maximumf %384, %385 : vector<16x32xf32>
    %c0_132 = arith.constant 0 : index
    %c0_133 = arith.constant 0 : index
    %387 = vector.load %arg6[%c0_132, %c0_133] : memref<1x32xf32, #tpu.memory_space<vmem>>, vector<1x32xf32>
    %388 = vector.broadcast %387 : vector<1x32xf32> to vector<16x32xf32>
    %389 = arith.mulf %386, %388 : vector<16x32xf32>
    %cst_134 = arith.constant dense<0.000000e+00> : vector<16xf32>
    %390 = vector.multi_reduction <add>, %389, %cst_134 [1] : vector<16x32xf32> to vector<16xf32>
    %391 = vector.shape_cast %390 : vector<16xf32> to vector<16x1xf32>
    %392 = vector.shape_cast %391 : vector<16x1xf32> to vector<2x8xf32>
    %c0_135 = arith.constant 0 : index
    %c0_136 = arith.constant 0 : index
    %393 = vector.load %arg13[%c0_135, %c0_136] : memref<2x8xf32, #tpu.memory_space<vmem>>, vector<2x8xf32>
    tpu.vector_store %arg13[%c0_135, %c0_136], %392 {strides = array<i32>} : memref<2x8xf32, #tpu.memory_space<vmem>>, vector<2x8xf32>,
    %c0_137 = arith.constant 0 : index
    %c0_138 = arith.constant 0 : index
    %394 = vector.load %arg7[%c0_137, %c0_138] : memref<1x32xf32, #tpu.memory_space<vmem>>, vector<1x32xf32>
    %395 = vector.shape_cast %394 : vector<1x32xf32> to vector<1x1x32xf32>
    %396 = vector.broadcast %395 : vector<1x1x32xf32> to vector<2x8x32xf32>
    %397 = arith.mulf %379, %396 : vector<2x8x32xf32>
    %cst_139 = arith.constant dense<0.000000e+00> : vector<2x8xf32>
    %398 = vector.multi_reduction <add>, %397, %cst_139 [2] : vector<2x8x32xf32> to vector<2x8xf32>
    %399 = vector.shape_cast %398 : vector<2x8xf32> to vector<2x8x1xf32>
    %c0_140 = arith.constant 0 : index
    %c0_141 = arith.constant 0 : index
    %400 = memref.load %arg11[%c0_140, %c0_141] : memref<1x1xf32, #tpu.memory_space<smem>>
    %401 = vector.broadcast %400 : f32 to vector<2x8x1xf32>
    %402 = arith.addf %399, %401 : vector<2x8x1xf32>
    %c0_142 = arith.constant 0 : index
    %c0_143 = arith.constant 0 : index
    %403 = vector.load %arg8[%c0_142, %c0_143] : memref<1x32xf32, #tpu.memory_space<vmem>>, vector<1x32xf32>
    %404 = vector.shape_cast %403 : vector<1x32xf32> to vector<1x1x32xf32>
    %405 = vector.broadcast %404 : vector<1x1x32xf32> to vector<2x8x32xf32>
    %406 = arith.mulf %380, %405 : vector<2x8x32xf32>
    %cst_144 = arith.constant dense<0.000000e+00> : vector<2x8xf32>
    %407 = vector.multi_reduction <add>, %406, %cst_144 [2] : vector<2x8x32xf32> to vector<2x8xf32>
    %408 = vector.shape_cast %407 : vector<2x8xf32> to vector<2x8x1xf32>
    %c0_145 = arith.constant 0 : index
    %c0_146 = arith.constant 0 : index
    %409 = memref.load %arg12[%c0_145, %c0_146] : memref<1x1xf32, #tpu.memory_space<smem>>
    %410 = vector.broadcast %409 : f32 to vector<2x8x1xf32>
    %411 = arith.addf %408, %410 : vector<2x8x1xf32>
    %cst_147 = arith.constant dense<0xFF800000> : vector<2x1xf32>
    %412 = vector.multi_reduction <maximumf>, %402, %cst_147 [1] : vector<2x8x1xf32> to vector<2x1xf32>
    %413 = vector.shape_cast %412 : vector<2x1xf32> to vector<2x1x1xf32>
    %414 = vector.broadcast %413 : vector<2x1x1xf32> to vector<2x8x1xf32>
    %415 = arith.subf %402, %414 : vector<2x8x1xf32>
    %416 = math.exp %415 : vector<2x8x1xf32>
    %cst_148 = arith.constant dense<0.000000e+00> : vector<2x1xf32>
    %417 = vector.multi_reduction <add>, %416, %cst_148 [1] : vector<2x8x1xf32> to vector<2x1xf32>
    %418 = vector.shape_cast %417 : vector<2x1xf32> to vector<2x1x1xf32>
    %419 = vector.broadcast %418 : vector<2x1x1xf32> to vector<2x8x1xf32>
    %420 = arith.divf %416, %419 : vector<2x8x1xf32>
    %cst_149 = arith.constant dense<0xFF800000> : vector<2x1xf32>
    %421 = vector.multi_reduction <maximumf>, %411, %cst_149 [1] : vector<2x8x1xf32> to vector<2x1xf32>
    %422 = vector.shape_cast %421 : vector<2x1xf32> to vector<2x1x1xf32>
    %423 = vector.broadcast %422 : vector<2x1x1xf32> to vector<2x8x1xf32>
    %424 = arith.subf %411, %423 : vector<2x8x1xf32>
    %425 = math.exp %424 : vector<2x8x1xf32>
    %cst_150 = arith.constant dense<0.000000e+00> : vector<2x1xf32>
    %426 = vector.multi_reduction <add>, %425, %cst_150 [1] : vector<2x8x1xf32> to vector<2x1xf32>
    %427 = vector.shape_cast %426 : vector<2x1xf32> to vector<2x1x1xf32>
    %428 = vector.broadcast %427 : vector<2x1x1xf32> to vector<2x8x1xf32>
    %429 = arith.divf %425, %428 : vector<2x8x1xf32>
    %430 = vector.broadcast %420 : vector<2x8x1xf32> to vector<2x8x32xf32>
    %431 = arith.mulf %430, %379 : vector<2x8x32xf32>
    %432 = vector.broadcast %429 : vector<2x8x1xf32> to vector<2x8x32xf32>
    %433 = arith.mulf %432, %380 : vector<2x8x32xf32>
    %434 = arith.addf %431, %433 : vector<2x8x32xf32>
    %cst_151 = arith.constant dense<0.000000e+00> : vector<2x32xf32>
    %435 = vector.multi_reduction <add>, %434, %cst_151 [1] : vector<2x8x32xf32> to vector<2x32xf32>
    %c0_152 = arith.constant 0 : index
    %c0_153 = arith.constant 0 : index
    %436 = vector.load %arg9[%c0_152, %c0_153] : memref<32x32xf32, #tpu.memory_space<vmem>>, vector<32x32xf32>
    %cst_154 = arith.constant dense<0.000000e+00> : vector<2x32xf32>
    %437 = tpu.matmul %435, %436, %cst_154 {dimension_numbers = #tpu.dot_dimension_numbers<[1], [0], [0], [1], [0, 0, 1, 1], [], []>} : vector<2x32xf32>, vector<32x32xf32>, vector<2x32xf32> -> vector<2x32xf32>
    %cst_155 = arith.constant 0.000000e+00 : f32
    %438 = vector.broadcast %cst_155 : f32 to vector<2x32xf32>
    %439 = arith.maximumf %437, %438 : vector<2x32xf32>
    %c0_156 = arith.constant 0 : index
    %c0_157 = arith.constant 0 : index
    %440 = vector.load %arg10[%c0_156, %c0_157] : memref<32x9xf32, #tpu.memory_space<vmem>>, vector<32x9xf32>
    %cst_158 = arith.constant dense<0.000000e+00> : vector<2x9xf32>
    %441 = tpu.matmul %439, %440, %cst_158 {dimension_numbers = #tpu.dot_dimension_numbers<[1], [0], [0], [1], [0, 0, 1, 1], [], []>} : vector<2x32xf32>, vector<32x9xf32>, vector<2x9xf32> -> vector<2x9xf32>
    %c0_159 = arith.constant 0 : index
    %c0_160 = arith.constant 0 : index
    %442 = vector.load %arg14[%c0_159, %c0_160] : memref<2x9xf32, #tpu.memory_space<vmem>>, vector<2x9xf32>
    tpu.vector_store %arg14[%c0_159, %c0_160], %441 {strides = array<i32>} : memref<2x9xf32, #tpu.memory_space<vmem>>, vector<2x9xf32>,
    return
  }
}

</mosaic_0001>

<llo_original>
// kernel: sequence_model_forward.1
$region0: #{sequence_model_forward.1}
  #allocation0 [shape = 'u32[]', space=smem, size = 0x4, offset = 0x4, fixed_abs, tag = 'smem constant byte address 0x4 - core index']
  #allocation1 [shape = 'u32[144,128]{1,0:T(1,128)}', space=vmem, size = 0x12000, scoped, tag = 'internal scratch']
  #allocation2 [shape = 'f32[2,8,128]{2,1,0:T(8,128)}', space=vmem, size = 0x2000, scoped, tag = 'scratch operand']
  #allocation3 [shape = 'f32[2,8,32]{2,1,0:T(8,128)}', space=vmem, size = 0x2000, scoped, tag = 'scratch operand']
  #allocation4 [shape = 'f32[2,8,32]{2,1,0:T(8,128)}', space=vmem, size = 0x2000, scoped, tag = 'scratch operand']
  #allocation5 [shape = 'f32[1,1]{1,0:T(1,128)S(6)}', space=smem, size = 0x200, scoped, tag = 'scoped memory for sequence_model_forward.1']
  #allocation6 [shape = 'f32[1,1]{1,0:T(1,128)S(6)}', space=smem, size = 0x200, scoped, tag = 'scoped memory for sequence_model_forward.1']
  %s0 = inlined_call_operand.hbm [shape: f32[2,8,32], index: 0, kind: input, shape index: {}]
  %s1 = inlined_call_operand.vmem [shape: f32[32,128], index: 1, kind: input, shape index: {}]
  %s2 = inlined_call_operand.hbm [shape: f32[32,128], index: 2, kind: input, shape index: {}]
  %s3 = inlined_call_operand.vmem [shape: f32[32,128], index: 3, kind: input, shape index: {}]
  %s4 = inlined_call_operand.hbm [shape: f32[32,128], index: 4, kind: input, shape index: {}]
  %s5 = inlined_call_operand.hbm [shape: f32[32,32], index: 5, kind: input, shape index: {}]
  %s6 = inlined_call_operand.vmem [shape: f32[1,32], index: 6, kind: input, shape index: {}]
  %s7 = inlined_call_operand.vmem [shape: f32[1,32], index: 7, kind: input, shape index: {}]
  %s8 = inlined_call_operand.hbm [shape: f32[1,32], index: 8, kind: input, shape index: {}]
  %s9 = inlined_call_operand.hbm [shape: f32[32,32], index: 9, kind: input, shape index: {}]
  %s10 = inlined_call_operand.vmem [shape: f32[32,9], index: 10, kind: input, shape index: {}]
  %s11 = inlined_call_operand.<no memory space> [shape: f32[1,1], index: 11, kind: input, shape index: {}]
  %s12 = inlined_call_operand.<no memory space> [shape: f32[1,1], index: 12, kind: input, shape index: {}]
  %s13 = inlined_call_operand.hbm [shape: f32[2,8], index: 13, kind: output, shape index: {0}]
  %s14 = inlined_call_operand.hbm [shape: f32[2,9], index: 14, kind: output, shape index: {1}]
  %15 = xla_tuple %s13, %s14
  %s16 = sld [smem:[#allocation0]]
  $region94: #{sequence_model_forward.1} parent=0
    _
  %s18 = ssub.s32 1, %s16
  %s19 = scalar_select 0, %s18, %s16
  %20 = sst [smem:[#allocation5]] %s11
  %21 = sst [smem:[#allocation6]] %s12
  $region1: #{sequence_model_forward.1} parent=0
    #allocation7 [shape = 'u8[8192]{0}', space=vmem, size = 0x2000, scoped, tag = 'input window, operand 0, single buffered']
    #allocation8 [shape = 's32[1]{0}', space=sflag, size = 0x4, scoped, tag = 'scoped memory for sequence_model_forward.1']
    #allocation9 [shape = 's32[1]{0}', space=sflag, size = 0x4, scoped, tag = 'scoped memory for sequence_model_forward.1']
    #allocation10 [shape = 'u8[16384]{0}', space=vmem, size = 0x4000, scoped, tag = 'input window, operand 2, single buffered']
    #allocation11 [shape = 's32[1]{0}', space=sflag, size = 0x4, scoped, tag = 'scoped memory for sequence_model_forward.1']
    #allocation12 [shape = 'u8[16384]{0}', space=vmem, size = 0x4000, scoped, tag = 'input window, operand 4, single buffered']
    #allocation13 [shape = 'u8[16384]{0}', space=vmem, size = 0x4000, scoped, tag = 'input window, operand 5, single buffered']
    #allocation14 [shape = 's32[1]{0}', space=sflag, size = 0x4, scoped, tag = 'scoped memory for sequence_model_forward.1']
    #allocation15 [shape = 'u8[512]{0}', space=vmem, size = 0x400, scoped, tag = 'input window, operand 8, single buffered']
    #allocation16 [shape = 'u8[16384]{0}', space=vmem, size = 0x4000, scoped, tag = 'input window, operand 9, single buffered']
    #allocation17 [shape = 's32[1]{0}', space=sflag, size = 0x4, scoped, tag = 'scoped memory for sequence_model_forward.1']
    #allocation18 [shape = 'u8[1024]{0}', space=vmem, size = 0x400, scoped, tag = 'output window, operand 0, single buffered']
    #allocation19 [shape = 'u8[1024]{0}', space=vmem, size = 0x400, scoped, tag = 'output window, operand 1, single buffered']
    #allocation20 [shape = 's32[1]{0}', space=sflag, size = 0x4, scoped, tag = 'scoped memory for sequence_model_forward.1']
    %22 = vsyncpa [#allocation8], 0
    %23 = vsyncpa [#allocation11], 0
    %24 = vsyncpa [#allocation14], 0
    %25 = vsyncpa [#allocation17], 0
    %26 = vsyncpa [#allocation9], 0
    %27 = vsyncpa [#allocation20], 0
    // Predicated region
    $region2: #{sequence_model_forward.1} parent=1 // pred_check
      _
    $region3: #{sequence_model_forward.1} parent=1 // pred_check_branch
      %29 = sbr.rel (0) target = $region5
    $region4: #{sequence_model_forward.1} parent=1 // pred_region
      %s31 = ssub.s32 256, 256
      %32 = vsyncadd [#allocation8], %s31
      %s33 = sshll.u32 [#allocation7], 4
      %s34 = int_to_ptr.vmem [resolvable:$true] %s33
      %39 = dma.hbm_to_vmem [thread:$0]  %s0, 256, %s34, [#allocation8], 128, 128, 8
    $region5: #{sequence_model_forward.1} parent=1 // pred_fallthru
      _
    // Predicated region
    $region6: #{sequence_model_forward.1} parent=1 // pred_check
      _
    $region7: #{sequence_model_forward.1} parent=1 // pred_check_branch
      %41 = sbr.rel (0) target = $region9
    $region8: #{sequence_model_forward.1} parent=1 // pred_region
      _
    $region9: #{sequence_model_forward.1} parent=1 // pred_fallthru
      _
    // Predicated region
    $region10: #{sequence_model_forward.1} parent=1 // pred_check
      _
    $region11: #{sequence_model_forward.1} parent=1 // pred_check_branch
      %43 = sbr.rel (0) target = $region13
    $region12: #{sequence_model_forward.1} parent=1 // pred_region
      %s45 = ssub.s32 512, 512
      %46 = vsyncadd [#allocation11], %s45
      %s47 = sshll.u32 [#allocation10], 4
      %s48 = int_to_ptr.vmem [resolvable:$true] %s47
      %53 = dma.hbm_to_vmem [thread:$0]  %s2, 512, %s48, [#allocation11], 128, 128, 8
    $region13: #{sequence_model_forward.1} parent=1 // pred_fallthru
      _
    // Predicated region
    $region14: #{sequence_model_forward.1} parent=1 // pred_check
      _
    $region15: #{sequence_model_forward.1} parent=1 // pred_check_branch
      %55 = sbr.rel (0) target = $region17
    $region16: #{sequence_model_forward.1} parent=1 // pred_region
      _
    $region17: #{sequence_model_forward.1} parent=1 // pred_fallthru
      _
    // Predicated region
    $region18: #{sequence_model_forward.1} parent=1 // pred_check
      _
    $region19: #{sequence_model_forward.1} parent=1 // pred_check_branch
      %57 = sbr.rel (0) target = $region21
    $region20: #{sequence_model_forward.1} parent=1 // pred_region
      %s59 = ssub.s32 512, 512
      %60 = vsyncadd [#allocation11], %s59
      %s61 = sshll.u32 [#allocation12], 4
      %s62 = int_to_ptr.vmem [resolvable:$true] %s61
      %67 = dma.hbm_to_vmem [thread:$0]  %s4, 512, %s62, [#allocation11], 128, 128, 8
    $region21: #{sequence_model_forward.1} parent=1 // pred_fallthru
      _
    // Predicated region
    $region22: #{sequence_model_forward.1} parent=1 // pred_check
      _
    $region23: #{sequence_model_forward.1} parent=1 // pred_check_branch
      %69 = sbr.rel (0) target = $region25
    $region24: #{sequence_model_forward.1} parent=1 // pred_region
      %s71 = ssub.s32 512, 512
      %72 = vsyncadd [#allocation14], %s71
      %s73 = sshll.u32 [#allocation13], 4
      %s74 = int_to_ptr.vmem [resolvable:$true] %s73
      %79 = dma.hbm_to_vmem [thread:$0]  %s5, 512, %s74, [#allocation14], 128, 128, 8
    $region25: #{sequence_model_forward.1} parent=1 // pred_fallthru
      _
    // Predicated region
    $region26: #{sequence_model_forward.1} parent=1 // pred_check
      _
    $region27: #{sequence_model_forward.1} parent=1 // pred_check_branch
      %81 = sbr.rel (0) target = $region29
    $region28: #{sequence_model_forward.1} parent=1 // pred_region
      _
    $region29: #{sequence_model_forward.1} parent=1 // pred_fallthru
      _
    // Predicated region
    $region30: #{sequence_model_forward.1} parent=1 // pred_check
      _
    $region31: #{sequence_model_forward.1} parent=1 // pred_check_branch
      %83 = sbr.rel (0) target = $region33
    $region32: #{sequence_model_forward.1} parent=1 // pred_region
      _
    $region33: #{sequence_model_forward.1} parent=1 // pred_fallthru
      _
    // Predicated region
    $region34: #{sequence_model_forward.1} parent=1 // pred_check
      _
    $region35: #{sequence_model_forward.1} parent=1 // pred_check_branch
      %85 = sbr.rel (0) target = $region37
    $region36: #{sequence_model_forward.1} parent=1 // pred_region
      %s87 = ssub.s32 16, 16
      %88 = vsyncadd [#allocation14], %s87
      %s90 = sshll.u32 [#allocation15], 4
      %s91 = int_to_ptr.vmem [resolvable:$true] %s90
      %93 = dma.hbm_to_vmem [thread:$0]  %s8, 16, %s91, [#allocation14]
    $region37: #{sequence_model_forward.1} parent=1 // pred_fallthru
      _
    // Predicated region
    $region38: #{sequence_model_forward.1} parent=1 // pred_check
      _
    $region39: #{sequence_model_forward.1} parent=1 // pred_check_branch
      %95 = sbr.rel (0) target = $region41
    $region40: #{sequence_model_forward.1} parent=1 // pred_region
      %s97 = ssub.s32 512, 512
      %98 = vsyncadd [#allocation17], %s97
      %s99 = sshll.u32 [#allocation16], 4
      %s100 = int_to_ptr.vmem [resolvable:$true] %s99
      %105 = dma.hbm_to_vmem [thread:$0]  %s9, 512, %s100, [#allocation17], 128, 128, 8
    $region41: #{sequence_model_forward.1} parent=1 // pred_fallthru
      _
    // Predicated region
    $region42: #{sequence_model_forward.1} parent=1 // pred_check
      _
    $region43: #{sequence_model_forward.1} parent=1 // pred_check_branch
      %107 = sbr.rel (0) target = $region45
    $region44: #{sequence_model_forward.1} parent=1 // pred_region
      _
    $region45: #{sequence_model_forward.1} parent=1 // pred_fallthru
      _
    // Predicated region
    $region46: #{sequence_model_forward.1} parent=1 // pred_check
      _
    $region47: #{sequence_model_forward.1} parent=1 // pred_check_branch
      %109 = sbr.rel (0) target = $region49
    $region48: #{sequence_model_forward.1} parent=1 // pred_region
      _
    $region49: #{sequence_model_forward.1} parent=1 // pred_fallthru
      _
    // Predicated region
    $region50: #{sequence_model_forward.1} parent=1 // pred_check
      _
    $region51: #{sequence_model_forward.1} parent=1 // pred_check_branch
      %111 = sbr.rel (0) target = $region53
    $region52: #{sequence_model_forward.1} parent=1 // pred_region
      _
    $region53: #{sequence_model_forward.1} parent=1 // pred_fallthru
      _
    // Predicated region
    $region54: #{sequence_model_forward.1} parent=1 // pred_check
      _
    $region55: #{sequence_model_forward.1} parent=1 // pred_check_branch
      %113 = sbr.rel (0) target = $region57
    $region56: #{sequence_model_forward.1} parent=1 // pred_region
      %114 = dma.done [#allocation8], 256
    $region57: #{sequence_model_forward.1} parent=1 // pred_fallthru
      _
    // Predicated region
    $region58: #{sequence_model_forward.1} parent=1 // pred_check
      _
    $region59: #{sequence_model_forward.1} parent=1 // pred_check_branch
      %116 = sbr.rel (0) target = $region61
    $region60: #{sequence_model_forward.1} parent=1 // pred_region
      %117 = dma.done [#allocation11], 512
    $region61: #{sequence_model_forward.1} parent=1 // pred_fallthru
      _
    // Predicated region
    $region62: #{sequence_model_forward.1} parent=1 // pred_check
      _
    $region63: #{sequence_model_forward.1} parent=1 // pred_check_branch
      %119 = sbr.rel (0) target = $region65
    $region64: #{sequence_model_forward.1} parent=1 // pred_region
      %120 = dma.done [#allocation11], 512
    $region65: #{sequence_model_forward.1} parent=1 // pred_fallthru
      _
    // Predicated region
    $region66: #{sequence_model_forward.1} parent=1 // pred_check
      _
    $region67: #{sequence_model_forward.1} parent=1 // pred_check_branch
      %122 = sbr.rel (0) target = $region69
    $region68: #{sequence_model_forward.1} parent=1 // pred_region
      %123 = dma.done [#allocation14], 512
    $region69: #{sequence_model_forward.1} parent=1 // pred_fallthru
      _
    // Predicated region
    $region70: #{sequence_model_forward.1} parent=1 // pred_check
      _
    $region71: #{sequence_model_forward.1} parent=1 // pred_check_branch
      %125 = sbr.rel (0) target = $region73
    $region72: #{sequence_model_forward.1} parent=1 // pred_region
      %126 = dma.done [#allocation14], 16
    $region73: #{sequence_model_forward.1} parent=1 // pred_fallthru
      _
    // Predicated region
    $region74: #{sequence_model_forward.1} parent=1 // pred_check
      _
    $region75: #{sequence_model_forward.1} parent=1 // pred_check_branch
      %128 = sbr.rel (0) target = $region77
    $region76: #{sequence_model_forward.1} parent=1 // pred_region
      %129 = dma.done [#allocation17], 512
    $region77: #{sequence_model_forward.1} parent=1 // pred_fallthru
      _
    %v130 = vld [vmem:[#allocation10] sm:$0xff]
    %v131 = vld [vmem:[#allocation10 + $0x8] sm:$0xff]
    %v132 = vld [vmem:[#allocation10 + $0x10] sm:$0xff]
    %v133 = vld [vmem:[#allocation10 + $0x18] sm:$0xff]
    %v134 = vld [vmem:[%s3] sm:$0xff]
    %v135 = vld [vmem:[%s3 + $0x8] sm:$0xff]
    %v136 = vld [vmem:[%s3 + $0x10] sm:$0xff]
    %v137 = vld [vmem:[%s3 + $0x18] sm:$0xff]
    %v138 = vld [vmem:[#allocation12] sm:$0xff]
    %v139 = vld [vmem:[#allocation12 + $0x8] sm:$0xff]
    %v140 = vld [vmem:[#allocation12 + $0x10] sm:$0xff]
    %v141 = vld [vmem:[#allocation12 + $0x18] sm:$0xff]
    %v142 = vld [vmem:[#allocation7] sm:$0xff]
    %v143 = vld [vmem:[#allocation7 + $0x8] sm:$0xff]
    %v144 = vld [vmem:[%s1] sm:$0xff]
    %v145 = vld [vmem:[%s1 + $0x8] sm:$0xff]
    %v146 = vld [vmem:[%s1 + $0x10] sm:$0xff]
    %v147 = vld [vmem:[%s1 + $0x18] sm:$0xff]
    %vm148 = vcmask 261120
    %v150 = vsel %vm148, %v142, 0
    %v153 = vsel %vm148, %v143, 0
    %155 = vmatprep.subr.mxu0 0.0
    %156 = vmatpush1.msra.mxu0 %v144
    %157 = vmatprep.subr.mxu0 0.0
    %158 = vmatpush1.msra.mxu0 %v145
    %159 = vmatprep.subr.mxu0 0.0
    %160 = vmatpush1.msra.mxu0 %v146
    %161 = vmatprep.subr.mxu0 0.0
    %162 = vmatpush1.msra.mxu0 %v147
    %163 = vmatprep.subr.mxu0 0.0
    %164 = vmatpush1.msra.mxu0 0.0
    %165 = vmatprep.subr.mxu0 0.0
    %166 = vmatpush1.msra.mxu0 0.0
    %167 = vmatprep.subr.mxu0 0.0
    %168 = vmatpush1.msra.mxu0 0.0
    %169 = vmatprep.subr.mxu0 0.0
    %170 = vmatpush1.msra.mxu0 0.0
    %171 = vmatprep.subr.mxu0 0.0
    %172 = vmatpush1.msra.mxu0 0.0
    %173 = vmatprep.subr.mxu0 0.0
    %174 = vmatpush1.msra.mxu0 0.0
    %175 = vmatprep.subr.mxu0 0.0
    %176 = vmatpush1.msra.mxu0 0.0
    %177 = vmatprep.subr.mxu0 0.0
    %178 = vmatpush1.msra.mxu0 0.0
    %179 = vmatprep.subr.mxu0 0.0
    %180 = vmatpush1.msra.mxu0 0.0
    %181 = vmatprep.subr.mxu0 0.0
    %182 = vmatpush1.msra.mxu0 0.0
    %183 = vmatprep.subr.mxu0 0.0
    %184 = vmatpush1.msra.mxu0 0.0
    %185 = vmatprep.subr.mxu0 0.0
    %186 = vmatpush1.msra.mxu0 0.0
    %187 = vmatprep.subr.mxu0 0.0
    %188 = vmatpush1.msra.mxu0 0.0
    %189 = vmatprep.subr.mxu0 0.0
    %190 = vmatpush1.msra.mxu0 0.0
    %191 = vmatprep.subr.mxu0 0.0
    %192 = vmatpush1.msra.mxu0 0.0
    %193 = vmatprep.subr.mxu0 0.0
    %194 = vmatpush1.msra.mxu0 0.0
    %195 = vmatprep.subr.mxu0 0.0
    %196 = vmatpush1.msra.mxu0 0.0
    %197 = vmatprep.subr.mxu0 0.0
    %198 = vmatpush1.msra.mxu0 0.0
    %199 = vmatprep.subr.mxu0 0.0
    %200 = vmatpush1.msra.mxu0 0.0
    %201 = vmatprep.subr.mxu0 0.0
    %202 = vmatpush1.msra.mxu0 0.0
    %203 = vmatprep.subr.mxu0 0.0
    %204 = vmatpush1.msra.mxu0 0.0
    %205 = vmatprep.subr.mxu0 0.0
    %206 = vmatpush1.msra.mxu0 0.0
    %207 = vmatprep.subr.mxu0 0.0
    %208 = vmatpush1.msra.mxu0 0.0
    %209 = vmatprep.subr.mxu0 0.0
    %210 = vmatpush1.msra.mxu0 0.0
    %211 = vmatprep.subr.mxu0 0.0
    %212 = vmatpush1.msra.mxu0 0.0
    %213 = vmatprep.subr.mxu0 0.0
    %214 = vmatpush1.msra.mxu0 0.0
    %215 = vmatprep.subr.mxu0 0.0
    %216 = vmatpush1.msra.mxu0 0.0
    %217 = vmatprep.subr.mxu0 0.0
    %218 = vmatpush1.msra.mxu0 0.0
    %219 = vmatprep.mubr.f32.mxu0 0.0
    %220 = vmatmul.mubr.f32.gmra.mrb[0].mxu0 %v150
    %v221 = vpop.f32.mrb[0].mxu0
    %v222 = vadd.f32 0.0, %v221
    %v223 = vpop.f32.mrb[0].mxu0
    %224 = vmatprep.mubr.f32.mxu0 0.0
    %225 = vmatmul.mubr.f32.gmra.mrb[0].mxu0 %v153
    %v226 = vpop.f32.mrb[0].mxu0
    %v227 = vadd.f32 0.0, %v226
    %v228 = vpop.f32.mrb[0].mxu0
    %229 = vdwg.mxu0
    %230 = vst [vmem:[#allocation2] sm:$0xff] %v222
    %231 = vst [vmem:[#allocation2 + $0x8] sm:$0xff] %v227
    %v232 = vlaneseq
    %v233 = vand.u32 %v232, 127
    %vm234 = vcmp.ge.s32.totalorder %v233, 64
    %vm235 = vcmp.lt.s32.totalorder %v233, 96
    %vm236 = vmand %vm234, %vm235
    %v237 = vld [vmem:[#allocation2] sm:$0x1]
    %v238 = vld [vmem:[#allocation2 + $0x8] sm:$0x1]
    %v240 = vsel %vm148, 0.0, 0
    %242 = vmatprep.subr.mxu0 0.0
    %243 = vmatpush1.msra.mxu0 %v130
    %244 = vmatprep.subr.mxu0 0.0
    %245 = vmatpush1.msra.mxu0 %v131
    %246 = vmatprep.subr.mxu0 0.0
    %247 = vmatpush1.msra.mxu0 %v132
    %248 = vmatprep.subr.mxu0 0.0
    %249 = vmatpush1.msra.mxu0 %v133
    %250 = vmatprep.subr.mxu0 0.0
    %251 = vmatpush1.msra.mxu0 0.0
    %252 = vmatprep.subr.mxu0 0.0
    %253 = vmatpush1.msra.mxu0 0.0
    %254 = vmatprep.subr.mxu0 0.0
    %255 = vmatpush1.msra.mxu0 0.0
    %256 = vmatprep.subr.mxu0 0.0
    %257 = vmatpush1.msra.mxu0 0.0
    %258 = vmatprep.subr.mxu0 0.0
    %259 = vmatpush1.msra.mxu0 0.0
    %260 = vmatprep.subr.mxu0 0.0
    %261 = vmatpush1.msra.mxu0 0.0
    %262 = vmatprep.subr.mxu0 0.0
    %263 = vmatpush1.msra.mxu0 0.0
    %264 = vmatprep.subr.mxu0 0.0
    %265 = vmatpush1.msra.mxu0 0.0
    %266 = vmatprep.subr.mxu0 0.0
    %267 = vmatpush1.msra.mxu0 0.0
    %268 = vmatprep.subr.mxu0 0.0
    %269 = vmatpush1.msra.mxu0 0.0
    %270 = vmatprep.subr.mxu0 0.0
    %271 = vmatpush1.msra.mxu0 0.0
    %272 = vmatprep.subr.mxu0 0.0
    %273 = vmatpush1.msra.mxu0 0.0
    %274 = vmatprep.subr.mxu0 0.0
    %275 = vmatpush1.msra.mxu0 0.0
    %276 = vmatprep.subr.mxu0 0.0
    %277 = vmatpush1.msra.mxu0 0.0
    %278 = vmatprep.subr.mxu0 0.0
    %279 = vmatpush1.msra.mxu0 0.0
    %280 = vmatprep.subr.mxu0 0.0
    %281 = vmatpush1.msra.mxu0 0.0
    %282 = vmatprep.subr.mxu0 0.0
    %283 = vmatpush1.msra.mxu0 0.0
    %284 = vmatprep.subr.mxu0 0.0
    %285 = vmatpush1.msra.mxu0 0.0
    %286 = vmatprep.subr.mxu0 0.0
    %287 = vmatpush1.msra.mxu0 0.0
    %288 = vmatprep.subr.mxu0 0.0
    %289 = vmatpush1.msra.mxu0 0.0
    %290 = vmatprep.subr.mxu0 0.0
    %291 = vmatpush1.msra.mxu0 0.0
    %292 = vmatprep.subr.mxu0 0.0
    %293 = vmatpush1.msra.mxu0 0.0
    %294 = vmatprep.subr.mxu0 0.0
    %295 = vmatpush1.msra.mxu0 0.0
    %296 = vmatprep.subr.mxu0 0.0
    %297 = vmatpush1.msra.mxu0 0.0
    %298 = vmatprep.subr.mxu0 0.0
    %299 = vmatpush1.msra.mxu0 0.0
    %300 = vmatprep.subr.mxu0 0.0
    %301 = vmatpush1.msra.mxu0 0.0
    %302 = vmatprep.subr.mxu0 0.0
    %303 = vmatpush1.msra.mxu0 0.0
    %304 = vmatprep.subr.mxu0 0.0
    %305 = vmatpush1.msra.mxu0 0.0
    %306 = vmatprep.mubr.f32.mxu0 0.0
    %307 = vmatmul.mubr.f32.gmra.mrb[0].mxu0 %v240
    %v308 = vpop.f32.mrb[0].mxu0
    %v309 = vadd.f32 0.0, %v308
    %v310 = vpop.f32.mrb[0].mxu0
    %311 = vdwg.mxu0
    %v313 = vrot.slane %v309, 1
    %v316 = vadd.f32 %v237, %v309
    %v317 = vadd.f32 %v238, %v313
    %v318 = vtanh.pop %v316
    %v319 = vtanh.pop %v317
    %v320 = vxor.u32 %v316, 2147483648
    %v321 = vxor.u32 %v317, 2147483648
    %v322 = vmul.f32 %v320, 1.442695
    %v323 = vpow.pop %v322
    %v324 = vmul.f32 %v321, 1.442695
    %v325 = vpow.pop %v324
    %v326 = vadd.f32 %v323, 1.0
    %v327 = vadd.f32 %v325, 1.0
    %v328 = vrcp.pop %v326
    %v329 = vmul.f32 1.0, %v328
    %v330 = vrcp.pop %v327
    %v331 = vmul.f32 1.0, %v330
    %v334 = vrot.slane %v319, 7
    %vm335 = vcmask 1041409
    %v336 = vsel %vm335, %v334, %v318
    %v340 = vrot.slane %v331, 7
    %v341 = vsel %vm335, %v340, %v329
    %v343 = vsel %vm236, %v336, %v341
    %v344 = vmul.f32 %v343, 0.0
    %346 = vrot.lane.b32.xlu0 %v343, 64
    %v347 = vpop.permute.xlu0 %346
    %v349 = vmul.f32 %v343, %v347
    %351 = vrot.lane.b32.xlu0 %v349, 32
    %v352 = vpop.permute.xlu0 %351
    %v354 = vadd.f32 %v344, %v352
    %v355 = vtanh.pop %v354
    %357 = vrot.lane.b32.xlu0 %v355, 64
    %v358 = vpop.permute.xlu0 %357
    %v360 = vmul.f32 %v343, %v358
    %v363 = vunpack.c.l.s4 1966171168
    %v364 = vunpack.c.0.s8 %v363
    %v365 = vlaneseq
    %v366 = vshrl.u32 %v365, 7
    %v367 = vsub.s32 %v364, %v366
    %v368 = vrot.slane %v360, %v367
    %v369 = vcombine.high %v368, %v368
    %v371 = vunpack.c.l.s4 1966171168
    %v372 = vunpack.c.0.s8 %v371
    %v373 = vlaneseq
    %v374 = vshrl.u32 %v373, 7
    %v375 = vsub.s32 %v372, %v374
    %v376 = vrot.slane %v368, %v375
    %v378 = vunpack.c.l.s4 1966171168
    %v379 = vunpack.c.0.s8 %v378
    %v380 = vlaneseq
    %v381 = vshrl.u32 %v380, 7
    %v382 = vsub.s32 %v379, %v381
    %v383 = vrot.slane %v369, %v382
    %v384 = vlaneseq
    %v385 = vshrl.u32 %v384, 7
    %v386 = vsub.s32 0, %v385
    %v387 = vrot.slane %v376, %v386
    %v388 = vlaneseq
    %v389 = vshrl.u32 %v388, 7
    %v390 = vsub.s32 0, %v389
    %v391 = vrot.slane %v383, %v390
    %392 = vrot.lane.b32.xlu0 %v387, 32
    %v393 = vpop.permute.xlu0 %392
    %394 = vrot.lane.b32.xlu0 %v391, 32
    %v395 = vpop.permute.xlu0 %394
    %vm398 = vcmask 253952
    %399 = vst.msk [vmem:[#allocation3] sm:$0x1] %vm398, %v393
    %400 = vst.msk [vmem:[#allocation3 + $0x8] sm:$0x1] %vm398, %v395
    %401 = vmatprep.subr.mxu0 0.0
    %402 = vmatpush1.msra.mxu0 %v138
    %403 = vmatprep.subr.mxu0 0.0
    %404 = vmatpush1.msra.mxu0 %v139
    %405 = vmatprep.subr.mxu0 0.0
    %406 = vmatpush1.msra.mxu0 %v140
    %407 = vmatprep.subr.mxu0 0.0
    %408 = vmatpush1.msra.mxu0 %v141
    %409 = vmatprep.subr.mxu0 0.0
    %410 = vmatpush1.msra.mxu0 0.0
    %411 = vmatprep.subr.mxu0 0.0
    %412 = vmatpush1.msra.mxu0 0.0
    %413 = vmatprep.subr.mxu0 0.0
    %414 = vmatpush1.msra.mxu0 0.0
    %415 = vmatprep.subr.mxu0 0.0
    %416 = vmatpush1.msra.mxu0 0.0
    %417 = vmatprep.subr.mxu0 0.0
    %418 = vmatpush1.msra.mxu0 0.0
    %419 = vmatprep.subr.mxu0 0.0
    %420 = vmatpush1.msra.mxu0 0.0
    %421 = vmatprep.subr.mxu0 0.0
    %422 = vmatpush1.msra.mxu0 0.0
    %423 = vmatprep.subr.mxu0 0.0
    %424 = vmatpush1.msra.mxu0 0.0
    %425 = vmatprep.subr.mxu0 0.0
    %426 = vmatpush1.msra.mxu0 0.0
    %427 = vmatprep.subr.mxu0 0.0
    %428 = vmatpush1.msra.mxu0 0.0
    %429 = vmatprep.subr.mxu0 0.0
    %430 = vmatpush1.msra.mxu0 0.0
    %431 = vmatprep.subr.mxu0 0.0
    %432 = vmatpush1.msra.mxu0 0.0
    %433 = vmatprep.subr.mxu0 0.0
    %434 = vmatpush1.msra.mxu0 0.0
    %435 = vmatprep.subr.mxu0 0.0
    %436 = vmatpush1.msra.mxu0 0.0
    %437 = vmatprep.subr.mxu0 0.0
    %438 = vmatpush1.msra.mxu0 0.0
    %439 = vmatprep.subr.mxu0 0.0
    %440 = vmatpush1.msra.mxu0 0.0
    %441 = vmatprep.subr.mxu0 0.0
    %442 = vmatpush1.msra.mxu0 0.0
    %443 = vmatprep.subr.mxu0 0.0
    %444 = vmatpush1.msra.mxu0 0.0
    %445 = vmatprep.subr.mxu0 0.0
    %446 = vmatpush1.msra.mxu0 0.0
    %447 = vmatprep.subr.mxu0 0.0
    %448 = vmatpush1.msra.mxu0 0.0
    %449 = vmatprep.subr.mxu0 0.0
    %450 = vmatpush1.msra.mxu0 0.0
    %451 = vmatprep.subr.mxu0 0.0
    %452 = vmatpush1.msra.mxu0 0.0
    %453 = vmatprep.subr.mxu0 0.0
    %454 = vmatpush1.msra.mxu0 0.0
    %455 = vmatprep.subr.mxu0 0.0
    %456 = vmatpush1.msra.mxu0 0.0
    %457 = vmatprep.subr.mxu0 0.0
    %458 = vmatpush1.msra.mxu0 0.0
    %459 = vmatprep.subr.mxu0 0.0
    %460 = vmatpush1.msra.mxu0 0.0
    %461 = vmatprep.subr.mxu0 0.0
    %462 = vmatpush1.msra.mxu0 0.0
    %463 = vmatprep.subr.mxu0 0.0
    %464 = vmatpush1.msra.mxu0 0.0
    %465 = vmatprep.mubr.f32.mxu0 0.0
    %466 = vmatmul.mubr.f32.gmra.mrb[0].mxu0 %v240
    %v467 = vpop.f32.mrb[0].mxu0
    %v468 = vadd.f32 0.0, %v467
    %v469 = vpop.f32.mrb[0].mxu0
    %470 = vdwg.mxu0
    %471 = vrot.lane.b32.xlu0 %v360, 32
    %v472 = vpop.permute.xlu0 %471
    %v473 = vsel %vm148, %v472, 0
    %475 = vmatprep.subr.mxu0 0.0
    %476 = vmatpush1.msra.mxu0 %v134
    %477 = vmatprep.subr.mxu0 0.0
    %478 = vmatpush1.msra.mxu0 %v135
    %479 = vmatprep.subr.mxu0 0.0
    %480 = vmatpush1.msra.mxu0 %v136
    %481 = vmatprep.subr.mxu0 0.0
    %482 = vmatpush1.msra.mxu0 %v137
    %483 = vmatprep.subr.mxu0 0.0
    %484 = vmatpush1.msra.mxu0 0.0
    %485 = vmatprep.subr.mxu0 0.0
    %486 = vmatpush1.msra.mxu0 0.0
    %487 = vmatprep.subr.mxu0 0.0
    %488 = vmatpush1.msra.mxu0 0.0
    %489 = vmatprep.subr.mxu0 0.0
    %490 = vmatpush1.msra.mxu0 0.0
    %491 = vmatprep.subr.mxu0 0.0
    %492 = vmatpush1.msra.mxu0 0.0
    %493 = vmatprep.subr.mxu0 0.0
    %494 = vmatpush1.msra.mxu0 0.0
    %495 = vmatprep.subr.mxu0 0.0
    %496 = vmatpush1.msra.mxu0 0.0
    %497 = vmatprep.subr.mxu0 0.0
    %498 = vmatpush1.msra.mxu0 0.0
    %499 = vmatprep.subr.mxu0 0.0
    %500 = vmatpush1.msra.mxu0 0.0
    %501 = vmatprep.subr.mxu0 0.0
    %502 = vmatpush1.msra.mxu0 0.0
    %503 = vmatprep.subr.mxu0 0.0
    %504 = vmatpush1.msra.mxu0 0.0
    %505 = vmatprep.subr.mxu0 0.0
    %506 = vmatpush1.msra.mxu0 0.0
    %507 = vmatprep.subr.mxu0 0.0
    %508 = vmatpush1.msra.mxu0 0.0
    %509 = vmatprep.subr.mxu0 0.0
    %510 = vmatpush1.msra.mxu0 0.0
    %511 = vmatprep.subr.mxu0 0.0
    %512 = vmatpush1.msra.mxu0 0.0
    %513 = vmatprep.subr.mxu0 0.0
    %514 = vmatpush1.msra.mxu0 0.0
    %515 = vmatprep.subr.mxu0 0.0
    %516 = vmatpush1.msra.mxu0 0.0
    %517 = vmatprep.subr.mxu0 0.0
    %518 = vmatpush1.msra.mxu0 0.0
    %519 = vmatprep.subr.mxu0 0.0
    %520 = vmatpush1.msra.mxu0 0.0
    %521 = vmatprep.subr.mxu0 0.0
    %522 = vmatpush1.msra.mxu0 0.0
    %523 = vmatprep.subr.mxu0 0.0
    %524 = vmatpush1.msra.mxu0 0.0
    %525 = vmatprep.subr.mxu0 0.0
    %526 = vmatpush1.msra.mxu0 0.0
    %527 = vmatprep.subr.mxu0 0.0
    %528 = vmatpush1.msra.mxu0 0.0
    %529 = vmatprep.subr.mxu0 0.0
    %530 = vmatpush1.msra.mxu0 0.0
    %531 = vmatprep.subr.mxu0 0.0
    %532 = vmatpush1.msra.mxu0 0.0
    %533 = vmatprep.subr.mxu0 0.0
    %534 = vmatpush1.msra.mxu0 0.0
    %535 = vmatprep.subr.mxu0 0.0
    %536 = vmatpush1.msra.mxu0 0.0
    %537 = vmatprep.subr.mxu0 0.0
    %538 = vmatpush1.msra.mxu0 0.0
    %539 = vmatprep.mubr.f32.mxu0 0.0
    %540 = vmatmul.mubr.f32.gmra.mrb[0].mxu0 %v473
    %v541 = vpop.f32.mrb[0].mxu0
    %v542 = vadd.f32 %v468, %v541
    %v543 = vpop.f32.mrb[0].mxu0
    %544 = vdwg.mxu0
    %v545 = vtanh.pop %v542
    %v546 = vxor.u32 %v542, 2147483648
    %v547 = vmul.f32 %v546, 1.442695
    %v548 = vpow.pop %v547
    %v549 = vadd.f32 %v548, 1.0
    %v550 = vrcp.pop %v549
    %v551 = vmul.f32 1.0, %v550
    %v552 = vsel %vm236, %v545, %v551
    %v553 = vmul.f32 %v552, 0.0
    %555 = vrot.lane.b32.xlu0 %v552, 64
    %v556 = vpop.permute.xlu0 %555
    %v558 = vmul.f32 %v552, %v556
    %560 = vrot.lane.b32.xlu0 %v558, 32
    %v561 = vpop.permute.xlu0 %560
    %v563 = vadd.f32 %v553, %v561
    %v564 = vtanh.pop %v563
    %566 = vrot.lane.b32.xlu0 %v564, 64
    %v567 = vpop.permute.xlu0 %566
    %v569 = vmul.f32 %v552, %v567
    %v572 = vunpack.c.l.s4 1966171168
    %v573 = vunpack.c.0.s8 %v572
    %v574 = vlaneseq
    %v575 = vshrl.u32 %v574, 7
    %v576 = vsub.s32 %v573, %v575
    %v577 = vrot.slane %v569, %v576
    %v578 = vcombine.high %v577, %v577
    %v580 = vunpack.c.l.s4 1966171168
    %v581 = vunpack.c.0.s8 %v580
    %v582 = vlaneseq
    %v583 = vshrl.u32 %v582, 7
    %v584 = vsub.s32 %v581, %v583
    %v585 = vrot.slane %v577, %v584
    %v587 = vunpack.c.l.s4 1966171168
    %v588 = vunpack.c.0.s8 %v587
    %v589 = vlaneseq
    %v590 = vshrl.u32 %v589, 7
    %v591 = vsub.s32 %v588, %v590
    %v592 = vrot.slane %v578, %v591
    %v593 = vlaneseq
    %v594 = vshrl.u32 %v593, 7
    %v595 = vsub.s32 0, %v594
    %v596 = vrot.slane %v585, %v595
    %v597 = vlaneseq
    %v598 = vshrl.u32 %v597, 7
    %v599 = vsub.s32 0, %v598
    %v600 = vrot.slane %v592, %v599
    %601 = vrot.lane.b32.xlu0 %v596, 32
    %v602 = vpop.permute.xlu0 %601
    %603 = vrot.lane.b32.xlu0 %v600, 32
    %v604 = vpop.permute.xlu0 %603
    %607 = vst.msk [vmem:[#allocation4] sm:$0x1] %vm398, %v602
    %608 = vst.msk [vmem:[#allocation4 + $0x8] sm:$0x1] %vm398, %v604
    %v609 = vld [vmem:[#allocation2 + $0x1] sm:$0x1]
    %v610 = vld [vmem:[#allocation2 + $0x9] sm:$0x1]
    %611 = vmatprep.subr.mxu0 0.0
    %612 = vmatpush1.msra.mxu0 %v130
    %613 = vmatprep.subr.mxu0 0.0
    %614 = vmatpush1.msra.mxu0 %v131
    %615 = vmatprep.subr.mxu0 0.0
    %616 = vmatpush1.msra.mxu0 %v132
    %617 = vmatprep.subr.mxu0 0.0
    %618 = vmatpush1.msra.mxu0 %v133
    %619 = vmatprep.subr.mxu0 0.0
    %620 = vmatpush1.msra.mxu0 0.0
    %621 = vmatprep.subr.mxu0 0.0
    %622 = vmatpush1.msra.mxu0 0.0
    %623 = vmatprep.subr.mxu0 0.0
    %624 = vmatpush1.msra.mxu0 0.0
    %625 = vmatprep.subr.mxu0 0.0
    %626 = vmatpush1.msra.mxu0 0.0
    %627 = vmatprep.subr.mxu0 0.0
    %628 = vmatpush1.msra.mxu0 0.0
    %629 = vmatprep.subr.mxu0 0.0
    %630 = vmatpush1.msra.mxu0 0.0
    %631 = vmatprep.subr.mxu0 0.0
    %632 = vmatpush1.msra.mxu0 0.0
    %633 = vmatprep.subr.mxu0 0.0
    %634 = vmatpush1.msra.mxu0 0.0
    %635 = vmatprep.subr.mxu0 0.0
    %636 = vmatpush1.msra.mxu0 0.0
    %637 = vmatprep.subr.mxu0 0.0
    %638 = vmatpush1.msra.mxu0 0.0
    %639 = vmatprep.subr.mxu0 0.0
    %640 = vmatpush1.msra.mxu0 0.0
    %641 = vmatprep.subr.mxu0 0.0
    %642 = vmatpush1.msra.mxu0 0.0
    %643 = vmatprep.subr.mxu0 0.0
    %644 = vmatpush1.msra.mxu0 0.0
    %645 = vmatprep.subr.mxu0 0.0
    %646 = vmatpush1.msra.mxu0 0.0
    %647 = vmatprep.subr.mxu0 0.0
    %648 = vmatpush1.msra.mxu0 0.0
    %649 = vmatprep.subr.mxu0 0.0
    %650 = vmatpush1.msra.mxu0 0.0
    %651 = vmatprep.subr.mxu0 0.0
    %652 = vmatpush1.msra.mxu0 0.0
    %653 = vmatprep.subr.mxu0 0.0
    %654 = vmatpush1.msra.mxu0 0.0
    %655 = vmatprep.subr.mxu0 0.0
    %656 = vmatpush1.msra.mxu0 0.0
    %657 = vmatprep.subr.mxu0 0.0
    %658 = vmatpush1.msra.mxu0 0.0
    %659 = vmatprep.subr.mxu0 0.0
    %660 = vmatpush1.msra.mxu0 0.0
    %661 = vmatprep.subr.mxu0 0.0
    %662 = vmatpush1.msra.mxu0 0.0
    %663 = vmatprep.subr.mxu0 0.0
    %664 = vmatpush1.msra.mxu0 0.0
    %665 = vmatprep.subr.mxu0 0.0
    %666 = vmatpush1.msra.mxu0 0.0
    %667 = vmatprep.subr.mxu0 0.0
    %668 = vmatpush1.msra.mxu0 0.0
    %669 = vmatprep.subr.mxu0 0.0
    %670 = vmatpush1.msra.mxu0 0.0
    %671 = vmatprep.subr.mxu0 0.0
    %672 = vmatpush1.msra.mxu0 0.0
    %673 = vmatprep.subr.mxu0 0.0
    %674 = vmatpush1.msra.mxu0 0.0
    %675 = vmatprep.mubr.f32.mxu0 0.0
    %676 = vmatmul.mubr.f32.gmra.mrb[0].mxu0 %v473
    %v677 = vpop.f32.mrb[0].mxu0
    %v678 = vadd.f32 0.0, %v677
    %v679 = vpop.f32.mrb[0].mxu0
    %680 = vdwg.mxu0
    %v682 = vrot.slane %v678, 1
    %v685 = vadd.f32 %v609, %v678
    %v686 = vadd.f32 %v610, %v682
    %v687 = vtanh.pop %v685
    %v688 = vtanh.pop %v686
    %v689 = vxor.u32 %v685, 2147483648
    %v690 = vxor.u32 %v686, 2147483648
    %v691 = vmul.f32 %v689, 1.442695
    %v692 = vpow.pop %v691
    %v693 = vmul.f32 %v690, 1.442695
    %v694 = vpow.pop %v693
    %v695 = vadd.f32 %v692, 1.0
    %v696 = vadd.f32 %v694, 1.0
    %v697 = vrcp.pop %v695
    %v698 = vmul.f32 1.0, %v697
    %v699 = vrcp.pop %v696
    %v700 = vmul.f32 1.0, %v699
    %v703 = vrot.slane %v688, 7
    %v704 = vsel %vm335, %v703, %v687
    %v708 = vrot.slane %v700, 7
    %v709 = vsel %vm335, %v708, %v698
    %v711 = vsel %vm236, %v704, %v709
    %v712 = vmul.f32 %v711, %v354
    %714 = vrot.lane.b32.xlu0 %v711, 64
    %v715 = vpop.permute.xlu0 %714
    %v717 = vmul.f32 %v711, %v715
    %719 = vrot.lane.b32.xlu0 %v717, 32
    %v720 = vpop.permute.xlu0 %719
    %v722 = vadd.f32 %v712, %v720
    %v723 = vtanh.pop %v722
    %725 = vrot.lane.b32.xlu0 %v723, 64
    %v726 = vpop.permute.xlu0 %725
    %v728 = vmul.f32 %v711, %v726
    %v731 = vunpack.c.l.s4 1966171168
    %v732 = vunpack.c.0.s8 %v731
    %v733 = vlaneseq
    %v734 = vshrl.u32 %v733, 7
    %v735 = vsub.s32 %v732, %v734
    %v736 = vrot.slane %v728, %v735
    %v737 = vcombine.high %v736, %v736
    %v739 = vunpack.c.l.s4 1966171168
    %v740 = vunpack.c.0.s8 %v739
    %v741 = vlaneseq
    %v742 = vshrl.u32 %v741, 7
    %v743 = vsub.s32 %v740, %v742
    %v744 = vrot.slane %v736, %v743
    %v746 = vunpack.c.l.s4 1966171168
    %v747 = vunpack.c.0.s8 %v746
    %v748 = vlaneseq
    %v749 = vshrl.u32 %v748, 7
    %v750 = vsub.s32 %v747, %v749
    %v751 = vrot.slane %v737, %v750
    %v752 = vlaneseq
    %v753 = vshrl.u32 %v752, 7
    %v754 = vsub.s32 0, %v753
    %v755 = vrot.slane %v744, %v754
    %v756 = vlaneseq
    %v757 = vshrl.u32 %v756, 7
    %v758 = vsub.s32 0, %v757
    %v759 = vrot.slane %v751, %v758
    %760 = vrot.lane.b32.xlu0 %v755, 32
    %v761 = vpop.permute.xlu0 %760
    %762 = vrot.lane.b32.xlu0 %v759, 32
    %v763 = vpop.permute.xlu0 %762
    %766 = vst.msk [vmem:[#allocation3 + $0x1] sm:$0x1] %vm398, %v761
    %767 = vst.msk [vmem:[#allocation3 + $0x9] sm:$0x1] %vm398, %v763
    %768 = vrot.lane.b32.xlu0 %v569, 32
    %v769 = vpop.permute.xlu0 %768
    %v770 = vsel %vm148, %v769, 0
    %772 = vmatprep.subr.mxu0 0.0
    %773 = vmatpush1.msra.mxu0 %v138
    %774 = vmatprep.subr.mxu0 0.0
    %775 = vmatpush1.msra.mxu0 %v139
    %776 = vmatprep.subr.mxu0 0.0
    %777 = vmatpush1.msra.mxu0 %v140
    %778 = vmatprep.subr.mxu0 0.0
    %779 = vmatpush1.msra.mxu0 %v141
    %780 = vmatprep.subr.mxu0 0.0
    %781 = vmatpush1.msra.mxu0 0.0
    %782 = vmatprep.subr.mxu0 0.0
    %783 = vmatpush1.msra.mxu0 0.0
    %784 = vmatprep.subr.mxu0 0.0
    %785 = vmatpush1.msra.mxu0 0.0
    %786 = vmatprep.subr.mxu0 0.0
    %787 = vmatpush1.msra.mxu0 0.0
    %788 = vmatprep.subr.mxu0 0.0
    %789 = vmatpush1.msra.mxu0 0.0
    %790 = vmatprep.subr.mxu0 0.0
    %791 = vmatpush1.msra.mxu0 0.0
    %792 = vmatprep.subr.mxu0 0.0
    %793 = vmatpush1.msra.mxu0 0.0
    %794 = vmatprep.subr.mxu0 0.0
    %795 = vmatpush1.msra.mxu0 0.0
    %796 = vmatprep.subr.mxu0 0.0
    %797 = vmatpush1.msra.mxu0 0.0
    %798 = vmatprep.subr.mxu0 0.0
    %799 = vmatpush1.msra.mxu0 0.0
    %800 = vmatprep.subr.mxu0 0.0
    %801 = vmatpush1.msra.mxu0 0.0
    %802 = vmatprep.subr.mxu0 0.0
    %803 = vmatpush1.msra.mxu0 0.0
    %804 = vmatprep.subr.mxu0 0.0
    %805 = vmatpush1.msra.mxu0 0.0
    %806 = vmatprep.subr.mxu0 0.0
    %807 = vmatpush1.msra.mxu0 0.0
    %808 = vmatprep.subr.mxu0 0.0
    %809 = vmatpush1.msra.mxu0 0.0
    %810 = vmatprep.subr.mxu0 0.0
    %811 = vmatpush1.msra.mxu0 0.0
    %812 = vmatprep.subr.mxu0 0.0
    %813 = vmatpush1.msra.mxu0 0.0
    %814 = vmatprep.subr.mxu0 0.0
    %815 = vmatpush1.msra.mxu0 0.0
    %816 = vmatprep.subr.mxu0 0.0
    %817 = vmatpush1.msra.mxu0 0.0
    %818 = vmatprep.subr.mxu0 0.0
    %819 = vmatpush1.msra.mxu0 0.0
    %820 = vmatprep.subr.mxu0 0.0
    %821 = vmatpush1.msra.mxu0 0.0
    %822 = vmatprep.subr.mxu0 0.0
    %823 = vmatpush1.msra.mxu0 0.0
    %824 = vmatprep.subr.mxu0 0.0
    %825 = vmatpush1.msra.mxu0 0.0
    %826 = vmatprep.subr.mxu0 0.0
    %827 = vmatpush1.msra.mxu0 0.0
    %828 = vmatprep.subr.mxu0 0.0
    %829 = vmatpush1.msra.mxu0 0.0
    %830 = vmatprep.subr.mxu0 0.0
    %831 = vmatpush1.msra.mxu0 0.0
    %832 = vmatprep.subr.mxu0 0.0
    %833 = vmatpush1.msra.mxu0 0.0
    %834 = vmatprep.subr.mxu0 0.0
    %835 = vmatpush1.msra.mxu0 0.0
    %836 = vmatprep.mubr.f32.mxu0 0.0
    %837 = vmatmul.mubr.f32.gmra.mrb[0].mxu0 %v770
    %v838 = vpop.f32.mrb[0].mxu0
    %v839 = vadd.f32 0.0, %v838
    %v840 = vpop.f32.mrb[0].mxu0
    %841 = vdwg.mxu0
    %842 = vrot.lane.b32.xlu0 %v728, 32
    %v843 = vpop.permute.xlu0 %842
    %v844 = vsel %vm148, %v843, 0
    %846 = vmatprep.subr.mxu0 0.0
    %847 = vmatpush1.msra.mxu0 %v134
    %848 = vmatprep.subr.mxu0 0.0
    %849 = vmatpush1.msra.mxu0 %v135
    %850 = vmatprep.subr.mxu0 0.0
    %851 = vmatpush1.msra.mxu0 %v136
    %852 = vmatprep.subr.mxu0 0.0
    %853 = vmatpush1.msra.mxu0 %v137
    %854 = vmatprep.subr.mxu0 0.0
    %855 = vmatpush1.msra.mxu0 0.0
    %856 = vmatprep.subr.mxu0 0.0
    %857 = vmatpush1.msra.mxu0 0.0
    %858 = vmatprep.subr.mxu0 0.0
    %859 = vmatpush1.msra.mxu0 0.0
    %860 = vmatprep.subr.mxu0 0.0
    %861 = vmatpush1.msra.mxu0 0.0
    %862 = vmatprep.subr.mxu0 0.0
    %863 = vmatpush1.msra.mxu0 0.0
    %864 = vmatprep.subr.mxu0 0.0
    %865 = vmatpush1.msra.mxu0 0.0
    %866 = vmatprep.subr.mxu0 0.0
    %867 = vmatpush1.msra.mxu0 0.0
    %868 = vmatprep.subr.mxu0 0.0
    %869 = vmatpush1.msra.mxu0 0.0
    %870 = vmatprep.subr.mxu0 0.0
    %871 = vmatpush1.msra.mxu0 0.0
    %872 = vmatprep.subr.mxu0 0.0
    %873 = vmatpush1.msra.mxu0 0.0
    %874 = vmatprep.subr.mxu0 0.0
    %875 = vmatpush1.msra.mxu0 0.0
    %876 = vmatprep.subr.mxu0 0.0
    %877 = vmatpush1.msra.mxu0 0.0
    %878 = vmatprep.subr.mxu0 0.0
    %879 = vmatpush1.msra.mxu0 0.0
    %880 = vmatprep.subr.mxu0 0.0
    %881 = vmatpush1.msra.mxu0 0.0
    %882 = vmatprep.subr.mxu0 0.0
    %883 = vmatpush1.msra.mxu0 0.0
    %884 = vmatprep.subr.mxu0 0.0
    %885 = vmatpush1.msra.mxu0 0.0
    %886 = vmatprep.subr.mxu0 0.0
    %887 = vmatpush1.msra.mxu0 0.0
    %888 = vmatprep.subr.mxu0 0.0
    %889 = vmatpush1.msra.mxu0 0.0
    %890 = vmatprep.subr.mxu0 0.0
    %891 = vmatpush1.msra.mxu0 0.0
    %892 = vmatprep.subr.mxu0 0.0
    %893 = vmatpush1.msra.mxu0 0.0
    %894 = vmatprep.subr.mxu0 0.0
    %895 = vmatpush1.msra.mxu0 0.0
    %896 = vmatprep.subr.mxu0 0.0
    %897 = vmatpush1.msra.mxu0 0.0
    %898 = vmatprep.subr.mxu0 0.0
    %899 = vmatpush1.msra.mxu0 0.0
    %900 = vmatprep.subr.mxu0 0.0
    %901 = vmatpush1.msra.mxu0 0.0
    %902 = vmatprep.subr.mxu0 0.0
    %903 = vmatpush1.msra.mxu0 0.0
    %904 = vmatprep.subr.mxu0 0.0
    %905 = vmatpush1.msra.mxu0 0.0
    %906 = vmatprep.subr.mxu0 0.0
    %907 = vmatpush1.msra.mxu0 0.0
    %908 = vmatprep.subr.mxu0 0.0
    %909 = vmatpush1.msra.mxu0 0.0
    %910 = vmatprep.mubr.f32.mxu0 0.0
    %911 = vmatmul.mubr.f32.gmra.mrb[0].mxu0 %v844
    %v912 = vpop.f32.mrb[0].mxu0
    %v913 = vadd.f32 %v839, %v912
    %v914 = vpop.f32.mrb[0].mxu0
    %915 = vdwg.mxu0
    %v916 = vtanh.pop %v913
    %v917 = vxor.u32 %v913, 2147483648
    %v918 = vmul.f32 %v917, 1.442695
    %v919 = vpow.pop %v918
    %v920 = vadd.f32 %v919, 1.0
    %v921 = vrcp.pop %v920
    %v922 = vmul.f32 1.0, %v921
    %v923 = vsel %vm236, %v916, %v922
    %v924 = vmul.f32 %v923, %v563
    %926 = vrot.lane.b32.xlu0 %v923, 64
    %v927 = vpop.permute.xlu0 %926
    %v929 = vmul.f32 %v923, %v927
    %931 = vrot.lane.b32.xlu0 %v929, 32
    %v932 = vpop.permute.xlu0 %931
    %v934 = vadd.f32 %v924, %v932
    %v935 = vtanh.pop %v934
    %937 = vrot.lane.b32.xlu0 %v935, 64
    %v938 = vpop.permute.xlu0 %937
    %v940 = vmul.f32 %v923, %v938
    %v943 = vunpack.c.l.s4 1966171168
    %v944 = vunpack.c.0.s8 %v943
    %v945 = vlaneseq
    %v946 = vshrl.u32 %v945, 7
    %v947 = vsub.s32 %v944, %v946
    %v948 = vrot.slane %v940, %v947
    %v949 = vcombine.high %v948, %v948
    %v951 = vunpack.c.l.s4 1966171168
    %v952 = vunpack.c.0.s8 %v951
    %v953 = vlaneseq
    %v954 = vshrl.u32 %v953, 7
    %v955 = vsub.s32 %v952, %v954
    %v956 = vrot.slane %v948, %v955
    %v958 = vunpack.c.l.s4 1966171168
    %v959 = vunpack.c.0.s8 %v958
    %v960 = vlaneseq
    %v961 = vshrl.u32 %v960, 7
    %v962 = vsub.s32 %v959, %v961
    %v963 = vrot.slane %v949, %v962
    %v964 = vlaneseq
    %v965 = vshrl.u32 %v964, 7
    %v966 = vsub.s32 0, %v965
    %v967 = vrot.slane %v956, %v966
    %v968 = vlaneseq
    %v969 = vshrl.u32 %v968, 7
    %v970 = vsub.s32 0, %v969
    %v971 = vrot.slane %v963, %v970
    %972 = vrot.lane.b32.xlu0 %v967, 32
    %v973 = vpop.permute.xlu0 %972
    %974 = vrot.lane.b32.xlu0 %v971, 32
    %v975 = vpop.permute.xlu0 %974
    %978 = vst.msk [vmem:[#allocation4 + $0x1] sm:$0x1] %vm398, %v973
    %979 = vst.msk [vmem:[#allocation4 + $0x9] sm:$0x1] %vm398, %v975
    %v980 = vld [vmem:[#allocation2 + $0x2] sm:$0x1]
    %v981 = vld [vmem:[#allocation2 + $0xa] sm:$0x1]
    %982 = vmatprep.subr.mxu0 0.0
    %983 = vmatpush1.msra.mxu0 %v130
    %984 = vmatprep.subr.mxu0 0.0
    %985 = vmatpush1.msra.mxu0 %v131
    %986 = vmatprep.subr.mxu0 0.0
    %987 = vmatpush1.msra.mxu0 %v132
    %988 = vmatprep.subr.mxu0 0.0
    %989 = vmatpush1.msra.mxu0 %v133
    %990 = vmatprep.subr.mxu0 0.0
    %991 = vmatpush1.msra.mxu0 0.0
    %992 = vmatprep.subr.mxu0 0.0
    %993 = vmatpush1.msra.mxu0 0.0
    %994 = vmatprep.subr.mxu0 0.0
    %995 = vmatpush1.msra.mxu0 0.0
    %996 = vmatprep.subr.mxu0 0.0
    %997 = vmatpush1.msra.mxu0 0.0
    %998 = vmatprep.subr.mxu0 0.0
    %999 = vmatpush1.msra.mxu0 0.0
    %1000 = vmatprep.subr.mxu0 0.0
    %1001 = vmatpush1.msra.mxu0 0.0
    %1002 = vmatprep.subr.mxu0 0.0
    %1003 = vmatpush1.msra.mxu0 0.0
    %1004 = vmatprep.subr.mxu0 0.0
    %1005 = vmatpush1.msra.mxu0 0.0
    %1006 = vmatprep.subr.mxu0 0.0
    %1007 = vmatpush1.msra.mxu0 0.0
    %1008 = vmatprep.subr.mxu0 0.0
    %1009 = vmatpush1.msra.mxu0 0.0
    %1010 = vmatprep.subr.mxu0 0.0
    %1011 = vmatpush1.msra.mxu0 0.0
    %1012 = vmatprep.subr.mxu0 0.0
    %1013 = vmatpush1.msra.mxu0 0.0
    %1014 = vmatprep.subr.mxu0 0.0
    %1015 = vmatpush1.msra.mxu0 0.0
    %1016 = vmatprep.subr.mxu0 0.0
    %1017 = vmatpush1.msra.mxu0 0.0
    %1018 = vmatprep.subr.mxu0 0.0
    %1019 = vmatpush1.msra.mxu0 0.0
    %1020 = vmatprep.subr.mxu0 0.0
    %1021 = vmatpush1.msra.mxu0 0.0
    %1022 = vmatprep.subr.mxu0 0.0
    %1023 = vmatpush1.msra.mxu0 0.0
    %1024 = vmatprep.subr.mxu0 0.0
    %1025 = vmatpush1.msra.mxu0 0.0
    %1026 = vmatprep.subr.mxu0 0.0
    %1027 = vmatpush1.msra.mxu0 0.0
    %1028 = vmatprep.subr.mxu0 0.0
    %1029 = vmatpush1.msra.mxu0 0.0
    %1030 = vmatprep.subr.mxu0 0.0
    %1031 = vmatpush1.msra.mxu0 0.0
    %1032 = vmatprep.subr.mxu0 0.0
    %1033 = vmatpush1.msra.mxu0 0.0
    %1034 = vmatprep.subr.mxu0 0.0
    %1035 = vmatpush1.msra.mxu0 0.0
    %1036 = vmatprep.subr.mxu0 0.0
    %1037 = vmatpush1.msra.mxu0 0.0
    %1038 = vmatprep.subr.mxu0 0.0
    %1039 = vmatpush1.msra.mxu0 0.0
    %1040 = vmatprep.subr.mxu0 0.0
    %1041 = vmatpush1.msra.mxu0 0.0
    %1042 = vmatprep.subr.mxu0 0.0
    %1043 = vmatpush1.msra.mxu0 0.0
    %1044 = vmatprep.subr.mxu0 0.0
    %1045 = vmatpush1.msra.mxu0 0.0
    %1046 = vmatprep.mubr.f32.mxu0 0.0
    %1047 = vmatmul.mubr.f32.gmra.mrb[0].mxu0 %v844
    %v1048 = vpop.f32.mrb[0].mxu0
    %v1049 = vadd.f32 0.0, %v1048
    %v1050 = vpop.f32.mrb[0].mxu0
    %1051 = vdwg.mxu0
    %v1053 = vrot.slane %v1049, 1
    %v1056 = vadd.f32 %v980, %v1049
    %v1057 = vadd.f32 %v981, %v1053
    %v1058 = vtanh.pop %v1056
    %v1059 = vtanh.pop %v1057
    %v1060 = vxor.u32 %v1056, 2147483648
    %v1061 = vxor.u32 %v1057, 2147483648
    %v1062 = vmul.f32 %v1060, 1.442695
    %v1063 = vpow.pop %v1062
    %v1064 = vmul.f32 %v1061, 1.442695
    %v1065 = vpow.pop %v1064
    %v1066 = vadd.f32 %v1063, 1.0
    %v1067 = vadd.f32 %v1065, 1.0
    %v1068 = vrcp.pop %v1066
    %v1069 = vmul.f32 1.0, %v1068
    %v1070 = vrcp.pop %v1067
    %v1071 = vmul.f32 1.0, %v1070
    %v1074 = vrot.slane %v1059, 7
    %v1075 = vsel %vm335, %v1074, %v1058
    %v1079 = vrot.slane %v1071, 7
    %v1080 = vsel %vm335, %v1079, %v1069
    %v1082 = vsel %vm236, %v1075, %v1080
    %v1083 = vmul.f32 %v1082, %v722
    %1085 = vrot.lane.b32.xlu0 %v1082, 64
    %v1086 = vpop.permute.xlu0 %1085
    %v1088 = vmul.f32 %v1082, %v1086
    %1090 = vrot.lane.b32.xlu0 %v1088, 32
    %v1091 = vpop.permute.xlu0 %1090
    %v1093 = vadd.f32 %v1083, %v1091
    %v1094 = vtanh.pop %v1093
    %1096 = vrot.lane.b32.xlu0 %v1094, 64
    %v1097 = vpop.permute.xlu0 %1096
    %v1099 = vmul.f32 %v1082, %v1097
    %v1102 = vunpack.c.l.s4 1966171168
    %v1103 = vunpack.c.0.s8 %v1102
    %v1104 = vlaneseq
    %v1105 = vshrl.u32 %v1104, 7
    %v1106 = vsub.s32 %v1103, %v1105
    %v1107 = vrot.slane %v1099, %v1106
    %v1108 = vcombine.high %v1107, %v1107
    %v1110 = vunpack.c.l.s4 1966171168
    %v1111 = vunpack.c.0.s8 %v1110
    %v1112 = vlaneseq
    %v1113 = vshrl.u32 %v1112, 7
    %v1114 = vsub.s32 %v1111, %v1113
    %v1115 = vrot.slane %v1107, %v1114
    %v1117 = vunpack.c.l.s4 1966171168
    %v1118 = vunpack.c.0.s8 %v1117
    %v1119 = vlaneseq
    %v1120 = vshrl.u32 %v1119, 7
    %v1121 = vsub.s32 %v1118, %v1120
    %v1122 = vrot.slane %v1108, %v1121
    %v1123 = vlaneseq
    %v1124 = vshrl.u32 %v1123, 7
    %v1125 = vsub.s32 0, %v1124
    %v1126 = vrot.slane %v1115, %v1125
    %v1127 = vlaneseq
    %v1128 = vshrl.u32 %v1127, 7
    %v1129 = vsub.s32 0, %v1128
    %v1130 = vrot.slane %v1122, %v1129
    %1131 = vrot.lane.b32.xlu0 %v1126, 32
    %v1132 = vpop.permute.xlu0 %1131
    %1133 = vrot.lane.b32.xlu0 %v1130, 32
    %v1134 = vpop.permute.xlu0 %1133
    %1137 = vst.msk [vmem:[#allocation3 + $0x2] sm:$0x1] %vm398, %v1132
    %1138 = vst.msk [vmem:[#allocation3 + $0xa] sm:$0x1] %vm398, %v1134
    %1139 = vrot.lane.b32.xlu0 %v940, 32
    %v1140 = vpop.permute.xlu0 %1139
    %v1141 = vsel %vm148, %v1140, 0
    %1143 = vmatprep.subr.mxu0 0.0
    %1144 = vmatpush1.msra.mxu0 %v138
    %1145 = vmatprep.subr.mxu0 0.0
    %1146 = vmatpush1.msra.mxu0 %v139
    %1147 = vmatprep.subr.mxu0 0.0
    %1148 = vmatpush1.msra.mxu0 %v140
    %1149 = vmatprep.subr.mxu0 0.0
    %1150 = vmatpush1.msra.mxu0 %v141
    %1151 = vmatprep.subr.mxu0 0.0
    %1152 = vmatpush1.msra.mxu0 0.0
    %1153 = vmatprep.subr.mxu0 0.0
    %1154 = vmatpush1.msra.mxu0 0.0
    %1155 = vmatprep.subr.mxu0 0.0
    %1156 = vmatpush1.msra.mxu0 0.0
    %1157 = vmatprep.subr.mxu0 0.0
    %1158 = vmatpush1.msra.mxu0 0.0
    %1159 = vmatprep.subr.mxu0 0.0
    %1160 = vmatpush1.msra.mxu0 0.0
    %1161 = vmatprep.subr.mxu0 0.0
    %1162 = vmatpush1.msra.mxu0 0.0
    %1163 = vmatprep.subr.mxu0 0.0
    %1164 = vmatpush1.msra.mxu0 0.0
    %1165 = vmatprep.subr.mxu0 0.0
    %1166 = vmatpush1.msra.mxu0 0.0
    %1167 = vmatprep.subr.mxu0 0.0
    %1168 = vmatpush1.msra.mxu0 0.0
    %1169 = vmatprep.subr.mxu0 0.0
    %1170 = vmatpush1.msra.mxu0 0.0
    %1171 = vmatprep.subr.mxu0 0.0
    %1172 = vmatpush1.msra.mxu0 0.0
    %1173 = vmatprep.subr.mxu0 0.0
    %1174 = vmatpush1.msra.mxu0 0.0
    %1175 = vmatprep.subr.mxu0 0.0
    %1176 = vmatpush1.msra.mxu0 0.0
    %1177 = vmatprep.subr.mxu0 0.0
    %1178 = vmatpush1.msra.mxu0 0.0
    %1179 = vmatprep.subr.mxu0 0.0
    %1180 = vmatpush1.msra.mxu0 0.0
    %1181 = vmatprep.subr.mxu0 0.0
    %1182 = vmatpush1.msra.mxu0 0.0
    %1183 = vmatprep.subr.mxu0 0.0
    %1184 = vmatpush1.msra.mxu0 0.0
    %1185 = vmatprep.subr.mxu0 0.0
    %1186 = vmatpush1.msra.mxu0 0.0
    %1187 = vmatprep.subr.mxu0 0.0
    %1188 = vmatpush1.msra.mxu0 0.0
    %1189 = vmatprep.subr.mxu0 0.0
    %1190 = vmatpush1.msra.mxu0 0.0
    %1191 = vmatprep.subr.mxu0 0.0
    %1192 = vmatpush1.msra.mxu0 0.0
    %1193 = vmatprep.subr.mxu0 0.0
    %1194 = vmatpush1.msra.mxu0 0.0
    %1195 = vmatprep.subr.mxu0 0.0
    %1196 = vmatpush1.msra.mxu0 0.0
    %1197 = vmatprep.subr.mxu0 0.0
    %1198 = vmatpush1.msra.mxu0 0.0
    %1199 = vmatprep.subr.mxu0 0.0
    %1200 = vmatpush1.msra.mxu0 0.0
    %1201 = vmatprep.subr.mxu0 0.0
    %1202 = vmatpush1.msra.mxu0 0.0
    %1203 = vmatprep.subr.mxu0 0.0
    %1204 = vmatpush1.msra.mxu0 0.0
    %1205 = vmatprep.subr.mxu0 0.0
    %1206 = vmatpush1.msra.mxu0 0.0
    %1207 = vmatprep.mubr.f32.mxu0 0.0
    %1208 = vmatmul.mubr.f32.gmra.mrb[0].mxu0 %v1141
    %v1209 = vpop.f32.mrb[0].mxu0
    %v1210 = vadd.f32 0.0, %v1209
    %v1211 = vpop.f32.mrb[0].mxu0
    %1212 = vdwg.mxu0
    %1213 = vrot.lane.b32.xlu0 %v1099, 32
    %v1214 = vpop.permute.xlu0 %1213
    %v1215 = vsel %vm148, %v1214, 0
    %1217 = vmatprep.subr.mxu0 0.0
    %1218 = vmatpush1.msra.mxu0 %v134
    %1219 = vmatprep.subr.mxu0 0.0
    %1220 = vmatpush1.msra.mxu0 %v135
    %1221 = vmatprep.subr.mxu0 0.0
    %1222 = vmatpush1.msra.mxu0 %v136
    %1223 = vmatprep.subr.mxu0 0.0
    %1224 = vmatpush1.msra.mxu0 %v137
    %1225 = vmatprep.subr.mxu0 0.0
    %1226 = vmatpush1.msra.mxu0 0.0
    %1227 = vmatprep.subr.mxu0 0.0
    %1228 = vmatpush1.msra.mxu0 0.0
    %1229 = vmatprep.subr.mxu0 0.0
    %1230 = vmatpush1.msra.mxu0 0.0
    %1231 = vmatprep.subr.mxu0 0.0
    %1232 = vmatpush1.msra.mxu0 0.0
    %1233 = vmatprep.subr.mxu0 0.0
    %1234 = vmatpush1.msra.mxu0 0.0
    %1235 = vmatprep.subr.mxu0 0.0
    %1236 = vmatpush1.msra.mxu0 0.0
    %1237 = vmatprep.subr.mxu0 0.0
    %1238 = vmatpush1.msra.mxu0 0.0
    %1239 = vmatprep.subr.mxu0 0.0
    %1240 = vmatpush1.msra.mxu0 0.0
    %1241 = vmatprep.subr.mxu0 0.0
    %1242 = vmatpush1.msra.mxu0 0.0
    %1243 = vmatprep.subr.mxu0 0.0
    %1244 = vmatpush1.msra.mxu0 0.0
    %1245 = vmatprep.subr.mxu0 0.0
    %1246 = vmatpush1.msra.mxu0 0.0
    %1247 = vmatprep.subr.mxu0 0.0
    %1248 = vmatpush1.msra.mxu0 0.0
    %1249 = vmatprep.subr.mxu0 0.0
    %1250 = vmatpush1.msra.mxu0 0.0
    %1251 = vmatprep.subr.mxu0 0.0
    %1252 = vmatpush1.msra.mxu0 0.0
    %1253 = vmatprep.subr.mxu0 0.0
    %1254 = vmatpush1.msra.mxu0 0.0
    %1255 = vmatprep.subr.mxu0 0.0
    %1256 = vmatpush1.msra.mxu0 0.0
    %1257 = vmatprep.subr.mxu0 0.0
    %1258 = vmatpush1.msra.mxu0 0.0
    %1259 = vmatprep.subr.mxu0 0.0
    %1260 = vmatpush1.msra.mxu0 0.0
    %1261 = vmatprep.subr.mxu0 0.0
    %1262 = vmatpush1.msra.mxu0 0.0
    %1263 = vmatprep.subr.mxu0 0.0
    %1264 = vmatpush1.msra.mxu0 0.0
    %1265 = vmatprep.subr.mxu0 0.0
    %1266 = vmatpush1.msra.mxu0 0.0
    %1267 = vmatprep.subr.mxu0 0.0
    %1268 = vmatpush1.msra.mxu0 0.0
    %1269 = vmatprep.subr.mxu0 0.0
    %1270 = vmatpush1.msra.mxu0 0.0
    %1271 = vmatprep.subr.mxu0 0.0
    %1272 = vmatpush1.msra.mxu0 0.0
    %1273 = vmatprep.subr.mxu0 0.0
    %1274 = vmatpush1.msra.mxu0 0.0
    %1275 = vmatprep.subr.mxu0 0.0
    %1276 = vmatpush1.msra.mxu0 0.0
    %1277 = vmatprep.subr.mxu0 0.0
    %1278 = vmatpush1.msra.mxu0 0.0
    %1279 = vmatprep.subr.mxu0 0.0
    %1280 = vmatpush1.msra.mxu0 0.0
    %1281 = vmatprep.mubr.f32.mxu0 0.0
    %1282 = vmatmul.mubr.f32.gmra.mrb[0].mxu0 %v1215
    %v1283 = vpop.f32.mrb[0].mxu0
    %v1284 = vadd.f32 %v1210, %v1283
    %v1285 = vpop.f32.mrb[0].mxu0
    %1286 = vdwg.mxu0
    %v1287 = vtanh.pop %v1284
    %v1288 = vxor.u32 %v1284, 2147483648
    %v1289 = vmul.f32 %v1288, 1.442695
    %v1290 = vpow.pop %v1289
    %v1291 = vadd.f32 %v1290, 1.0
    %v1292 = vrcp.pop %v1291
    %v1293 = vmul.f32 1.0, %v1292
    %v1294 = vsel %vm236, %v1287, %v1293
    %v1295 = vmul.f32 %v1294, %v934
    %1297 = vrot.lane.b32.xlu0 %v1294, 64
    %v1298 = vpop.permute.xlu0 %1297
    %v1300 = vmul.f32 %v1294, %v1298
    %1302 = vrot.lane.b32.xlu0 %v1300, 32
    %v1303 = vpop.permute.xlu0 %1302
    %v1305 = vadd.f32 %v1295, %v1303
    %v1306 = vtanh.pop %v1305
    %1308 = vrot.lane.b32.xlu0 %v1306, 64
    %v1309 = vpop.permute.xlu0 %1308
    %v1311 = vmul.f32 %v1294, %v1309
    %v1314 = vunpack.c.l.s4 1966171168
    %v1315 = vunpack.c.0.s8 %v1314
    %v1316 = vlaneseq
    %v1317 = vshrl.u32 %v1316, 7
    %v1318 = vsub.s32 %v1315, %v1317
    %v1319 = vrot.slane %v1311, %v1318
    %v1320 = vcombine.high %v1319, %v1319
    %v1322 = vunpack.c.l.s4 1966171168
    %v1323 = vunpack.c.0.s8 %v1322
    %v1324 = vlaneseq
    %v1325 = vshrl.u32 %v1324, 7
    %v1326 = vsub.s32 %v1323, %v1325
    %v1327 = vrot.slane %v1319, %v1326
    %v1329 = vunpack.c.l.s4 1966171168
    %v1330 = vunpack.c.0.s8 %v1329
    %v1331 = vlaneseq
    %v1332 = vshrl.u32 %v1331, 7
    %v1333 = vsub.s32 %v1330, %v1332
    %v1334 = vrot.slane %v1320, %v1333
    %v1335 = vlaneseq
    %v1336 = vshrl.u32 %v1335, 7
    %v1337 = vsub.s32 0, %v1336
    %v1338 = vrot.slane %v1327, %v1337
    %v1339 = vlaneseq
    %v1340 = vshrl.u32 %v1339, 7
    %v1341 = vsub.s32 0, %v1340
    %v1342 = vrot.slane %v1334, %v1341
    %1343 = vrot.lane.b32.xlu0 %v1338, 32
    %v1344 = vpop.permute.xlu0 %1343
    %1345 = vrot.lane.b32.xlu0 %v1342, 32
    %v1346 = vpop.permute.xlu0 %1345
    %1349 = vst.msk [vmem:[#allocation4 + $0x2] sm:$0x1] %vm398, %v1344
    %1350 = vst.msk [vmem:[#allocation4 + $0xa] sm:$0x1] %vm398, %v1346
    %v1351 = vld [vmem:[#allocation2 + $0x3] sm:$0x1]
    %v1352 = vld [vmem:[#allocation2 + $0xb] sm:$0x1]
    %1353 = vmatprep.subr.mxu0 0.0
    %1354 = vmatpush1.msra.mxu0 %v130
    %1355 = vmatprep.subr.mxu0 0.0
    %1356 = vmatpush1.msra.mxu0 %v131
    %1357 = vmatprep.subr.mxu0 0.0
    %1358 = vmatpush1.msra.mxu0 %v132
    %1359 = vmatprep.subr.mxu0 0.0
    %1360 = vmatpush1.msra.mxu0 %v133
    %1361 = vmatprep.subr.mxu0 0.0
    %1362 = vmatpush1.msra.mxu0 0.0
    %1363 = vmatprep.subr.mxu0 0.0
    %1364 = vmatpush1.msra.mxu0 0.0
    %1365 = vmatprep.subr.mxu0 0.0
    %1366 = vmatpush1.msra.mxu0 0.0
    %1367 = vmatprep.subr.mxu0 0.0
    %1368 = vmatpush1.msra.mxu0 0.0
    %1369 = vmatprep.subr.mxu0 0.0
    %1370 = vmatpush1.msra.mxu0 0.0
    %1371 = vmatprep.subr.mxu0 0.0
    %1372 = vmatpush1.msra.mxu0 0.0
    %1373 = vmatprep.subr.mxu0 0.0
    %1374 = vmatpush1.msra.mxu0 0.0
    %1375 = vmatprep.subr.mxu0 0.0
    %1376 = vmatpush1.msra.mxu0 0.0
    %1377 = vmatprep.subr.mxu0 0.0
    %1378 = vmatpush1.msra.mxu0 0.0
    %1379 = vmatprep.subr.mxu0 0.0
    %1380 = vmatpush1.msra.mxu0 0.0
    %1381 = vmatprep.subr.mxu0 0.0
    %1382 = vmatpush1.msra.mxu0 0.0
    %1383 = vmatprep.subr.mxu0 0.0
    %1384 = vmatpush1.msra.mxu0 0.0
    %1385 = vmatprep.subr.mxu0 0.0
    %1386 = vmatpush1.msra.mxu0 0.0
    %1387 = vmatprep.subr.mxu0 0.0
    %1388 = vmatpush1.msra.mxu0 0.0
    %1389 = vmatprep.subr.mxu0 0.0
    %1390 = vmatpush1.msra.mxu0 0.0
    %1391 = vmatprep.subr.mxu0 0.0
    %1392 = vmatpush1.msra.mxu0 0.0
    %1393 = vmatprep.subr.mxu0 0.0
    %1394 = vmatpush1.msra.mxu0 0.0
    %1395 = vmatprep.subr.mxu0 0.0
    %1396 = vmatpush1.msra.mxu0 0.0
    %1397 = vmatprep.subr.mxu0 0.0
    %1398 = vmatpush1.msra.mxu0 0.0
    %1399 = vmatprep.subr.mxu0 0.0
    %1400 = vmatpush1.msra.mxu0 0.0
    %1401 = vmatprep.subr.mxu0 0.0
    %1402 = vmatpush1.msra.mxu0 0.0
    %1403 = vmatprep.subr.mxu0 0.0
    %1404 = vmatpush1.msra.mxu0 0.0
    %1405 = vmatprep.subr.mxu0 0.0
    %1406 = vmatpush1.msra.mxu0 0.0
    %1407 = vmatprep.subr.mxu0 0.0
    %1408 = vmatpush1.msra.mxu0 0.0
    %1409 = vmatprep.subr.mxu0 0.0
    %1410 = vmatpush1.msra.mxu0 0.0
    %1411 = vmatprep.subr.mxu0 0.0
    %1412 = vmatpush1.msra.mxu0 0.0
    %1413 = vmatprep.subr.mxu0 0.0
    %1414 = vmatpush1.msra.mxu0 0.0
    %1415 = vmatprep.subr.mxu0 0.0
    %1416 = vmatpush1.msra.mxu0 0.0
    %1417 = vmatprep.mubr.f32.mxu0 0.0
    %1418 = vmatmul.mubr.f32.gmra.mrb[0].mxu0 %v1215
    %v1419 = vpop.f32.mrb[0].mxu0
    %v1420 = vadd.f32 0.0, %v1419
    %v1421 = vpop.f32.mrb[0].mxu0
    %1422 = vdwg.mxu0
    %v1424 = vrot.slane %v1420, 1
    %v1427 = vadd.f32 %v1351, %v1420
    %v1428 = vadd.f32 %v1352, %v1424
    %v1429 = vtanh.pop %v1427
    %v1430 = vtanh.pop %v1428
    %v1431 = vxor.u32 %v1427, 2147483648
    %v1432 = vxor.u32 %v1428, 2147483648
    %v1433 = vmul.f32 %v1431, 1.442695
    %v1434 = vpow.pop %v1433
    %v1435 = vmul.f32 %v1432, 1.442695
    %v1436 = vpow.pop %v1435
    %v1437 = vadd.f32 %v1434, 1.0
    %v1438 = vadd.f32 %v1436, 1.0
    %v1439 = vrcp.pop %v1437
    %v1440 = vmul.f32 1.0, %v1439
    %v1441 = vrcp.pop %v1438
    %v1442 = vmul.f32 1.0, %v1441
    %v1445 = vrot.slane %v1430, 7
    %v1446 = vsel %vm335, %v1445, %v1429
    %v1450 = vrot.slane %v1442, 7
    %v1451 = vsel %vm335, %v1450, %v1440
    %v1453 = vsel %vm236, %v1446, %v1451
    %v1454 = vmul.f32 %v1453, %v1093
    %1456 = vrot.lane.b32.xlu0 %v1453, 64
    %v1457 = vpop.permute.xlu0 %1456
    %v1459 = vmul.f32 %v1453, %v1457
    %1461 = vrot.lane.b32.xlu0 %v1459, 32
    %v1462 = vpop.permute.xlu0 %1461
    %v1464 = vadd.f32 %v1454, %v1462
    %v1465 = vtanh.pop %v1464
    %1467 = vrot.lane.b32.xlu0 %v1465, 64
    %v1468 = vpop.permute.xlu0 %1467
    %v1470 = vmul.f32 %v1453, %v1468
    %v1473 = vunpack.c.l.s4 1966171168
    %v1474 = vunpack.c.0.s8 %v1473
    %v1475 = vlaneseq
    %v1476 = vshrl.u32 %v1475, 7
    %v1477 = vsub.s32 %v1474, %v1476
    %v1478 = vrot.slane %v1470, %v1477
    %v1479 = vcombine.high %v1478, %v1478
    %v1481 = vunpack.c.l.s4 1966171168
    %v1482 = vunpack.c.0.s8 %v1481
    %v1483 = vlaneseq
    %v1484 = vshrl.u32 %v1483, 7
    %v1485 = vsub.s32 %v1482, %v1484
    %v1486 = vrot.slane %v1478, %v1485
    %v1488 = vunpack.c.l.s4 1966171168
    %v1489 = vunpack.c.0.s8 %v1488
    %v1490 = vlaneseq
    %v1491 = vshrl.u32 %v1490, 7
    %v1492 = vsub.s32 %v1489, %v1491
    %v1493 = vrot.slane %v1479, %v1492
    %v1494 = vlaneseq
    %v1495 = vshrl.u32 %v1494, 7
    %v1496 = vsub.s32 0, %v1495
    %v1497 = vrot.slane %v1486, %v1496
    %v1498 = vlaneseq
    %v1499 = vshrl.u32 %v1498, 7
    %v1500 = vsub.s32 0, %v1499
    %v1501 = vrot.slane %v1493, %v1500
    %1502 = vrot.lane.b32.xlu0 %v1497, 32
    %v1503 = vpop.permute.xlu0 %1502
    %1504 = vrot.lane.b32.xlu0 %v1501, 32
    %v1505 = vpop.permute.xlu0 %1504
    %1508 = vst.msk [vmem:[#allocation3 + $0x3] sm:$0x1] %vm398, %v1503
    %1509 = vst.msk [vmem:[#allocation3 + $0xb] sm:$0x1] %vm398, %v1505
    %1510 = vrot.lane.b32.xlu0 %v1311, 32
    %v1511 = vpop.permute.xlu0 %1510
    %v1512 = vsel %vm148, %v1511, 0
    %1514 = vmatprep.subr.mxu0 0.0
    %1515 = vmatpush1.msra.mxu0 %v138
    %1516 = vmatprep.subr.mxu0 0.0
    %1517 = vmatpush1.msra.mxu0 %v139
    %1518 = vmatprep.subr.mxu0 0.0
    %1519 = vmatpush1.msra.mxu0 %v140
    %1520 = vmatprep.subr.mxu0 0.0
    %1521 = vmatpush1.msra.mxu0 %v141
    %1522 = vmatprep.subr.mxu0 0.0
    %1523 = vmatpush1.msra.mxu0 0.0
    %1524 = vmatprep.subr.mxu0 0.0
    %1525 = vmatpush1.msra.mxu0 0.0
    %1526 = vmatprep.subr.mxu0 0.0
    %1527 = vmatpush1.msra.mxu0 0.0
    %1528 = vmatprep.subr.mxu0 0.0
    %1529 = vmatpush1.msra.mxu0 0.0
    %1530 = vmatprep.subr.mxu0 0.0
    %1531 = vmatpush1.msra.mxu0 0.0
    %1532 = vmatprep.subr.mxu0 0.0
    %1533 = vmatpush1.msra.mxu0 0.0
    %1534 = vmatprep.subr.mxu0 0.0
    %1535 = vmatpush1.msra.mxu0 0.0
    %1536 = vmatprep.subr.mxu0 0.0
    %1537 = vmatpush1.msra.mxu0 0.0
    %1538 = vmatprep.subr.mxu0 0.0
    %1539 = vmatpush1.msra.mxu0 0.0
    %1540 = vmatprep.subr.mxu0 0.0
    %1541 = vmatpush1.msra.mxu0 0.0
    %1542 = vmatprep.subr.mxu0 0.0
    %1543 = vmatpush1.msra.mxu0 0.0
    %1544 = vmatprep.subr.mxu0 0.0
    %1545 = vmatpush1.msra.mxu0 0.0
    %1546 = vmatprep.subr.mxu0 0.0
    %1547 = vmatpush1.msra.mxu0 0.0
    %1548 = vmatprep.subr.mxu0 0.0
    %1549 = vmatpush1.msra.mxu0 0.0
    %1550 = vmatprep.subr.mxu0 0.0
    %1551 = vmatpush1.msra.mxu0 0.0
    %1552 = vmatprep.subr.mxu0 0.0
    %1553 = vmatpush1.msra.mxu0 0.0
    %1554 = vmatprep.subr.mxu0 0.0
    %1555 = vmatpush1.msra.mxu0 0.0
    %1556 = vmatprep.subr.mxu0 0.0
    %1557 = vmatpush1.msra.mxu0 0.0
    %1558 = vmatprep.subr.mxu0 0.0
    %1559 = vmatpush1.msra.mxu0 0.0
    %1560 = vmatprep.subr.mxu0 0.0
    %1561 = vmatpush1.msra.mxu0 0.0
    %1562 = vmatprep.subr.mxu0 0.0
    %1563 = vmatpush1.msra.mxu0 0.0
    %1564 = vmatprep.subr.mxu0 0.0
    %1565 = vmatpush1.msra.mxu0 0.0
    %1566 = vmatprep.subr.mxu0 0.0
    %1567 = vmatpush1.msra.mxu0 0.0
    %1568 = vmatprep.subr.mxu0 0.0
    %1569 = vmatpush1.msra.mxu0 0.0
    %1570 = vmatprep.subr.mxu0 0.0
    %1571 = vmatpush1.msra.mxu0 0.0
    %1572 = vmatprep.subr.mxu0 0.0
    %1573 = vmatpush1.msra.mxu0 0.0
    %1574 = vmatprep.subr.mxu0 0.0
    %1575 = vmatpush1.msra.mxu0 0.0
    %1576 = vmatprep.subr.mxu0 0.0
    %1577 = vmatpush1.msra.mxu0 0.0
    %1578 = vmatprep.mubr.f32.mxu0 0.0
    %1579 = vmatmul.mubr.f32.gmra.mrb[0].mxu0 %v1512
    %v1580 = vpop.f32.mrb[0].mxu0
    %v1581 = vadd.f32 0.0, %v1580
    %v1582 = vpop.f32.mrb[0].mxu0
    %1583 = vdwg.mxu0
    %1584 = vrot.lane.b32.xlu0 %v1470, 32
    %v1585 = vpop.permute.xlu0 %1584
    %v1586 = vsel %vm148, %v1585, 0
    %1588 = vmatprep.subr.mxu0 0.0
    %1589 = vmatpush1.msra.mxu0 %v134
    %1590 = vmatprep.subr.mxu0 0.0
    %1591 = vmatpush1.msra.mxu0 %v135
    %1592 = vmatprep.subr.mxu0 0.0
    %1593 = vmatpush1.msra.mxu0 %v136
    %1594 = vmatprep.subr.mxu0 0.0
    %1595 = vmatpush1.msra.mxu0 %v137
    %1596 = vmatprep.subr.mxu0 0.0
    %1597 = vmatpush1.msra.mxu0 0.0
    %1598 = vmatprep.subr.mxu0 0.0
    %1599 = vmatpush1.msra.mxu0 0.0
    %1600 = vmatprep.subr.mxu0 0.0
    %1601 = vmatpush1.msra.mxu0 0.0
    %1602 = vmatprep.subr.mxu0 0.0
    %1603 = vmatpush1.msra.mxu0 0.0
    %1604 = vmatprep.subr.mxu0 0.0
    %1605 = vmatpush1.msra.mxu0 0.0
    %1606 = vmatprep.subr.mxu0 0.0
    %1607 = vmatpush1.msra.mxu0 0.0
    %1608 = vmatprep.subr.mxu0 0.0
    %1609 = vmatpush1.msra.mxu0 0.0
    %1610 = vmatprep.subr.mxu0 0.0
    %1611 = vmatpush1.msra.mxu0 0.0
    %1612 = vmatprep.subr.mxu0 0.0
    %1613 = vmatpush1.msra.mxu0 0.0
    %1614 = vmatprep.subr.mxu0 0.0
    %1615 = vmatpush1.msra.mxu0 0.0
    %1616 = vmatprep.subr.mxu0 0.0
    %1617 = vmatpush1.msra.mxu0 0.0
    %1618 = vmatprep.subr.mxu0 0.0
    %1619 = vmatpush1.msra.mxu0 0.0
    %1620 = vmatprep.subr.mxu0 0.0
    %1621 = vmatpush1.msra.mxu0 0.0
    %1622 = vmatprep.subr.mxu0 0.0
    %1623 = vmatpush1.msra.mxu0 0.0
    %1624 = vmatprep.subr.mxu0 0.0
    %1625 = vmatpush1.msra.mxu0 0.0
    %1626 = vmatprep.subr.mxu0 0.0
    %1627 = vmatpush1.msra.mxu0 0.0
    %1628 = vmatprep.subr.mxu0 0.0
    %1629 = vmatpush1.msra.mxu0 0.0
    %1630 = vmatprep.subr.mxu0 0.0
    %1631 = vmatpush1.msra.mxu0 0.0
    %1632 = vmatprep.subr.mxu0 0.0
    %1633 = vmatpush1.msra.mxu0 0.0
    %1634 = vmatprep.subr.mxu0 0.0
    %1635 = vmatpush1.msra.mxu0 0.0
    %1636 = vmatprep.subr.mxu0 0.0
    %1637 = vmatpush1.msra.mxu0 0.0
    %1638 = vmatprep.subr.mxu0 0.0
    %1639 = vmatpush1.msra.mxu0 0.0
    %1640 = vmatprep.subr.mxu0 0.0
    %1641 = vmatpush1.msra.mxu0 0.0
    %1642 = vmatprep.subr.mxu0 0.0
    %1643 = vmatpush1.msra.mxu0 0.0
    %1644 = vmatprep.subr.mxu0 0.0
    %1645 = vmatpush1.msra.mxu0 0.0
    %1646 = vmatprep.subr.mxu0 0.0
    %1647 = vmatpush1.msra.mxu0 0.0
    %1648 = vmatprep.subr.mxu0 0.0
    %1649 = vmatpush1.msra.mxu0 0.0
    %1650 = vmatprep.subr.mxu0 0.0
    %1651 = vmatpush1.msra.mxu0 0.0
    %1652 = vmatprep.mubr.f32.mxu0 0.0
    %1653 = vmatmul.mubr.f32.gmra.mrb[0].mxu0 %v1586
    %v1654 = vpop.f32.mrb[0].mxu0
    %v1655 = vadd.f32 %v1581, %v1654
    %v1656 = vpop.f32.mrb[0].mxu0
    %1657 = vdwg.mxu0
    %v1658 = vtanh.pop %v1655
    %v1659 = vxor.u32 %v1655, 2147483648
    %v1660 = vmul.f32 %v1659, 1.442695
    %v1661 = vpow.pop %v1660
    %v1662 = vadd.f32 %v1661, 1.0
    %v1663 = vrcp.pop %v1662
    %v1664 = vmul.f32 1.0, %v1663
    %v1665 = vsel %vm236, %v1658, %v1664
    %v1666 = vmul.f32 %v1665, %v1305
    %1668 = vrot.lane.b32.xlu0 %v1665, 64
    %v1669 = vpop.permute.xlu0 %1668
    %v1671 = vmul.f32 %v1665, %v1669
    %1673 = vrot.lane.b32.xlu0 %v1671, 32
    %v1674 = vpop.permute.xlu0 %1673
    %v1676 = vadd.f32 %v1666, %v1674
    %v1677 = vtanh.pop %v1676
    %1679 = vrot.lane.b32.xlu0 %v1677, 64
    %v1680 = vpop.permute.xlu0 %1679
    %v1682 = vmul.f32 %v1665, %v1680
    %v1685 = vunpack.c.l.s4 1966171168
    %v1686 = vunpack.c.0.s8 %v1685
    %v1687 = vlaneseq
    %v1688 = vshrl.u32 %v1687, 7
    %v1689 = vsub.s32 %v1686, %v1688
    %v1690 = vrot.slane %v1682, %v1689
    %v1691 = vcombine.high %v1690, %v1690
    %v1693 = vunpack.c.l.s4 1966171168
    %v1694 = vunpack.c.0.s8 %v1693
    %v1695 = vlaneseq
    %v1696 = vshrl.u32 %v1695, 7
    %v1697 = vsub.s32 %v1694, %v1696
    %v1698 = vrot.slane %v1690, %v1697
    %v1700 = vunpack.c.l.s4 1966171168
    %v1701 = vunpack.c.0.s8 %v1700
    %v1702 = vlaneseq
    %v1703 = vshrl.u32 %v1702, 7
    %v1704 = vsub.s32 %v1701, %v1703
    %v1705 = vrot.slane %v1691, %v1704
    %v1706 = vlaneseq
    %v1707 = vshrl.u32 %v1706, 7
    %v1708 = vsub.s32 0, %v1707
    %v1709 = vrot.slane %v1698, %v1708
    %v1710 = vlaneseq
    %v1711 = vshrl.u32 %v1710, 7
    %v1712 = vsub.s32 0, %v1711
    %v1713 = vrot.slane %v1705, %v1712
    %1714 = vrot.lane.b32.xlu0 %v1709, 32
    %v1715 = vpop.permute.xlu0 %1714
    %1716 = vrot.lane.b32.xlu0 %v1713, 32
    %v1717 = vpop.permute.xlu0 %1716
    %1720 = vst.msk [vmem:[#allocation4 + $0x3] sm:$0x1] %vm398, %v1715
    %1721 = vst.msk [vmem:[#allocation4 + $0xb] sm:$0x1] %vm398, %v1717
    %v1722 = vld [vmem:[#allocation2 + $0x4] sm:$0x1]
    %v1723 = vld [vmem:[#allocation2 + $0xc] sm:$0x1]
    %1724 = vmatprep.subr.mxu0 0.0
    %1725 = vmatpush1.msra.mxu0 %v130
    %1726 = vmatprep.subr.mxu0 0.0
    %1727 = vmatpush1.msra.mxu0 %v131
    %1728 = vmatprep.subr.mxu0 0.0
    %1729 = vmatpush1.msra.mxu0 %v132
    %1730 = vmatprep.subr.mxu0 0.0
    %1731 = vmatpush1.msra.mxu0 %v133
    %1732 = vmatprep.subr.mxu0 0.0
    %1733 = vmatpush1.msra.mxu0 0.0
    %1734 = vmatprep.subr.mxu0 0.0
    %1735 = vmatpush1.msra.mxu0 0.0
    %1736 = vmatprep.subr.mxu0 0.0
    %1737 = vmatpush1.msra.mxu0 0.0
    %1738 = vmatprep.subr.mxu0 0.0
    %1739 = vmatpush1.msra.mxu0 0.0
    %1740 = vmatprep.subr.mxu0 0.0
    %1741 = vmatpush1.msra.mxu0 0.0
    %1742 = vmatprep.subr.mxu0 0.0
    %1743 = vmatpush1.msra.mxu0 0.0
    %1744 = vmatprep.subr.mxu0 0.0
    %1745 = vmatpush1.msra.mxu0 0.0
    %1746 = vmatprep.subr.mxu0 0.0
    %1747 = vmatpush1.msra.mxu0 0.0
    %1748 = vmatprep.subr.mxu0 0.0
    %1749 = vmatpush1.msra.mxu0 0.0
    %1750 = vmatprep.subr.mxu0 0.0
    %1751 = vmatpush1.msra.mxu0 0.0
    %1752 = vmatprep.subr.mxu0 0.0
    %1753 = vmatpush1.msra.mxu0 0.0
    %1754 = vmatprep.subr.mxu0 0.0
    %1755 = vmatpush1.msra.mxu0 0.0
    %1756 = vmatprep.subr.mxu0 0.0
    %1757 = vmatpush1.msra.mxu0 0.0
    %1758 = vmatprep.subr.mxu0 0.0
    %1759 = vmatpush1.msra.mxu0 0.0
    %1760 = vmatprep.subr.mxu0 0.0
    %1761 = vmatpush1.msra.mxu0 0.0
    %1762 = vmatprep.subr.mxu0 0.0
    %1763 = vmatpush1.msra.mxu0 0.0
    %1764 = vmatprep.subr.mxu0 0.0
    %1765 = vmatpush1.msra.mxu0 0.0
    %1766 = vmatprep.subr.mxu0 0.0
    %1767 = vmatpush1.msra.mxu0 0.0
    %1768 = vmatprep.subr.mxu0 0.0
    %1769 = vmatpush1.msra.mxu0 0.0
    %1770 = vmatprep.subr.mxu0 0.0
    %1771 = vmatpush1.msra.mxu0 0.0
    %1772 = vmatprep.subr.mxu0 0.0
    %1773 = vmatpush1.msra.mxu0 0.0
    %1774 = vmatprep.subr.mxu0 0.0
    %1775 = vmatpush1.msra.mxu0 0.0
    %1776 = vmatprep.subr.mxu0 0.0
    %1777 = vmatpush1.msra.mxu0 0.0
    %1778 = vmatprep.subr.mxu0 0.0
    %1779 = vmatpush1.msra.mxu0 0.0
    %1780 = vmatprep.subr.mxu0 0.0
    %1781 = vmatpush1.msra.mxu0 0.0
    %1782 = vmatprep.subr.mxu0 0.0
    %1783 = vmatpush1.msra.mxu0 0.0
    %1784 = vmatprep.subr.mxu0 0.0
    %1785 = vmatpush1.msra.mxu0 0.0
    %1786 = vmatprep.subr.mxu0 0.0
    %1787 = vmatpush1.msra.mxu0 0.0
    %1788 = vmatprep.mubr.f32.mxu0 0.0
    %1789 = vmatmul.mubr.f32.gmra.mrb[0].mxu0 %v1586
    %v1790 = vpop.f32.mrb[0].mxu0
    %v1791 = vadd.f32 0.0, %v1790
    %v1792 = vpop.f32.mrb[0].mxu0
    %1793 = vdwg.mxu0
    %v1795 = vrot.slane %v1791, 1
    %v1798 = vadd.f32 %v1722, %v1791
    %v1799 = vadd.f32 %v1723, %v1795
    %v1800 = vtanh.pop %v1798
    %v1801 = vtanh.pop %v1799
    %v1802 = vxor.u32 %v1798, 2147483648
    %v1803 = vxor.u32 %v1799, 2147483648
    %v1804 = vmul.f32 %v1802, 1.442695
    %v1805 = vpow.pop %v1804
    %v1806 = vmul.f32 %v1803, 1.442695
    %v1807 = vpow.pop %v1806
    %v1808 = vadd.f32 %v1805, 1.0
    %v1809 = vadd.f32 %v1807, 1.0
    %v1810 = vrcp.pop %v1808
    %v1811 = vmul.f32 1.0, %v1810
    %v1812 = vrcp.pop %v1809
    %v1813 = vmul.f32 1.0, %v1812
    %v1816 = vrot.slane %v1801, 7
    %v1817 = vsel %vm335, %v1816, %v1800
    %v1821 = vrot.slane %v1813, 7
    %v1822 = vsel %vm335, %v1821, %v1811
    %v1824 = vsel %vm236, %v1817, %v1822
    %v1825 = vmul.f32 %v1824, %v1464
    %1827 = vrot.lane.b32.xlu0 %v1824, 64
    %v1828 = vpop.permute.xlu0 %1827
    %v1830 = vmul.f32 %v1824, %v1828
    %1832 = vrot.lane.b32.xlu0 %v1830, 32
    %v1833 = vpop.permute.xlu0 %1832
    %v1835 = vadd.f32 %v1825, %v1833
    %v1836 = vtanh.pop %v1835
    %1838 = vrot.lane.b32.xlu0 %v1836, 64
    %v1839 = vpop.permute.xlu0 %1838
    %v1841 = vmul.f32 %v1824, %v1839
    %v1844 = vunpack.c.l.s4 1966171168
    %v1845 = vunpack.c.0.s8 %v1844
    %v1846 = vlaneseq
    %v1847 = vshrl.u32 %v1846, 7
    %v1848 = vsub.s32 %v1845, %v1847
    %v1849 = vrot.slane %v1841, %v1848
    %v1850 = vcombine.high %v1849, %v1849
    %v1852 = vunpack.c.l.s4 1966171168
    %v1853 = vunpack.c.0.s8 %v1852
    %v1854 = vlaneseq
    %v1855 = vshrl.u32 %v1854, 7
    %v1856 = vsub.s32 %v1853, %v1855
    %v1857 = vrot.slane %v1849, %v1856
    %v1859 = vunpack.c.l.s4 1966171168
    %v1860 = vunpack.c.0.s8 %v1859
    %v1861 = vlaneseq
    %v1862 = vshrl.u32 %v1861, 7
    %v1863 = vsub.s32 %v1860, %v1862
    %v1864 = vrot.slane %v1850, %v1863
    %v1865 = vlaneseq
    %v1866 = vshrl.u32 %v1865, 7
    %v1867 = vsub.s32 0, %v1866
    %v1868 = vrot.slane %v1857, %v1867
    %v1869 = vlaneseq
    %v1870 = vshrl.u32 %v1869, 7
    %v1871 = vsub.s32 0, %v1870
    %v1872 = vrot.slane %v1864, %v1871
    %1873 = vrot.lane.b32.xlu0 %v1868, 32
    %v1874 = vpop.permute.xlu0 %1873
    %1875 = vrot.lane.b32.xlu0 %v1872, 32
    %v1876 = vpop.permute.xlu0 %1875
    %1879 = vst.msk [vmem:[#allocation3 + $0x4] sm:$0x1] %vm398, %v1874
    %1880 = vst.msk [vmem:[#allocation3 + $0xc] sm:$0x1] %vm398, %v1876
    %1881 = vrot.lane.b32.xlu0 %v1682, 32
    %v1882 = vpop.permute.xlu0 %1881
    %v1883 = vsel %vm148, %v1882, 0
    %1885 = vmatprep.subr.mxu0 0.0
    %1886 = vmatpush1.msra.mxu0 %v138
    %1887 = vmatprep.subr.mxu0 0.0
    %1888 = vmatpush1.msra.mxu0 %v139
    %1889 = vmatprep.subr.mxu0 0.0
    %1890 = vmatpush1.msra.mxu0 %v140
    %1891 = vmatprep.subr.mxu0 0.0
    %1892 = vmatpush1.msra.mxu0 %v141
    %1893 = vmatprep.subr.mxu0 0.0
    %1894 = vmatpush1.msra.mxu0 0.0
    %1895 = vmatprep.subr.mxu0 0.0
    %1896 = vmatpush1.msra.mxu0 0.0
    %1897 = vmatprep.subr.mxu0 0.0
    %1898 = vmatpush1.msra.mxu0 0.0
    %1899 = vmatprep.subr.mxu0 0.0
    %1900 = vmatpush1.msra.mxu0 0.0
    %1901 = vmatprep.subr.mxu0 0.0
    %1902 = vmatpush1.msra.mxu0 0.0
    %1903 = vmatprep.subr.mxu0 0.0
    %1904 = vmatpush1.msra.mxu0 0.0
    %1905 = vmatprep.subr.mxu0 0.0
    %1906 = vmatpush1.msra.mxu0 0.0
    %1907 = vmatprep.subr.mxu0 0.0
    %1908 = vmatpush1.msra.mxu0 0.0
    %1909 = vmatprep.subr.mxu0 0.0
    %1910 = vmatpush1.msra.mxu0 0.0
    %1911 = vmatprep.subr.mxu0 0.0
    %1912 = vmatpush1.msra.mxu0 0.0
    %1913 = vmatprep.subr.mxu0 0.0
    %1914 = vmatpush1.msra.mxu0 0.0
    %1915 = vmatprep.subr.mxu0 0.0
    %1916 = vmatpush1.msra.mxu0 0.0
    %1917 = vmatprep.subr.mxu0 0.0
    %1918 = vmatpush1.msra.mxu0 0.0
    %1919 = vmatprep.subr.mxu0 0.0
    %1920 = vmatpush1.msra.mxu0 0.0
    %1921 = vmatprep.subr.mxu0 0.0
    %1922 = vmatpush1.msra.mxu0 0.0
    %1923 = vmatprep.subr.mxu0 0.0
    %1924 = vmatpush1.msra.mxu0 0.0
    %1925 = vmatprep.subr.mxu0 0.0
    %1926 = vmatpush1.msra.mxu0 0.0
    %1927 = vmatprep.subr.mxu0 0.0
    %1928 = vmatpush1.msra.mxu0 0.0
    %1929 = vmatprep.subr.mxu0 0.0
    %1930 = vmatpush1.msra.mxu0 0.0
    %1931 = vmatprep.subr.mxu0 0.0
    %1932 = vmatpush1.msra.mxu0 0.0
    %1933 = vmatprep.subr.mxu0 0.0
    %1934 = vmatpush1.msra.mxu0 0.0
    %1935 = vmatprep.subr.mxu0 0.0
    %1936 = vmatpush1.msra.mxu0 0.0
    %1937 = vmatprep.subr.mxu0 0.0
    %1938 = vmatpush1.msra.mxu0 0.0
    %1939 = vmatprep.subr.mxu0 0.0
    %1940 = vmatpush1.msra.mxu0 0.0
    %1941 = vmatprep.subr.mxu0 0.0
    %1942 = vmatpush1.msra.mxu0 0.0
    %1943 = vmatprep.subr.mxu0 0.0
    %1944 = vmatpush1.msra.mxu0 0.0
    %1945 = vmatprep.subr.mxu0 0.0
    %1946 = vmatpush1.msra.mxu0 0.0
    %1947 = vmatprep.subr.mxu0 0.0
    %1948 = vmatpush1.msra.mxu0 0.0
    %1949 = vmatprep.mubr.f32.mxu0 0.0
    %1950 = vmatmul.mubr.f32.gmra.mrb[0].mxu0 %v1883
    %v1951 = vpop.f32.mrb[0].mxu0
    %v1952 = vadd.f32 0.0, %v1951
    %v1953 = vpop.f32.mrb[0].mxu0
    %1954 = vdwg.mxu0
    %1955 = vrot.lane.b32.xlu0 %v1841, 32
    %v1956 = vpop.permute.xlu0 %1955
    %v1957 = vsel %vm148, %v1956, 0
    %1959 = vmatprep.subr.mxu0 0.0
    %1960 = vmatpush1.msra.mxu0 %v134
    %1961 = vmatprep.subr.mxu0 0.0
    %1962 = vmatpush1.msra.mxu0 %v135
    %1963 = vmatprep.subr.mxu0 0.0
    %1964 = vmatpush1.msra.mxu0 %v136
    %1965 = vmatprep.subr.mxu0 0.0
    %1966 = vmatpush1.msra.mxu0 %v137
    %1967 = vmatprep.subr.mxu0 0.0
    %1968 = vmatpush1.msra.mxu0 0.0
    %1969 = vmatprep.subr.mxu0 0.0
    %1970 = vmatpush1.msra.mxu0 0.0
    %1971 = vmatprep.subr.mxu0 0.0
    %1972 = vmatpush1.msra.mxu0 0.0
    %1973 = vmatprep.subr.mxu0 0.0
    %1974 = vmatpush1.msra.mxu0 0.0
    %1975 = vmatprep.subr.mxu0 0.0
    %1976 = vmatpush1.msra.mxu0 0.0
    %1977 = vmatprep.subr.mxu0 0.0
    %1978 = vmatpush1.msra.mxu0 0.0
    %1979 = vmatprep.subr.mxu0 0.0
    %1980 = vmatpush1.msra.mxu0 0.0
    %1981 = vmatprep.subr.mxu0 0.0
    %1982 = vmatpush1.msra.mxu0 0.0
    %1983 = vmatprep.subr.mxu0 0.0
    %1984 = vmatpush1.msra.mxu0 0.0
    %1985 = vmatprep.subr.mxu0 0.0
    %1986 = vmatpush1.msra.mxu0 0.0
    %1987 = vmatprep.subr.mxu0 0.0
    %1988 = vmatpush1.msra.mxu0 0.0
    %1989 = vmatprep.subr.mxu0 0.0
    %1990 = vmatpush1.msra.mxu0 0.0
    %1991 = vmatprep.subr.mxu0 0.0
    %1992 = vmatpush1.msra.mxu0 0.0
    %1993 = vmatprep.subr.mxu0 0.0
    %1994 = vmatpush1.msra.mxu0 0.0
    %1995 = vmatprep.subr.mxu0 0.0
    %1996 = vmatpush1.msra.mxu0 0.0
    %1997 = vmatprep.subr.mxu0 0.0
    %1998 = vmatpush1.msra.mxu0 0.0
    %1999 = vmatprep.subr.mxu0 0.0
    %2000 = vmatpush1.msra.mxu0 0.0
    %2001 = vmatprep.subr.mxu0 0.0
    %2002 = vmatpush1.msra.mxu0 0.0
    %2003 = vmatprep.subr.mxu0 0.0
    %2004 = vmatpush1.msra.mxu0 0.0
    %2005 = vmatprep.subr.mxu0 0.0
    %2006 = vmatpush1.msra.mxu0 0.0
    %2007 = vmatprep.subr.mxu0 0.0
    %2008 = vmatpush1.msra.mxu0 0.0
    %2009 = vmatprep.subr.mxu0 0.0
    %2010 = vmatpush1.msra.mxu0 0.0
    %2011 = vmatprep.subr.mxu0 0.0
    %2012 = vmatpush1.msra.mxu0 0.0
    %2013 = vmatprep.subr.mxu0 0.0
    %2014 = vmatpush1.msra.mxu0 0.0
    %2015 = vmatprep.subr.mxu0 0.0
    %2016 = vmatpush1.msra.mxu0 0.0
    %2017 = vmatprep.subr.mxu0 0.0
    %2018 = vmatpush1.msra.mxu0 0.0
    %2019 = vmatprep.subr.mxu0 0.0
    %2020 = vmatpush1.msra.mxu0 0.0
    %2021 = vmatprep.subr.mxu0 0.0
    %2022 = vmatpush1.msra.mxu0 0.0
    %2023 = vmatprep.mubr.f32.mxu0 0.0
    %2024 = vmatmul.mubr.f32.gmra.mrb[0].mxu0 %v1957
    %v2025 = vpop.f32.mrb[0].mxu0
    %v2026 = vadd.f32 %v1952, %v2025
    %v2027 = vpop.f32.mrb[0].mxu0
    %2028 = vdwg.mxu0
    %v2029 = vtanh.pop %v2026
    %v2030 = vxor.u32 %v2026, 2147483648
    %v2031 = vmul.f32 %v2030, 1.442695
    %v2032 = vpow.pop %v2031
    %v2033 = vadd.f32 %v2032, 1.0
    %v2034 = vrcp.pop %v2033
    %v2035 = vmul.f32 1.0, %v2034
    %v2036 = vsel %vm236, %v2029, %v2035
    %v2037 = vmul.f32 %v2036, %v1676
    %2039 = vrot.lane.b32.xlu0 %v2036, 64
    %v2040 = vpop.permute.xlu0 %2039
    %v2042 = vmul.f32 %v2036, %v2040
    %2044 = vrot.lane.b32.xlu0 %v2042, 32
    %v2045 = vpop.permute.xlu0 %2044
    %v2047 = vadd.f32 %v2037, %v2045
    %v2048 = vtanh.pop %v2047
    %2050 = vrot.lane.b32.xlu0 %v2048, 64
    %v2051 = vpop.permute.xlu0 %2050
    %v2053 = vmul.f32 %v2036, %v2051
    %v2056 = vunpack.c.l.s4 1966171168
    %v2057 = vunpack.c.0.s8 %v2056
    %v2058 = vlaneseq
    %v2059 = vshrl.u32 %v2058, 7
    %v2060 = vsub.s32 %v2057, %v2059
    %v2061 = vrot.slane %v2053, %v2060
    %v2062 = vcombine.high %v2061, %v2061
    %v2064 = vunpack.c.l.s4 1966171168
    %v2065 = vunpack.c.0.s8 %v2064
    %v2066 = vlaneseq
    %v2067 = vshrl.u32 %v2066, 7
    %v2068 = vsub.s32 %v2065, %v2067
    %v2069 = vrot.slane %v2061, %v2068
    %v2071 = vunpack.c.l.s4 1966171168
    %v2072 = vunpack.c.0.s8 %v2071
    %v2073 = vlaneseq
    %v2074 = vshrl.u32 %v2073, 7
    %v2075 = vsub.s32 %v2072, %v2074
    %v2076 = vrot.slane %v2062, %v2075
    %v2077 = vlaneseq
    %v2078 = vshrl.u32 %v2077, 7
    %v2079 = vsub.s32 0, %v2078
    %v2080 = vrot.slane %v2069, %v2079
    %v2081 = vlaneseq
    %v2082 = vshrl.u32 %v2081, 7
    %v2083 = vsub.s32 0, %v2082
    %v2084 = vrot.slane %v2076, %v2083
    %2085 = vrot.lane.b32.xlu0 %v2080, 32
    %v2086 = vpop.permute.xlu0 %2085
    %2087 = vrot.lane.b32.xlu0 %v2084, 32
    %v2088 = vpop.permute.xlu0 %2087
    %2091 = vst.msk [vmem:[#allocation4 + $0x4] sm:$0x1] %vm398, %v2086
    %2092 = vst.msk [vmem:[#allocation4 + $0xc] sm:$0x1] %vm398, %v2088
    %v2093 = vld [vmem:[#allocation2 + $0x5] sm:$0x1]
    %v2094 = vld [vmem:[#allocation2 + $0xd] sm:$0x1]
    %2095 = vmatprep.subr.mxu0 0.0
    %2096 = vmatpush1.msra.mxu0 %v130
    %2097 = vmatprep.subr.mxu0 0.0
    %2098 = vmatpush1.msra.mxu0 %v131
    %2099 = vmatprep.subr.mxu0 0.0
    %2100 = vmatpush1.msra.mxu0 %v132
    %2101 = vmatprep.subr.mxu0 0.0
    %2102 = vmatpush1.msra.mxu0 %v133
    %2103 = vmatprep.subr.mxu0 0.0
    %2104 = vmatpush1.msra.mxu0 0.0
    %2105 = vmatprep.subr.mxu0 0.0
    %2106 = vmatpush1.msra.mxu0 0.0
    %2107 = vmatprep.subr.mxu0 0.0
    %2108 = vmatpush1.msra.mxu0 0.0
    %2109 = vmatprep.subr.mxu0 0.0
    %2110 = vmatpush1.msra.mxu0 0.0
    %2111 = vmatprep.subr.mxu0 0.0
    %2112 = vmatpush1.msra.mxu0 0.0
    %2113 = vmatprep.subr.mxu0 0.0
    %2114 = vmatpush1.msra.mxu0 0.0
    %2115 = vmatprep.subr.mxu0 0.0
    %2116 = vmatpush1.msra.mxu0 0.0
    %2117 = vmatprep.subr.mxu0 0.0
    %2118 = vmatpush1.msra.mxu0 0.0
    %2119 = vmatprep.subr.mxu0 0.0
    %2120 = vmatpush1.msra.mxu0 0.0
    %2121 = vmatprep.subr.mxu0 0.0
    %2122 = vmatpush1.msra.mxu0 0.0
    %2123 = vmatprep.subr.mxu0 0.0
    %2124 = vmatpush1.msra.mxu0 0.0
    %2125 = vmatprep.subr.mxu0 0.0
    %2126 = vmatpush1.msra.mxu0 0.0
    %2127 = vmatprep.subr.mxu0 0.0
    %2128 = vmatpush1.msra.mxu0 0.0
    %2129 = vmatprep.subr.mxu0 0.0
    %2130 = vmatpush1.msra.mxu0 0.0
    %2131 = vmatprep.subr.mxu0 0.0
    %2132 = vmatpush1.msra.mxu0 0.0
    %2133 = vmatprep.subr.mxu0 0.0
    %2134 = vmatpush1.msra.mxu0 0.0
    %2135 = vmatprep.subr.mxu0 0.0
    %2136 = vmatpush1.msra.mxu0 0.0
    %2137 = vmatprep.subr.mxu0 0.0
    %2138 = vmatpush1.msra.mxu0 0.0
    %2139 = vmatprep.subr.mxu0 0.0
    %2140 = vmatpush1.msra.mxu0 0.0
    %2141 = vmatprep.subr.mxu0 0.0
    %2142 = vmatpush1.msra.mxu0 0.0
    %2143 = vmatprep.subr.mxu0 0.0
    %2144 = vmatpush1.msra.mxu0 0.0
    %2145 = vmatprep.subr.mxu0 0.0
    %2146 = vmatpush1.msra.mxu0 0.0
    %2147 = vmatprep.subr.mxu0 0.0
    %2148 = vmatpush1.msra.mxu0 0.0
    %2149 = vmatprep.subr.mxu0 0.0
    %2150 = vmatpush1.msra.mxu0 0.0
    %2151 = vmatprep.subr.mxu0 0.0
    %2152 = vmatpush1.msra.mxu0 0.0
    %2153 = vmatprep.subr.mxu0 0.0
    %2154 = vmatpush1.msra.mxu0 0.0
    %2155 = vmatprep.subr.mxu0 0.0
    %2156 = vmatpush1.msra.mxu0 0.0
    %2157 = vmatprep.subr.mxu0 0.0
    %2158 = vmatpush1.msra.mxu0 0.0
    %2159 = vmatprep.mubr.f32.mxu0 0.0
    %2160 = vmatmul.mubr.f32.gmra.mrb[0].mxu0 %v1957
    %v2161 = vpop.f32.mrb[0].mxu0
    %v2162 = vadd.f32 0.0, %v2161
    %v2163 = vpop.f32.mrb[0].mxu0
    %2164 = vdwg.mxu0
    %v2166 = vrot.slane %v2162, 1
    %v2169 = vadd.f32 %v2093, %v2162
    %v2170 = vadd.f32 %v2094, %v2166
    %v2171 = vtanh.pop %v2169
    %v2172 = vtanh.pop %v2170
    %v2173 = vxor.u32 %v2169, 2147483648
    %v2174 = vxor.u32 %v2170, 2147483648
    %v2175 = vmul.f32 %v2173, 1.442695
    %v2176 = vpow.pop %v2175
    %v2177 = vmul.f32 %v2174, 1.442695
    %v2178 = vpow.pop %v2177
    %v2179 = vadd.f32 %v2176, 1.0
    %v2180 = vadd.f32 %v2178, 1.0
    %v2181 = vrcp.pop %v2179
    %v2182 = vmul.f32 1.0, %v2181
    %v2183 = vrcp.pop %v2180
    %v2184 = vmul.f32 1.0, %v2183
    %v2187 = vrot.slane %v2172, 7
    %v2188 = vsel %vm335, %v2187, %v2171
    %v2192 = vrot.slane %v2184, 7
    %v2193 = vsel %vm335, %v2192, %v2182
    %v2195 = vsel %vm236, %v2188, %v2193
    %v2196 = vmul.f32 %v2195, %v1835
    %2198 = vrot.lane.b32.xlu0 %v2195, 64
    %v2199 = vpop.permute.xlu0 %2198
    %v2201 = vmul.f32 %v2195, %v2199
    %2203 = vrot.lane.b32.xlu0 %v2201, 32
    %v2204 = vpop.permute.xlu0 %2203
    %v2206 = vadd.f32 %v2196, %v2204
    %v2207 = vtanh.pop %v2206
    %2209 = vrot.lane.b32.xlu0 %v2207, 64
    %v2210 = vpop.permute.xlu0 %2209
    %v2212 = vmul.f32 %v2195, %v2210
    %v2215 = vunpack.c.l.s4 1966171168
    %v2216 = vunpack.c.0.s8 %v2215
    %v2217 = vlaneseq
    %v2218 = vshrl.u32 %v2217, 7
    %v2219 = vsub.s32 %v2216, %v2218
    %v2220 = vrot.slane %v2212, %v2219
    %v2221 = vcombine.high %v2220, %v2220
    %v2223 = vunpack.c.l.s4 1966171168
    %v2224 = vunpack.c.0.s8 %v2223
    %v2225 = vlaneseq
    %v2226 = vshrl.u32 %v2225, 7
    %v2227 = vsub.s32 %v2224, %v2226
    %v2228 = vrot.slane %v2220, %v2227
    %v2230 = vunpack.c.l.s4 1966171168
    %v2231 = vunpack.c.0.s8 %v2230
    %v2232 = vlaneseq
    %v2233 = vshrl.u32 %v2232, 7
    %v2234 = vsub.s32 %v2231, %v2233
    %v2235 = vrot.slane %v2221, %v2234
    %v2236 = vlaneseq
    %v2237 = vshrl.u32 %v2236, 7
    %v2238 = vsub.s32 0, %v2237
    %v2239 = vrot.slane %v2228, %v2238
    %v2240 = vlaneseq
    %v2241 = vshrl.u32 %v2240, 7
    %v2242 = vsub.s32 0, %v2241
    %v2243 = vrot.slane %v2235, %v2242
    %2244 = vrot.lane.b32.xlu0 %v2239, 32
    %v2245 = vpop.permute.xlu0 %2244
    %2246 = vrot.lane.b32.xlu0 %v2243, 32
    %v2247 = vpop.permute.xlu0 %2246
    %2250 = vst.msk [vmem:[#allocation3 + $0x5] sm:$0x1] %vm398, %v2245
    %2251 = vst.msk [vmem:[#allocation3 + $0xd] sm:$0x1] %vm398, %v2247
    %2252 = vrot.lane.b32.xlu0 %v2053, 32
    %v2253 = vpop.permute.xlu0 %2252
    %v2254 = vsel %vm148, %v2253, 0
    %2256 = vmatprep.subr.mxu0 0.0
    %2257 = vmatpush1.msra.mxu0 %v138
    %2258 = vmatprep.subr.mxu0 0.0
    %2259 = vmatpush1.msra.mxu0 %v139
    %2260 = vmatprep.subr.mxu0 0.0
    %2261 = vmatpush1.msra.mxu0 %v140
    %2262 = vmatprep.subr.mxu0 0.0
    %2263 = vmatpush1.msra.mxu0 %v141
    %2264 = vmatprep.subr.mxu0 0.0
    %2265 = vmatpush1.msra.mxu0 0.0
    %2266 = vmatprep.subr.mxu0 0.0
    %2267 = vmatpush1.msra.mxu0 0.0
    %2268 = vmatprep.subr.mxu0 0.0
    %2269 = vmatpush1.msra.mxu0 0.0
    %2270 = vmatprep.subr.mxu0 0.0
    %2271 = vmatpush1.msra.mxu0 0.0
    %2272 = vmatprep.subr.mxu0 0.0
    %2273 = vmatpush1.msra.mxu0 0.0
    %2274 = vmatprep.subr.mxu0 0.0
    %2275 = vmatpush1.msra.mxu0 0.0
    %2276 = vmatprep.subr.mxu0 0.0
    %2277 = vmatpush1.msra.mxu0 0.0
    %2278 = vmatprep.subr.mxu0 0.0
    %2279 = vmatpush1.msra.mxu0 0.0
    %2280 = vmatprep.subr.mxu0 0.0
    %2281 = vmatpush1.msra.mxu0 0.0
    %2282 = vmatprep.subr.mxu0 0.0
    %2283 = vmatpush1.msra.mxu0 0.0
    %2284 = vmatprep.subr.mxu0 0.0
    %2285 = vmatpush1.msra.mxu0 0.0
    %2286 = vmatprep.subr.mxu0 0.0
    %2287 = vmatpush1.msra.mxu0 0.0
    %2288 = vmatprep.subr.mxu0 0.0
    %2289 = vmatpush1.msra.mxu0 0.0
    %2290 = vmatprep.subr.mxu0 0.0
    %2291 = vmatpush1.msra.mxu0 0.0
    %2292 = vmatprep.subr.mxu0 0.0
    %2293 = vmatpush1.msra.mxu0 0.0
    %2294 = vmatprep.subr.mxu0 0.0
    %2295 = vmatpush1.msra.mxu0 0.0
    %2296 = vmatprep.subr.mxu0 0.0
    %2297 = vmatpush1.msra.mxu0 0.0
    %2298 = vmatprep.subr.mxu0 0.0
    %2299 = vmatpush1.msra.mxu0 0.0
    %2300 = vmatprep.subr.mxu0 0.0
    %2301 = vmatpush1.msra.mxu0 0.0
    %2302 = vmatprep.subr.mxu0 0.0
    %2303 = vmatpush1.msra.mxu0 0.0
    %2304 = vmatprep.subr.mxu0 0.0
    %2305 = vmatpush1.msra.mxu0 0.0
    %2306 = vmatprep.subr.mxu0 0.0
    %2307 = vmatpush1.msra.mxu0 0.0
    %2308 = vmatprep.subr.mxu0 0.0
    %2309 = vmatpush1.msra.mxu0 0.0
    %2310 = vmatprep.subr.mxu0 0.0
    %2311 = vmatpush1.msra.mxu0 0.0
    %2312 = vmatprep.subr.mxu0 0.0
    %2313 = vmatpush1.msra.mxu0 0.0
    %2314 = vmatprep.subr.mxu0 0.0
    %2315 = vmatpush1.msra.mxu0 0.0
    %2316 = vmatprep.subr.mxu0 0.0
    %2317 = vmatpush1.msra.mxu0 0.0
    %2318 = vmatprep.subr.mxu0 0.0
    %2319 = vmatpush1.msra.mxu0 0.0
    %2320 = vmatprep.mubr.f32.mxu0 0.0
    %2321 = vmatmul.mubr.f32.gmra.mrb[0].mxu0 %v2254
    %v2322 = vpop.f32.mrb[0].mxu0
    %v2323 = vadd.f32 0.0, %v2322
    %v2324 = vpop.f32.mrb[0].mxu0
    %2325 = vdwg.mxu0
    %2326 = vrot.lane.b32.xlu0 %v2212, 32
    %v2327 = vpop.permute.xlu0 %2326
    %v2328 = vsel %vm148, %v2327, 0
    %2330 = vmatprep.subr.mxu0 0.0
    %2331 = vmatpush1.msra.mxu0 %v134
    %2332 = vmatprep.subr.mxu0 0.0
    %2333 = vmatpush1.msra.mxu0 %v135
    %2334 = vmatprep.subr.mxu0 0.0
    %2335 = vmatpush1.msra.mxu0 %v136
    %2336 = vmatprep.subr.mxu0 0.0
    %2337 = vmatpush1.msra.mxu0 %v137
    %2338 = vmatprep.subr.mxu0 0.0
    %2339 = vmatpush1.msra.mxu0 0.0
    %2340 = vmatprep.subr.mxu0 0.0
    %2341 = vmatpush1.msra.mxu0 0.0
    %2342 = vmatprep.subr.mxu0 0.0
    %2343 = vmatpush1.msra.mxu0 0.0
    %2344 = vmatprep.subr.mxu0 0.0
    %2345 = vmatpush1.msra.mxu0 0.0
    %2346 = vmatprep.subr.mxu0 0.0
    %2347 = vmatpush1.msra.mxu0 0.0
    %2348 = vmatprep.subr.mxu0 0.0
    %2349 = vmatpush1.msra.mxu0 0.0
    %2350 = vmatprep.subr.mxu0 0.0
    %2351 = vmatpush1.msra.mxu0 0.0
    %2352 = vmatprep.subr.mxu0 0.0
    %2353 = vmatpush1.msra.mxu0 0.0
    %2354 = vmatprep.subr.mxu0 0.0
    %2355 = vmatpush1.msra.mxu0 0.0
    %2356 = vmatprep.subr.mxu0 0.0
    %2357 = vmatpush1.msra.mxu0 0.0
    %2358 = vmatprep.subr.mxu0 0.0
    %2359 = vmatpush1.msra.mxu0 0.0
    %2360 = vmatprep.subr.mxu0 0.0
    %2361 = vmatpush1.msra.mxu0 0.0
    %2362 = vmatprep.subr.mxu0 0.0
    %2363 = vmatpush1.msra.mxu0 0.0
    %2364 = vmatprep.subr.mxu0 0.0
    %2365 = vmatpush1.msra.mxu0 0.0
    %2366 = vmatprep.subr.mxu0 0.0
    %2367 = vmatpush1.msra.mxu0 0.0
    %2368 = vmatprep.subr.mxu0 0.0
    %2369 = vmatpush1.msra.mxu0 0.0
    %2370 = vmatprep.subr.mxu0 0.0
    %2371 = vmatpush1.msra.mxu0 0.0
    %2372 = vmatprep.subr.mxu0 0.0
    %2373 = vmatpush1.msra.mxu0 0.0
    %2374 = vmatprep.subr.mxu0 0.0
    %2375 = vmatpush1.msra.mxu0 0.0
    %2376 = vmatprep.subr.mxu0 0.0
    %2377 = vmatpush1.msra.mxu0 0.0
    %2378 = vmatprep.subr.mxu0 0.0
    %2379 = vmatpush1.msra.mxu0 0.0
    %2380 = vmatprep.subr.mxu0 0.0
    %2381 = vmatpush1.msra.mxu0 0.0
    %2382 = vmatprep.subr.mxu0 0.0
    %2383 = vmatpush1.msra.mxu0 0.0
    %2384 = vmatprep.subr.mxu0 0.0
    %2385 = vmatpush1.msra.mxu0 0.0
    %2386 = vmatprep.subr.mxu0 0.0
    %2387 = vmatpush1.msra.mxu0 0.0
    %2388 = vmatprep.subr.mxu0 0.0
    %2389 = vmatpush1.msra.mxu0 0.0
    %2390 = vmatprep.subr.mxu0 0.0
    %2391 = vmatpush1.msra.mxu0 0.0
    %2392 = vmatprep.subr.mxu0 0.0
    %2393 = vmatpush1.msra.mxu0 0.0
    %2394 = vmatprep.mubr.f32.mxu0 0.0
    %2395 = vmatmul.mubr.f32.gmra.mrb[0].mxu0 %v2328
    %v2396 = vpop.f32.mrb[0].mxu0
    %v2397 = vadd.f32 %v2323, %v2396
    %v2398 = vpop.f32.mrb[0].mxu0
    %2399 = vdwg.mxu0
    %v2400 = vtanh.pop %v2397
    %v2401 = vxor.u32 %v2397, 2147483648
    %v2402 = vmul.f32 %v2401, 1.442695
    %v2403 = vpow.pop %v2402
    %v2404 = vadd.f32 %v2403, 1.0
    %v2405 = vrcp.pop %v2404
    %v2406 = vmul.f32 1.0, %v2405
    %v2407 = vsel %vm236, %v2400, %v2406
    %v2408 = vmul.f32 %v2407, %v2047
    %2410 = vrot.lane.b32.xlu0 %v2407, 64
    %v2411 = vpop.permute.xlu0 %2410
    %v2413 = vmul.f32 %v2407, %v2411
    %2415 = vrot.lane.b32.xlu0 %v2413, 32
    %v2416 = vpop.permute.xlu0 %2415
    %v2418 = vadd.f32 %v2408, %v2416
    %v2419 = vtanh.pop %v2418
    %2421 = vrot.lane.b32.xlu0 %v2419, 64
    %v2422 = vpop.permute.xlu0 %2421
    %v2424 = vmul.f32 %v2407, %v2422
    %v2427 = vunpack.c.l.s4 1966171168
    %v2428 = vunpack.c.0.s8 %v2427
    %v2429 = vlaneseq
    %v2430 = vshrl.u32 %v2429, 7
    %v2431 = vsub.s32 %v2428, %v2430
    %v2432 = vrot.slane %v2424, %v2431
    %v2433 = vcombine.high %v2432, %v2432
    %v2435 = vunpack.c.l.s4 1966171168
    %v2436 = vunpack.c.0.s8 %v2435
    %v2437 = vlaneseq
    %v2438 = vshrl.u32 %v2437, 7
    %v2439 = vsub.s32 %v2436, %v2438
    %v2440 = vrot.slane %v2432, %v2439
    %v2442 = vunpack.c.l.s4 1966171168
    %v2443 = vunpack.c.0.s8 %v2442
    %v2444 = vlaneseq
    %v2445 = vshrl.u32 %v2444, 7
    %v2446 = vsub.s32 %v2443, %v2445
    %v2447 = vrot.slane %v2433, %v2446
    %v2448 = vlaneseq
    %v2449 = vshrl.u32 %v2448, 7
    %v2450 = vsub.s32 0, %v2449
    %v2451 = vrot.slane %v2440, %v2450
    %v2452 = vlaneseq
    %v2453 = vshrl.u32 %v2452, 7
    %v2454 = vsub.s32 0, %v2453
    %v2455 = vrot.slane %v2447, %v2454
    %2456 = vrot.lane.b32.xlu0 %v2451, 32
    %v2457 = vpop.permute.xlu0 %2456
    %2458 = vrot.lane.b32.xlu0 %v2455, 32
    %v2459 = vpop.permute.xlu0 %2458
    %2462 = vst.msk [vmem:[#allocation4 + $0x5] sm:$0x1] %vm398, %v2457
    %2463 = vst.msk [vmem:[#allocation4 + $0xd] sm:$0x1] %vm398, %v2459
    %v2464 = vld [vmem:[#allocation2 + $0x6] sm:$0x1]
    %v2465 = vld [vmem:[#allocation2 + $0xe] sm:$0x1]
    %2466 = vmatprep.subr.mxu0 0.0
    %2467 = vmatpush1.msra.mxu0 %v130
    %2468 = vmatprep.subr.mxu0 0.0
    %2469 = vmatpush1.msra.mxu0 %v131
    %2470 = vmatprep.subr.mxu0 0.0
    %2471 = vmatpush1.msra.mxu0 %v132
    %2472 = vmatprep.subr.mxu0 0.0
    %2473 = vmatpush1.msra.mxu0 %v133
    %2474 = vmatprep.subr.mxu0 0.0
    %2475 = vmatpush1.msra.mxu0 0.0
    %2476 = vmatprep.subr.mxu0 0.0
    %2477 = vmatpush1.msra.mxu0 0.0
    %2478 = vmatprep.subr.mxu0 0.0
    %2479 = vmatpush1.msra.mxu0 0.0
    %2480 = vmatprep.subr.mxu0 0.0
    %2481 = vmatpush1.msra.mxu0 0.0
    %2482 = vmatprep.subr.mxu0 0.0
    %2483 = vmatpush1.msra.mxu0 0.0
    %2484 = vmatprep.subr.mxu0 0.0
    %2485 = vmatpush1.msra.mxu0 0.0
    %2486 = vmatprep.subr.mxu0 0.0
    %2487 = vmatpush1.msra.mxu0 0.0
    %2488 = vmatprep.subr.mxu0 0.0
    %2489 = vmatpush1.msra.mxu0 0.0
    %2490 = vmatprep.subr.mxu0 0.0
    %2491 = vmatpush1.msra.mxu0 0.0
    %2492 = vmatprep.subr.mxu0 0.0
    %2493 = vmatpush1.msra.mxu0 0.0
    %2494 = vmatprep.subr.mxu0 0.0
    %2495 = vmatpush1.msra.mxu0 0.0
    %2496 = vmatprep.subr.mxu0 0.0
    %2497 = vmatpush1.msra.mxu0 0.0
    %2498 = vmatprep.subr.mxu0 0.0
    %2499 = vmatpush1.msra.mxu0 0.0
    %2500 = vmatprep.subr.mxu0 0.0
    %2501 = vmatpush1.msra.mxu0 0.0
    %2502 = vmatprep.subr.mxu0 0.0
    %2503 = vmatpush1.msra.mxu0 0.0
    %2504 = vmatprep.subr.mxu0 0.0
    %2505 = vmatpush1.msra.mxu0 0.0
    %2506 = vmatprep.subr.mxu0 0.0
    %2507 = vmatpush1.msra.mxu0 0.0
    %2508 = vmatprep.subr.mxu0 0.0
    %2509 = vmatpush1.msra.mxu0 0.0
    %2510 = vmatprep.subr.mxu0 0.0
    %2511 = vmatpush1.msra.mxu0 0.0
    %2512 = vmatprep.subr.mxu0 0.0
    %2513 = vmatpush1.msra.mxu0 0.0
    %2514 = vmatprep.subr.mxu0 0.0
    %2515 = vmatpush1.msra.mxu0 0.0
    %2516 = vmatprep.subr.mxu0 0.0
    %2517 = vmatpush1.msra.mxu0 0.0
    %2518 = vmatprep.subr.mxu0 0.0
    %2519 = vmatpush1.msra.mxu0 0.0
    %2520 = vmatprep.subr.mxu0 0.0
    %2521 = vmatpush1.msra.mxu0 0.0
    %2522 = vmatprep.subr.mxu0 0.0
    %2523 = vmatpush1.msra.mxu0 0.0
    %2524 = vmatprep.subr.mxu0 0.0
    %2525 = vmatpush1.msra.mxu0 0.0
    %2526 = vmatprep.subr.mxu0 0.0
    %2527 = vmatpush1.msra.mxu0 0.0
    %2528 = vmatprep.subr.mxu0 0.0
    %2529 = vmatpush1.msra.mxu0 0.0
    %2530 = vmatprep.mubr.f32.mxu0 0.0
    %2531 = vmatmul.mubr.f32.gmra.mrb[0].mxu0 %v2328
    %v2532 = vpop.f32.mrb[0].mxu0
    %v2533 = vadd.f32 0.0, %v2532
    %v2534 = vpop.f32.mrb[0].mxu0
    %2535 = vdwg.mxu0
    %v2537 = vrot.slane %v2533, 1
    %v2540 = vadd.f32 %v2464, %v2533
    %v2541 = vadd.f32 %v2465, %v2537
    %v2542 = vtanh.pop %v2540
    %v2543 = vtanh.pop %v2541
    %v2544 = vxor.u32 %v2540, 2147483648
    %v2545 = vxor.u32 %v2541, 2147483648
    %v2546 = vmul.f32 %v2544, 1.442695
    %v2547 = vpow.pop %v2546
    %v2548 = vmul.f32 %v2545, 1.442695
    %v2549 = vpow.pop %v2548
    %v2550 = vadd.f32 %v2547, 1.0
    %v2551 = vadd.f32 %v2549, 1.0
    %v2552 = vrcp.pop %v2550
    %v2553 = vmul.f32 1.0, %v2552
    %v2554 = vrcp.pop %v2551
    %v2555 = vmul.f32 1.0, %v2554
    %v2558 = vrot.slane %v2543, 7
    %v2559 = vsel %vm335, %v2558, %v2542
    %v2563 = vrot.slane %v2555, 7
    %v2564 = vsel %vm335, %v2563, %v2553
    %v2566 = vsel %vm236, %v2559, %v2564
    %v2567 = vmul.f32 %v2566, %v2206
    %2569 = vrot.lane.b32.xlu0 %v2566, 64
    %v2570 = vpop.permute.xlu0 %2569
    %v2572 = vmul.f32 %v2566, %v2570
    %2574 = vrot.lane.b32.xlu0 %v2572, 32
    %v2575 = vpop.permute.xlu0 %2574
    %v2577 = vadd.f32 %v2567, %v2575
    %v2578 = vtanh.pop %v2577
    %2580 = vrot.lane.b32.xlu0 %v2578, 64
    %v2581 = vpop.permute.xlu0 %2580
    %v2583 = vmul.f32 %v2566, %v2581
    %v2586 = vunpack.c.l.s4 1966171168
    %v2587 = vunpack.c.0.s8 %v2586
    %v2588 = vlaneseq
    %v2589 = vshrl.u32 %v2588, 7
    %v2590 = vsub.s32 %v2587, %v2589
    %v2591 = vrot.slane %v2583, %v2590
    %v2592 = vcombine.high %v2591, %v2591
    %v2594 = vunpack.c.l.s4 1966171168
    %v2595 = vunpack.c.0.s8 %v2594
    %v2596 = vlaneseq
    %v2597 = vshrl.u32 %v2596, 7
    %v2598 = vsub.s32 %v2595, %v2597
    %v2599 = vrot.slane %v2591, %v2598
    %v2601 = vunpack.c.l.s4 1966171168
    %v2602 = vunpack.c.0.s8 %v2601
    %v2603 = vlaneseq
    %v2604 = vshrl.u32 %v2603, 7
    %v2605 = vsub.s32 %v2602, %v2604
    %v2606 = vrot.slane %v2592, %v2605
    %v2607 = vlaneseq
    %v2608 = vshrl.u32 %v2607, 7
    %v2609 = vsub.s32 0, %v2608
    %v2610 = vrot.slane %v2599, %v2609
    %v2611 = vlaneseq
    %v2612 = vshrl.u32 %v2611, 7
    %v2613 = vsub.s32 0, %v2612
    %v2614 = vrot.slane %v2606, %v2613
    %2615 = vrot.lane.b32.xlu0 %v2610, 32
    %v2616 = vpop.permute.xlu0 %2615
    %2617 = vrot.lane.b32.xlu0 %v2614, 32
    %v2618 = vpop.permute.xlu0 %2617
    %2621 = vst.msk [vmem:[#allocation3 + $0x6] sm:$0x1] %vm398, %v2616
    %2622 = vst.msk [vmem:[#allocation3 + $0xe] sm:$0x1] %vm398, %v2618
    %2623 = vrot.lane.b32.xlu0 %v2424, 32
    %v2624 = vpop.permute.xlu0 %2623
    %v2625 = vsel %vm148, %v2624, 0
    %2627 = vmatprep.subr.mxu0 0.0
    %2628 = vmatpush1.msra.mxu0 %v138
    %2629 = vmatprep.subr.mxu0 0.0
    %2630 = vmatpush1.msra.mxu0 %v139
    %2631 = vmatprep.subr.mxu0 0.0
    %2632 = vmatpush1.msra.mxu0 %v140
    %2633 = vmatprep.subr.mxu0 0.0
    %2634 = vmatpush1.msra.mxu0 %v141
    %2635 = vmatprep.subr.mxu0 0.0
    %2636 = vmatpush1.msra.mxu0 0.0
    %2637 = vmatprep.subr.mxu0 0.0
    %2638 = vmatpush1.msra.mxu0 0.0
    %2639 = vmatprep.subr.mxu0 0.0
    %2640 = vmatpush1.msra.mxu0 0.0
    %2641 = vmatprep.subr.mxu0 0.0
    %2642 = vmatpush1.msra.mxu0 0.0
    %2643 = vmatprep.subr.mxu0 0.0
    %2644 = vmatpush1.msra.mxu0 0.0
    %2645 = vmatprep.subr.mxu0 0.0
    %2646 = vmatpush1.msra.mxu0 0.0
    %2647 = vmatprep.subr.mxu0 0.0
    %2648 = vmatpush1.msra.mxu0 0.0
    %2649 = vmatprep.subr.mxu0 0.0
    %2650 = vmatpush1.msra.mxu0 0.0
    %2651 = vmatprep.subr.mxu0 0.0
    %2652 = vmatpush1.msra.mxu0 0.0
    %2653 = vmatprep.subr.mxu0 0.0
    %2654 = vmatpush1.msra.mxu0 0.0
    %2655 = vmatprep.subr.mxu0 0.0
    %2656 = vmatpush1.msra.mxu0 0.0
    %2657 = vmatprep.subr.mxu0 0.0
    %2658 = vmatpush1.msra.mxu0 0.0
    %2659 = vmatprep.subr.mxu0 0.0
    %2660 = vmatpush1.msra.mxu0 0.0
    %2661 = vmatprep.subr.mxu0 0.0
    %2662 = vmatpush1.msra.mxu0 0.0
    %2663 = vmatprep.subr.mxu0 0.0
    %2664 = vmatpush1.msra.mxu0 0.0
    %2665 = vmatprep.subr.mxu0 0.0
    %2666 = vmatpush1.msra.mxu0 0.0
    %2667 = vmatprep.subr.mxu0 0.0
    %2668 = vmatpush1.msra.mxu0 0.0
    %2669 = vmatprep.subr.mxu0 0.0
    %2670 = vmatpush1.msra.mxu0 0.0
    %2671 = vmatprep.subr.mxu0 0.0
    %2672 = vmatpush1.msra.mxu0 0.0
    %2673 = vmatprep.subr.mxu0 0.0
    %2674 = vmatpush1.msra.mxu0 0.0
    %2675 = vmatprep.subr.mxu0 0.0
    %2676 = vmatpush1.msra.mxu0 0.0
    %2677 = vmatprep.subr.mxu0 0.0
    %2678 = vmatpush1.msra.mxu0 0.0
    %2679 = vmatprep.subr.mxu0 0.0
    %2680 = vmatpush1.msra.mxu0 0.0
    %2681 = vmatprep.subr.mxu0 0.0
    %2682 = vmatpush1.msra.mxu0 0.0
    %2683 = vmatprep.subr.mxu0 0.0
    %2684 = vmatpush1.msra.mxu0 0.0
    %2685 = vmatprep.subr.mxu0 0.0
    %2686 = vmatpush1.msra.mxu0 0.0
    %2687 = vmatprep.subr.mxu0 0.0
    %2688 = vmatpush1.msra.mxu0 0.0
    %2689 = vmatprep.subr.mxu0 0.0
    %2690 = vmatpush1.msra.mxu0 0.0
    %2691 = vmatprep.mubr.f32.mxu0 0.0
    %2692 = vmatmul.mubr.f32.gmra.mrb[0].mxu0 %v2625
    %v2693 = vpop.f32.mrb[0].mxu0
    %v2694 = vadd.f32 0.0, %v2693
    %v2695 = vpop.f32.mrb[0].mxu0
    %2696 = vdwg.mxu0
    %2697 = vrot.lane.b32.xlu0 %v2583, 32
    %v2698 = vpop.permute.xlu0 %2697
    %v2699 = vsel %vm148, %v2698, 0
    %2701 = vmatprep.subr.mxu0 0.0
    %2702 = vmatpush1.msra.mxu0 %v134
    %2703 = vmatprep.subr.mxu0 0.0
    %2704 = vmatpush1.msra.mxu0 %v135
    %2705 = vmatprep.subr.mxu0 0.0
    %2706 = vmatpush1.msra.mxu0 %v136
    %2707 = vmatprep.subr.mxu0 0.0
    %2708 = vmatpush1.msra.mxu0 %v137
    %2709 = vmatprep.subr.mxu0 0.0
    %2710 = vmatpush1.msra.mxu0 0.0
    %2711 = vmatprep.subr.mxu0 0.0
    %2712 = vmatpush1.msra.mxu0 0.0
    %2713 = vmatprep.subr.mxu0 0.0
    %2714 = vmatpush1.msra.mxu0 0.0
    %2715 = vmatprep.subr.mxu0 0.0
    %2716 = vmatpush1.msra.mxu0 0.0
    %2717 = vmatprep.subr.mxu0 0.0
    %2718 = vmatpush1.msra.mxu0 0.0
    %2719 = vmatprep.subr.mxu0 0.0
    %2720 = vmatpush1.msra.mxu0 0.0
    %2721 = vmatprep.subr.mxu0 0.0
    %2722 = vmatpush1.msra.mxu0 0.0
    %2723 = vmatprep.subr.mxu0 0.0
    %2724 = vmatpush1.msra.mxu0 0.0
    %2725 = vmatprep.subr.mxu0 0.0
    %2726 = vmatpush1.msra.mxu0 0.0
    %2727 = vmatprep.subr.mxu0 0.0
    %2728 = vmatpush1.msra.mxu0 0.0
    %2729 = vmatprep.subr.mxu0 0.0
    %2730 = vmatpush1.msra.mxu0 0.0
    %2731 = vmatprep.subr.mxu0 0.0
    %2732 = vmatpush1.msra.mxu0 0.0
    %2733 = vmatprep.subr.mxu0 0.0
    %2734 = vmatpush1.msra.mxu0 0.0
    %2735 = vmatprep.subr.mxu0 0.0
    %2736 = vmatpush1.msra.mxu0 0.0
    %2737 = vmatprep.subr.mxu0 0.0
    %2738 = vmatpush1.msra.mxu0 0.0
    %2739 = vmatprep.subr.mxu0 0.0
    %2740 = vmatpush1.msra.mxu0 0.0
    %2741 = vmatprep.subr.mxu0 0.0
    %2742 = vmatpush1.msra.mxu0 0.0
    %2743 = vmatprep.subr.mxu0 0.0
    %2744 = vmatpush1.msra.mxu0 0.0
    %2745 = vmatprep.subr.mxu0 0.0
    %2746 = vmatpush1.msra.mxu0 0.0
    %2747 = vmatprep.subr.mxu0 0.0
    %2748 = vmatpush1.msra.mxu0 0.0
    %2749 = vmatprep.subr.mxu0 0.0
    %2750 = vmatpush1.msra.mxu0 0.0
    %2751 = vmatprep.subr.mxu0 0.0
    %2752 = vmatpush1.msra.mxu0 0.0
    %2753 = vmatprep.subr.mxu0 0.0
    %2754 = vmatpush1.msra.mxu0 0.0
    %2755 = vmatprep.subr.mxu0 0.0
    %2756 = vmatpush1.msra.mxu0 0.0
    %2757 = vmatprep.subr.mxu0 0.0
    %2758 = vmatpush1.msra.mxu0 0.0
    %2759 = vmatprep.subr.mxu0 0.0
    %2760 = vmatpush1.msra.mxu0 0.0
    %2761 = vmatprep.subr.mxu0 0.0
    %2762 = vmatpush1.msra.mxu0 0.0
    %2763 = vmatprep.subr.mxu0 0.0
    %2764 = vmatpush1.msra.mxu0 0.0
    %2765 = vmatprep.mubr.f32.mxu0 0.0
    %2766 = vmatmul.mubr.f32.gmra.mrb[0].mxu0 %v2699
    %v2767 = vpop.f32.mrb[0].mxu0
    %v2768 = vadd.f32 %v2694, %v2767
    %v2769 = vpop.f32.mrb[0].mxu0
    %2770 = vdwg.mxu0
    %v2771 = vtanh.pop %v2768
    %v2772 = vxor.u32 %v2768, 2147483648
    %v2773 = vmul.f32 %v2772, 1.442695
    %v2774 = vpow.pop %v2773
    %v2775 = vadd.f32 %v2774, 1.0
    %v2776 = vrcp.pop %v2775
    %v2777 = vmul.f32 1.0, %v2776
    %v2778 = vsel %vm236, %v2771, %v2777
    %v2779 = vmul.f32 %v2778, %v2418
    %2781 = vrot.lane.b32.xlu0 %v2778, 64
    %v2782 = vpop.permute.xlu0 %2781
    %v2784 = vmul.f32 %v2778, %v2782
    %2786 = vrot.lane.b32.xlu0 %v2784, 32
    %v2787 = vpop.permute.xlu0 %2786
    %v2789 = vadd.f32 %v2779, %v2787
    %v2790 = vtanh.pop %v2789
    %2792 = vrot.lane.b32.xlu0 %v2790, 64
    %v2793 = vpop.permute.xlu0 %2792
    %v2795 = vmul.f32 %v2778, %v2793
    %v2798 = vunpack.c.l.s4 1966171168
    %v2799 = vunpack.c.0.s8 %v2798
    %v2800 = vlaneseq
    %v2801 = vshrl.u32 %v2800, 7
    %v2802 = vsub.s32 %v2799, %v2801
    %v2803 = vrot.slane %v2795, %v2802
    %v2804 = vcombine.high %v2803, %v2803
    %v2806 = vunpack.c.l.s4 1966171168
    %v2807 = vunpack.c.0.s8 %v2806
    %v2808 = vlaneseq
    %v2809 = vshrl.u32 %v2808, 7
    %v2810 = vsub.s32 %v2807, %v2809
    %v2811 = vrot.slane %v2803, %v2810
    %v2813 = vunpack.c.l.s4 1966171168
    %v2814 = vunpack.c.0.s8 %v2813
    %v2815 = vlaneseq
    %v2816 = vshrl.u32 %v2815, 7
    %v2817 = vsub.s32 %v2814, %v2816
    %v2818 = vrot.slane %v2804, %v2817
    %v2819 = vlaneseq
    %v2820 = vshrl.u32 %v2819, 7
    %v2821 = vsub.s32 0, %v2820
    %v2822 = vrot.slane %v2811, %v2821
    %v2823 = vlaneseq
    %v2824 = vshrl.u32 %v2823, 7
    %v2825 = vsub.s32 0, %v2824
    %v2826 = vrot.slane %v2818, %v2825
    %2827 = vrot.lane.b32.xlu0 %v2822, 32
    %v2828 = vpop.permute.xlu0 %2827
    %2829 = vrot.lane.b32.xlu0 %v2826, 32
    %v2830 = vpop.permute.xlu0 %2829
    %2833 = vst.msk [vmem:[#allocation4 + $0x6] sm:$0x1] %vm398, %v2828
    %2834 = vst.msk [vmem:[#allocation4 + $0xe] sm:$0x1] %vm398, %v2830
    %v2835 = vld [vmem:[#allocation2 + $0x7] sm:$0x1]
    %v2836 = vld [vmem:[#allocation2 + $0xf] sm:$0x1]
    %2837 = vmatprep.subr.mxu0 0.0
    %2838 = vmatpush1.msra.mxu0 %v130
    %2839 = vmatprep.subr.mxu0 0.0
    %2840 = vmatpush1.msra.mxu0 %v131
    %2841 = vmatprep.subr.mxu0 0.0
    %2842 = vmatpush1.msra.mxu0 %v132
    %2843 = vmatprep.subr.mxu0 0.0
    %2844 = vmatpush1.msra.mxu0 %v133
    %2845 = vmatprep.subr.mxu0 0.0
    %2846 = vmatpush1.msra.mxu0 0.0
    %2847 = vmatprep.subr.mxu0 0.0
    %2848 = vmatpush1.msra.mxu0 0.0
    %2849 = vmatprep.subr.mxu0 0.0
    %2850 = vmatpush1.msra.mxu0 0.0
    %2851 = vmatprep.subr.mxu0 0.0
    %2852 = vmatpush1.msra.mxu0 0.0
    %2853 = vmatprep.subr.mxu0 0.0
    %2854 = vmatpush1.msra.mxu0 0.0
    %2855 = vmatprep.subr.mxu0 0.0
    %2856 = vmatpush1.msra.mxu0 0.0
    %2857 = vmatprep.subr.mxu0 0.0
    %2858 = vmatpush1.msra.mxu0 0.0
    %2859 = vmatprep.subr.mxu0 0.0
    %2860 = vmatpush1.msra.mxu0 0.0
    %2861 = vmatprep.subr.mxu0 0.0
    %2862 = vmatpush1.msra.mxu0 0.0
    %2863 = vmatprep.subr.mxu0 0.0
    %2864 = vmatpush1.msra.mxu0 0.0
    %2865 = vmatprep.subr.mxu0 0.0
    %2866 = vmatpush1.msra.mxu0 0.0
    %2867 = vmatprep.subr.mxu0 0.0
    %2868 = vmatpush1.msra.mxu0 0.0
    %2869 = vmatprep.subr.mxu0 0.0
    %2870 = vmatpush1.msra.mxu0 0.0
    %2871 = vmatprep.subr.mxu0 0.0
    %2872 = vmatpush1.msra.mxu0 0.0
    %2873 = vmatprep.subr.mxu0 0.0
    %2874 = vmatpush1.msra.mxu0 0.0
    %2875 = vmatprep.subr.mxu0 0.0
    %2876 = vmatpush1.msra.mxu0 0.0
    %2877 = vmatprep.subr.mxu0 0.0
    %2878 = vmatpush1.msra.mxu0 0.0
    %2879 = vmatprep.subr.mxu0 0.0
    %2880 = vmatpush1.msra.mxu0 0.0
    %2881 = vmatprep.subr.mxu0 0.0
    %2882 = vmatpush1.msra.mxu0 0.0
    %2883 = vmatprep.subr.mxu0 0.0
    %2884 = vmatpush1.msra.mxu0 0.0
    %2885 = vmatprep.subr.mxu0 0.0
    %2886 = vmatpush1.msra.mxu0 0.0
    %2887 = vmatprep.subr.mxu0 0.0
    %2888 = vmatpush1.msra.mxu0 0.0
    %2889 = vmatprep.subr.mxu0 0.0
    %2890 = vmatpush1.msra.mxu0 0.0
    %2891 = vmatprep.subr.mxu0 0.0
    %2892 = vmatpush1.msra.mxu0 0.0
    %2893 = vmatprep.subr.mxu0 0.0
    %2894 = vmatpush1.msra.mxu0 0.0
    %2895 = vmatprep.subr.mxu0 0.0
    %2896 = vmatpush1.msra.mxu0 0.0
    %2897 = vmatprep.subr.mxu0 0.0
    %2898 = vmatpush1.msra.mxu0 0.0
    %2899 = vmatprep.subr.mxu0 0.0
    %2900 = vmatpush1.msra.mxu0 0.0
    %2901 = vmatprep.mubr.f32.mxu0 0.0
    %2902 = vmatmul.mubr.f32.gmra.mrb[0].mxu0 %v2699
    %v2903 = vpop.f32.mrb[0].mxu0
    %v2904 = vadd.f32 0.0, %v2903
    %v2905 = vpop.f32.mrb[0].mxu0
    %2906 = vdwg.mxu0
    %v2908 = vrot.slane %v2904, 1
    %v2911 = vadd.f32 %v2835, %v2904
    %v2912 = vadd.f32 %v2836, %v2908
    %v2913 = vtanh.pop %v2911
    %v2914 = vtanh.pop %v2912
    %v2915 = vxor.u32 %v2911, 2147483648
    %v2916 = vxor.u32 %v2912, 2147483648
    %v2917 = vmul.f32 %v2915, 1.442695
    %v2918 = vpow.pop %v2917
    %v2919 = vmul.f32 %v2916, 1.442695
    %v2920 = vpow.pop %v2919
    %v2921 = vadd.f32 %v2918, 1.0
    %v2922 = vadd.f32 %v2920, 1.0
    %v2923 = vrcp.pop %v2921
    %v2924 = vmul.f32 1.0, %v2923
    %v2925 = vrcp.pop %v2922
    %v2926 = vmul.f32 1.0, %v2925
    %v2929 = vrot.slane %v2914, 7
    %v2930 = vsel %vm335, %v2929, %v2913
    %v2934 = vrot.slane %v2926, 7
    %v2935 = vsel %vm335, %v2934, %v2924
    %v2937 = vsel %vm236, %v2930, %v2935
    %v2938 = vmul.f32 %v2937, %v2577
    %2940 = vrot.lane.b32.xlu0 %v2937, 64
    %v2941 = vpop.permute.xlu0 %2940
    %v2943 = vmul.f32 %v2937, %v2941
    %2945 = vrot.lane.b32.xlu0 %v2943, 32
    %v2946 = vpop.permute.xlu0 %2945
    %v2948 = vadd.f32 %v2938, %v2946
    %v2949 = vtanh.pop %v2948
    %2951 = vrot.lane.b32.xlu0 %v2949, 64
    %v2952 = vpop.permute.xlu0 %2951
    %v2954 = vmul.f32 %v2937, %v2952
    %v2957 = vunpack.c.l.s4 1966171168
    %v2958 = vunpack.c.0.s8 %v2957
    %v2959 = vlaneseq
    %v2960 = vshrl.u32 %v2959, 7
    %v2961 = vsub.s32 %v2958, %v2960
    %v2962 = vrot.slane %v2954, %v2961
    %v2963 = vcombine.high %v2962, %v2962
    %v2965 = vunpack.c.l.s4 1966171168
    %v2966 = vunpack.c.0.s8 %v2965
    %v2967 = vlaneseq
    %v2968 = vshrl.u32 %v2967, 7
    %v2969 = vsub.s32 %v2966, %v2968
    %v2970 = vrot.slane %v2962, %v2969
    %v2972 = vunpack.c.l.s4 1966171168
    %v2973 = vunpack.c.0.s8 %v2972
    %v2974 = vlaneseq
    %v2975 = vshrl.u32 %v2974, 7
    %v2976 = vsub.s32 %v2973, %v2975
    %v2977 = vrot.slane %v2963, %v2976
    %v2978 = vlaneseq
    %v2979 = vshrl.u32 %v2978, 7
    %v2980 = vsub.s32 0, %v2979
    %v2981 = vrot.slane %v2970, %v2980
    %v2982 = vlaneseq
    %v2983 = vshrl.u32 %v2982, 7
    %v2984 = vsub.s32 0, %v2983
    %v2985 = vrot.slane %v2977, %v2984
    %2986 = vrot.lane.b32.xlu0 %v2981, 32
    %v2987 = vpop.permute.xlu0 %2986
    %2988 = vrot.lane.b32.xlu0 %v2985, 32
    %v2989 = vpop.permute.xlu0 %2988
    %2992 = vst.msk [vmem:[#allocation3 + $0x7] sm:$0x1] %vm398, %v2987
    %2993 = vst.msk [vmem:[#allocation3 + $0xf] sm:$0x1] %vm398, %v2989
    %2994 = vrot.lane.b32.xlu0 %v2795, 32
    %v2995 = vpop.permute.xlu0 %2994
    %v2996 = vsel %vm148, %v2995, 0
    %2998 = vmatprep.subr.mxu0 0.0
    %2999 = vmatpush1.msra.mxu0 %v138
    %3000 = vmatprep.subr.mxu0 0.0
    %3001 = vmatpush1.msra.mxu0 %v139
    %3002 = vmatprep.subr.mxu0 0.0
    %3003 = vmatpush1.msra.mxu0 %v140
    %3004 = vmatprep.subr.mxu0 0.0
    %3005 = vmatpush1.msra.mxu0 %v141
    %3006 = vmatprep.subr.mxu0 0.0
    %3007 = vmatpush1.msra.mxu0 0.0
    %3008 = vmatprep.subr.mxu0 0.0
    %3009 = vmatpush1.msra.mxu0 0.0
    %3010 = vmatprep.subr.mxu0 0.0
    %3011 = vmatpush1.msra.mxu0 0.0
    %3012 = vmatprep.subr.mxu0 0.0
    %3013 = vmatpush1.msra.mxu0 0.0
    %3014 = vmatprep.subr.mxu0 0.0
    %3015 = vmatpush1.msra.mxu0 0.0
    %3016 = vmatprep.subr.mxu0 0.0
    %3017 = vmatpush1.msra.mxu0 0.0
    %3018 = vmatprep.subr.mxu0 0.0
    %3019 = vmatpush1.msra.mxu0 0.0
    %3020 = vmatprep.subr.mxu0 0.0
    %3021 = vmatpush1.msra.mxu0 0.0
    %3022 = vmatprep.subr.mxu0 0.0
    %3023 = vmatpush1.msra.mxu0 0.0
    %3024 = vmatprep.subr.mxu0 0.0
    %3025 = vmatpush1.msra.mxu0 0.0
    %3026 = vmatprep.subr.mxu0 0.0
    %3027 = vmatpush1.msra.mxu0 0.0
    %3028 = vmatprep.subr.mxu0 0.0
    %3029 = vmatpush1.msra.mxu0 0.0
    %3030 = vmatprep.subr.mxu0 0.0
    %3031 = vmatpush1.msra.mxu0 0.0
    %3032 = vmatprep.subr.mxu0 0.0
    %3033 = vmatpush1.msra.mxu0 0.0
    %3034 = vmatprep.subr.mxu0 0.0
    %3035 = vmatpush1.msra.mxu0 0.0
    %3036 = vmatprep.subr.mxu0 0.0
    %3037 = vmatpush1.msra.mxu0 0.0
    %3038 = vmatprep.subr.mxu0 0.0
    %3039 = vmatpush1.msra.mxu0 0.0
    %3040 = vmatprep.subr.mxu0 0.0
    %3041 = vmatpush1.msra.mxu0 0.0
    %3042 = vmatprep.subr.mxu0 0.0
    %3043 = vmatpush1.msra.mxu0 0.0
    %3044 = vmatprep.subr.mxu0 0.0
    %3045 = vmatpush1.msra.mxu0 0.0
    %3046 = vmatprep.subr.mxu0 0.0
    %3047 = vmatpush1.msra.mxu0 0.0
    %3048 = vmatprep.subr.mxu0 0.0
    %3049 = vmatpush1.msra.mxu0 0.0
    %3050 = vmatprep.subr.mxu0 0.0
    %3051 = vmatpush1.msra.mxu0 0.0
    %3052 = vmatprep.subr.mxu0 0.0
    %3053 = vmatpush1.msra.mxu0 0.0
    %3054 = vmatprep.subr.mxu0 0.0
    %3055 = vmatpush1.msra.mxu0 0.0
    %3056 = vmatprep.subr.mxu0 0.0
    %3057 = vmatpush1.msra.mxu0 0.0
    %3058 = vmatprep.subr.mxu0 0.0
    %3059 = vmatpush1.msra.mxu0 0.0
    %3060 = vmatprep.subr.mxu0 0.0
    %3061 = vmatpush1.msra.mxu0 0.0
    %3062 = vmatprep.mubr.f32.mxu0 0.0
    %3063 = vmatmul.mubr.f32.gmra.mrb[0].mxu0 %v2996
    %v3064 = vpop.f32.mrb[0].mxu0
    %v3065 = vadd.f32 0.0, %v3064
    %v3066 = vpop.f32.mrb[0].mxu0
    %3067 = vdwg.mxu0
    %3068 = vrot.lane.b32.xlu0 %v2954, 32
    %v3069 = vpop.permute.xlu0 %3068
    %v3070 = vsel %vm148, %v3069, 0
    %3072 = vmatprep.subr.mxu0 0.0
    %3073 = vmatpush1.msra.mxu0 %v134
    %3074 = vmatprep.subr.mxu0 0.0
    %3075 = vmatpush1.msra.mxu0 %v135
    %3076 = vmatprep.subr.mxu0 0.0
    %3077 = vmatpush1.msra.mxu0 %v136
    %3078 = vmatprep.subr.mxu0 0.0
    %3079 = vmatpush1.msra.mxu0 %v137
    %3080 = vmatprep.subr.mxu0 0.0
    %3081 = vmatpush1.msra.mxu0 0.0
    %3082 = vmatprep.subr.mxu0 0.0
    %3083 = vmatpush1.msra.mxu0 0.0
    %3084 = vmatprep.subr.mxu0 0.0
    %3085 = vmatpush1.msra.mxu0 0.0
    %3086 = vmatprep.subr.mxu0 0.0
    %3087 = vmatpush1.msra.mxu0 0.0
    %3088 = vmatprep.subr.mxu0 0.0
    %3089 = vmatpush1.msra.mxu0 0.0
    %3090 = vmatprep.subr.mxu0 0.0
    %3091 = vmatpush1.msra.mxu0 0.0
    %3092 = vmatprep.subr.mxu0 0.0
    %3093 = vmatpush1.msra.mxu0 0.0
    %3094 = vmatprep.subr.mxu0 0.0
    %3095 = vmatpush1.msra.mxu0 0.0
    %3096 = vmatprep.subr.mxu0 0.0
    %3097 = vmatpush1.msra.mxu0 0.0
    %3098 = vmatprep.subr.mxu0 0.0
    %3099 = vmatpush1.msra.mxu0 0.0
    %3100 = vmatprep.subr.mxu0 0.0
    %3101 = vmatpush1.msra.mxu0 0.0
    %3102 = vmatprep.subr.mxu0 0.0
    %3103 = vmatpush1.msra.mxu0 0.0
    %3104 = vmatprep.subr.mxu0 0.0
    %3105 = vmatpush1.msra.mxu0 0.0
    %3106 = vmatprep.subr.mxu0 0.0
    %3107 = vmatpush1.msra.mxu0 0.0
    %3108 = vmatprep.subr.mxu0 0.0
    %3109 = vmatpush1.msra.mxu0 0.0
    %3110 = vmatprep.subr.mxu0 0.0
    %3111 = vmatpush1.msra.mxu0 0.0
    %3112 = vmatprep.subr.mxu0 0.0
    %3113 = vmatpush1.msra.mxu0 0.0
    %3114 = vmatprep.subr.mxu0 0.0
    %3115 = vmatpush1.msra.mxu0 0.0
    %3116 = vmatprep.subr.mxu0 0.0
    %3117 = vmatpush1.msra.mxu0 0.0
    %3118 = vmatprep.subr.mxu0 0.0
    %3119 = vmatpush1.msra.mxu0 0.0
    %3120 = vmatprep.subr.mxu0 0.0
    %3121 = vmatpush1.msra.mxu0 0.0
    %3122 = vmatprep.subr.mxu0 0.0
    %3123 = vmatpush1.msra.mxu0 0.0
    %3124 = vmatprep.subr.mxu0 0.0
    %3125 = vmatpush1.msra.mxu0 0.0
    %3126 = vmatprep.subr.mxu0 0.0
    %3127 = vmatpush1.msra.mxu0 0.0
    %3128 = vmatprep.subr.mxu0 0.0
    %3129 = vmatpush1.msra.mxu0 0.0
    %3130 = vmatprep.subr.mxu0 0.0
    %3131 = vmatpush1.msra.mxu0 0.0
    %3132 = vmatprep.subr.mxu0 0.0
    %3133 = vmatpush1.msra.mxu0 0.0
    %3134 = vmatprep.subr.mxu0 0.0
    %3135 = vmatpush1.msra.mxu0 0.0
    %3136 = vmatprep.mubr.f32.mxu0 0.0
    %3137 = vmatmul.mubr.f32.gmra.mrb[0].mxu0 %v3070
    %v3138 = vpop.f32.mrb[0].mxu0
    %v3139 = vadd.f32 %v3065, %v3138
    %v3140 = vpop.f32.mrb[0].mxu0
    %3141 = vdwg.mxu0
    %v3142 = vtanh.pop %v3139
    %v3143 = vxor.u32 %v3139, 2147483648
    %v3144 = vmul.f32 %v3143, 1.442695
    %v3145 = vpow.pop %v3144
    %v3146 = vadd.f32 %v3145, 1.0
    %v3147 = vrcp.pop %v3146
    %v3148 = vmul.f32 1.0, %v3147
    %v3149 = vsel %vm236, %v3142, %v3148
    %v3150 = vmul.f32 %v3149, %v2789
    %3152 = vrot.lane.b32.xlu0 %v3149, 64
    %v3153 = vpop.permute.xlu0 %3152
    %v3155 = vmul.f32 %v3149, %v3153
    %3157 = vrot.lane.b32.xlu0 %v3155, 32
    %v3158 = vpop.permute.xlu0 %3157
    %v3160 = vadd.f32 %v3150, %v3158
    %v3161 = vtanh.pop %v3160
    %3163 = vrot.lane.b32.xlu0 %v3161, 64
    %v3164 = vpop.permute.xlu0 %3163
    %v3166 = vmul.f32 %v3149, %v3164
    %v3169 = vunpack.c.l.s4 1966171168
    %v3170 = vunpack.c.0.s8 %v3169
    %v3171 = vlaneseq
    %v3172 = vshrl.u32 %v3171, 7
    %v3173 = vsub.s32 %v3170, %v3172
    %v3174 = vrot.slane %v3166, %v3173
    %v3175 = vcombine.high %v3174, %v3174
    %v3177 = vunpack.c.l.s4 1966171168
    %v3178 = vunpack.c.0.s8 %v3177
    %v3179 = vlaneseq
    %v3180 = vshrl.u32 %v3179, 7
    %v3181 = vsub.s32 %v3178, %v3180
    %v3182 = vrot.slane %v3174, %v3181
    %v3184 = vunpack.c.l.s4 1966171168
    %v3185 = vunpack.c.0.s8 %v3184
    %v3186 = vlaneseq
    %v3187 = vshrl.u32 %v3186, 7
    %v3188 = vsub.s32 %v3185, %v3187
    %v3189 = vrot.slane %v3175, %v3188
    %v3190 = vlaneseq
    %v3191 = vshrl.u32 %v3190, 7
    %v3192 = vsub.s32 0, %v3191
    %v3193 = vrot.slane %v3182, %v3192
    %v3194 = vlaneseq
    %v3195 = vshrl.u32 %v3194, 7
    %v3196 = vsub.s32 0, %v3195
    %v3197 = vrot.slane %v3189, %v3196
    %3198 = vrot.lane.b32.xlu0 %v3193, 32
    %v3199 = vpop.permute.xlu0 %3198
    %3200 = vrot.lane.b32.xlu0 %v3197, 32
    %v3201 = vpop.permute.xlu0 %3200
    %3204 = vst.msk [vmem:[#allocation4 + $0x7] sm:$0x1] %vm398, %v3199
    %3205 = vst.msk [vmem:[#allocation4 + $0xf] sm:$0x1] %vm398, %v3201
    %v3206 = vld [vmem:[#allocation3] sm:$0xff]
    %v3207 = vld [vmem:[#allocation3 + $0x8] sm:$0xff]
    %v3208 = vld [vmem:[#allocation4] sm:$0xff]
    %v3209 = vld [vmem:[#allocation4 + $0x8] sm:$0xff]
    %v3210 = vadd.f32 %v3206, %v3208
    %v3211 = vadd.f32 %v3207, %v3209
    %v3212 = vld [vmem:[#allocation13] sm:$0xff]
    %v3213 = vld [vmem:[#allocation13 + $0x8] sm:$0xff]
    %v3214 = vld [vmem:[#allocation13 + $0x10] sm:$0xff]
    %v3215 = vld [vmem:[#allocation13 + $0x18] sm:$0xff]
    %v3217 = vsel %vm148, %v3210, 0
    %v3220 = vsel %vm148, %v3211, 0
    %3222 = vmatprep.subr.mxu0 0.0
    %3223 = vmatpush1.msra.mxu0 %v3212
    %3224 = vmatprep.subr.mxu0 0.0
    %3225 = vmatpush1.msra.mxu0 %v3213
    %3226 = vmatprep.subr.mxu0 0.0
    %3227 = vmatpush1.msra.mxu0 %v3214
    %3228 = vmatprep.subr.mxu0 0.0
    %3229 = vmatpush1.msra.mxu0 %v3215
    %3230 = vmatprep.subr.mxu0 0.0
    %3231 = vmatpush1.msra.mxu0 0.0
    %3232 = vmatprep.subr.mxu0 0.0
    %3233 = vmatpush1.msra.mxu0 0.0
    %3234 = vmatprep.subr.mxu0 0.0
    %3235 = vmatpush1.msra.mxu0 0.0
    %3236 = vmatprep.subr.mxu0 0.0
    %3237 = vmatpush1.msra.mxu0 0.0
    %3238 = vmatprep.subr.mxu0 0.0
    %3239 = vmatpush1.msra.mxu0 0.0
    %3240 = vmatprep.subr.mxu0 0.0
    %3241 = vmatpush1.msra.mxu0 0.0
    %3242 = vmatprep.subr.mxu0 0.0
    %3243 = vmatpush1.msra.mxu0 0.0
    %3244 = vmatprep.subr.mxu0 0.0
    %3245 = vmatpush1.msra.mxu0 0.0
    %3246 = vmatprep.subr.mxu0 0.0
    %3247 = vmatpush1.msra.mxu0 0.0
    %3248 = vmatprep.subr.mxu0 0.0
    %3249 = vmatpush1.msra.mxu0 0.0
    %3250 = vmatprep.subr.mxu0 0.0
    %3251 = vmatpush1.msra.mxu0 0.0
    %3252 = vmatprep.subr.mxu0 0.0
    %3253 = vmatpush1.msra.mxu0 0.0
    %3254 = vmatprep.subr.mxu0 0.0
    %3255 = vmatpush1.msra.mxu0 0.0
    %3256 = vmatprep.subr.mxu0 0.0
    %3257 = vmatpush1.msra.mxu0 0.0
    %3258 = vmatprep.subr.mxu0 0.0
    %3259 = vmatpush1.msra.mxu0 0.0
    %3260 = vmatprep.subr.mxu0 0.0
    %3261 = vmatpush1.msra.mxu0 0.0
    %3262 = vmatprep.subr.mxu0 0.0
    %3263 = vmatpush1.msra.mxu0 0.0
    %3264 = vmatprep.subr.mxu0 0.0
    %3265 = vmatpush1.msra.mxu0 0.0
    %3266 = vmatprep.subr.mxu0 0.0
    %3267 = vmatpush1.msra.mxu0 0.0
    %3268 = vmatprep.subr.mxu0 0.0
    %3269 = vmatpush1.msra.mxu0 0.0
    %3270 = vmatprep.subr.mxu0 0.0
    %3271 = vmatpush1.msra.mxu0 0.0
    %3272 = vmatprep.subr.mxu0 0.0
    %3273 = vmatpush1.msra.mxu0 0.0
    %3274 = vmatprep.subr.mxu0 0.0
    %3275 = vmatpush1.msra.mxu0 0.0
    %3276 = vmatprep.subr.mxu0 0.0
    %3277 = vmatpush1.msra.mxu0 0.0
    %3278 = vmatprep.subr.mxu0 0.0
    %3279 = vmatpush1.msra.mxu0 0.0
    %3280 = vmatprep.subr.mxu0 0.0
    %3281 = vmatpush1.msra.mxu0 0.0
    %3282 = vmatprep.subr.mxu0 0.0
    %3283 = vmatpush1.msra.mxu0 0.0
    %3284 = vmatprep.subr.mxu0 0.0
    %3285 = vmatpush1.msra.mxu0 0.0
    %3286 = vmatprep.mubr.f32.mxu0 0.0
    %3287 = vmatmul.mubr.f32.gmra.mrb[0].mxu0 %v3217
    %v3288 = vpop.f32.mrb[0].mxu0
    %v3289 = vadd.f32 0.0, %v3288
    %v3290 = vpop.f32.mrb[0].mxu0
    %3291 = vmatprep.mubr.f32.mxu0 0.0
    %3292 = vmatmul.mubr.f32.gmra.mrb[0].mxu0 %v3220
    %v3293 = vpop.f32.mrb[0].mxu0
    %v3294 = vadd.f32 0.0, %v3293
    %v3295 = vpop.f32.mrb[0].mxu0
    %3296 = vdwg.mxu0
    %v3297 = vmax.f32 %v3289, 0.0
    %v3298 = vmax.f32 %v3294, 0.0
    %v3299 = vld [vmem:[%s6] sm:$0x1]
    %v3301 = vlaneseq
    %v3302 = vshrl.u32 %v3301, 7
    %v3303 = vsub.s32 0, %v3302
    %v3304 = vrot.slane %v3299, %v3303
    %v3306 = vmul.f32 %v3297, %v3304
    %v3307 = vmul.f32 %v3298, %v3304
    %v3308 = vsel %vm148, %v3306, 0.0
    %3309 = vadd.xlane.f32.xlu0 %v3308
    %v3310 = vpop.xlane.xlu0 %3309
    %v3311 = vsel %vm148, %v3307, 0.0
    %3312 = vadd.xlane.f32.xlu0 %v3311
    %v3313 = vpop.xlane.xlu0 %3312
    %v3316 = vlaneseq
    %v3317 = vshrl.u32 %v3316, 7
    %v3318 = vsub.s32 %v233, %v3317
    %v3319 = vrot.slane %v3310, %v3318
    %v3320 = vlaneseq
    %v3321 = vshrl.u32 %v3320, 7
    %v3322 = vsub.s32 %v233, %v3321
    %v3323 = vrot.slane %v3313, %v3322
    %v3324 = vsel %vm335, %v3323, %v3319
    %vm3326 = vcmask 58368
    %3327 = vst.msk [vmem:[#allocation18] sm:$0x3] %vm3326, %v3324
    %v3328 = vld [vmem:[%s7] sm:$0x1]
    %v3330 = vlaneseq
    %v3331 = vshrl.u32 %v3330, 7
    %v3332 = vsub.s32 0, %v3331
    %v3333 = vrot.slane %v3328, %v3332
    %v3335 = vmul.f32 %v3206, %v3333
    %v3336 = vmul.f32 %v3207, %v3333
    %v3337 = vsel %vm148, %v3335, 0.0
    %3338 = vadd.xlane.f32.xlu0 %v3337
    %v3339 = vpop.xlane.xlu0 %3338
    %v3340 = vsel %vm148, %v3336, 0.0
    %3341 = vadd.xlane.f32.xlu0 %v3340
    %v3342 = vpop.xlane.xlu0 %3341
    %s3343 = sld [smem:[#allocation5]]
    %v3344 = vstv %s3343
    %v3345 = vadd.f32 %v3339, %v3344
    %v3346 = vadd.f32 %v3342, %v3344
    %v3347 = vld [vmem:[#allocation15] sm:$0x1]
    %v3349 = vlaneseq
    %v3350 = vshrl.u32 %v3349, 7
    %v3351 = vsub.s32 0, %v3350
    %v3352 = vrot.slane %v3347, %v3351
    %v3354 = vmul.f32 %v3208, %v3352
    %v3355 = vmul.f32 %v3209, %v3352
    %v3356 = vsel %vm148, %v3354, 0.0
    %3357 = vadd.xlane.f32.xlu0 %v3356
    %v3358 = vpop.xlane.xlu0 %3357
    %v3359 = vsel %vm148, %v3355, 0.0
    %3360 = vadd.xlane.f32.xlu0 %v3359
    %v3361 = vpop.xlane.xlu0 %3360
    %s3362 = sld [smem:[#allocation6]]
    %v3363 = vstv %s3362
    %v3364 = vadd.f32 %v3358, %v3363
    %v3365 = vadd.f32 %v3361, %v3363
    %v3366 = vrot.slane %v3345, 4
    %v3367 = vmax.f32 %v3345, %v3366
    %v3368 = vrot.slane %v3367, 2
    %v3369 = vmax.f32 %v3367, %v3368
    %v3370 = vrot.slane %v3369, 1
    %v3371 = vmax.f32 %v3369, %v3370
    %v3372 = vrot.slane %v3346, 4
    %v3373 = vmax.f32 %v3346, %v3372
    %v3374 = vrot.slane %v3373, 2
    %v3375 = vmax.f32 %v3373, %v3374
    %v3376 = vrot.slane %v3375, 1
    %v3377 = vmax.f32 %v3375, %v3376
    %v3378 = vsub.f32 %v3345, %v3371
    %v3379 = vsub.f32 %v3346, %v3377
    %v3380 = vmul.f32 %v3378, 1.442695
    %v3381 = vpow.pop %v3380
    %v3382 = vmul.f32 %v3379, 1.442695
    %v3383 = vpow.pop %v3382
    %v3384 = vrot.slane %v3381, 4
    %v3385 = vadd.f32 %v3381, %v3384
    %v3386 = vrot.slane %v3385, 2
    %v3387 = vadd.f32 %v3385, %v3386
    %v3388 = vrot.slane %v3387, 1
    %v3389 = vadd.f32 %v3387, %v3388
    %v3390 = vrot.slane %v3383, 4
    %v3391 = vadd.f32 %v3383, %v3390
    %v3392 = vrot.slane %v3391, 2
    %v3393 = vadd.f32 %v3391, %v3392
    %v3394 = vrot.slane %v3393, 1
    %v3395 = vadd.f32 %v3393, %v3394
    %v3396 = vrcp.pop %v3389
    %v3397 = vmul.f32 %v3381, %v3396
    %v3398 = vrcp.pop %v3395
    %v3399 = vmul.f32 %v3383, %v3398
    %v3400 = vrot.slane %v3364, 4
    %v3401 = vmax.f32 %v3364, %v3400
    %v3402 = vrot.slane %v3401, 2
    %v3403 = vmax.f32 %v3401, %v3402
    %v3404 = vrot.slane %v3403, 1
    %v3405 = vmax.f32 %v3403, %v3404
    %v3406 = vrot.slane %v3365, 4
    %v3407 = vmax.f32 %v3365, %v3406
    %v3408 = vrot.slane %v3407, 2
    %v3409 = vmax.f32 %v3407, %v3408
    %v3410 = vrot.slane %v3409, 1
    %v3411 = vmax.f32 %v3409, %v3410
    %v3412 = vsub.f32 %v3364, %v3405
    %v3413 = vsub.f32 %v3365, %v3411
    %v3414 = vmul.f32 %v3412, 1.442695
    %v3415 = vpow.pop %v3414
    %v3416 = vmul.f32 %v3413, 1.442695
    %v3417 = vpow.pop %v3416
    %v3418 = vrot.slane %v3415, 4
    %v3419 = vadd.f32 %v3415, %v3418
    %v3420 = vrot.slane %v3419, 2
    %v3421 = vadd.f32 %v3419, %v3420
    %v3422 = vrot.slane %v3421, 1
    %v3423 = vadd.f32 %v3421, %v3422
    %v3424 = vrot.slane %v3417, 4
    %v3425 = vadd.f32 %v3417, %v3424
    %v3426 = vrot.slane %v3425, 2
    %v3427 = vadd.f32 %v3425, %v3426
    %v3428 = vrot.slane %v3427, 1
    %v3429 = vadd.f32 %v3427, %v3428
    %v3430 = vrcp.pop %v3423
    %v3431 = vmul.f32 %v3415, %v3430
    %v3432 = vrcp.pop %v3429
    %v3433 = vmul.f32 %v3417, %v3432
    %v3434 = vmul.f32 %v3397, %v3206
    %v3435 = vmul.f32 %v3399, %v3207
    %v3436 = vmul.f32 %v3431, %v3208
    %v3437 = vmul.f32 %v3433, %v3209
    %v3438 = vadd.f32 %v3434, %v3436
    %v3439 = vadd.f32 %v3435, %v3437
    %v3440 = vsel %vm148, %v3438, 0.0
    %v3441 = vrot.slane %v3440, 4
    %v3442 = vadd.f32 %v3440, %v3441
    %v3443 = vrot.slane %v3442, 2
    %v3444 = vadd.f32 %v3442, %v3443
    %v3445 = vrot.slane %v3444, 1
    %v3446 = vadd.f32 %v3444, %v3445
    %v3447 = vsel %vm148, %v3439, 0.0
    %v3448 = vrot.slane %v3447, 4
    %v3449 = vadd.f32 %v3447, %v3448
    %v3450 = vrot.slane %v3449, 2
    %v3451 = vadd.f32 %v3449, %v3450
    %v3452 = vrot.slane %v3451, 1
    %v3453 = vadd.f32 %v3451, %v3452
    %v3454 = vld [vmem:[#allocation16] sm:$0xff]
    %v3455 = vld [vmem:[#allocation16 + $0x8] sm:$0xff]
    %v3456 = vld [vmem:[#allocation16 + $0x10] sm:$0xff]
    %v3457 = vld [vmem:[#allocation16 + $0x18] sm:$0xff]
    %v3460 = vsel %vm335, %v3453, %v3446
    %v3461 = vsel %vm148, %v3460, 0
    %3463 = vmatprep.subr.mxu0 0.0
    %3464 = vmatpush1.msra.mxu0 %v3454
    %3465 = vmatprep.subr.mxu0 0.0
    %3466 = vmatpush1.msra.mxu0 %v3455
    %3467 = vmatprep.subr.mxu0 0.0
    %3468 = vmatpush1.msra.mxu0 %v3456
    %3469 = vmatprep.subr.mxu0 0.0
    %3470 = vmatpush1.msra.mxu0 %v3457
    %3471 = vmatprep.subr.mxu0 0.0
    %3472 = vmatpush1.msra.mxu0 0.0
    %3473 = vmatprep.subr.mxu0 0.0
    %3474 = vmatpush1.msra.mxu0 0.0
    %3475 = vmatprep.subr.mxu0 0.0
    %3476 = vmatpush1.msra.mxu0 0.0
    %3477 = vmatprep.subr.mxu0 0.0
    %3478 = vmatpush1.msra.mxu0 0.0
    %3479 = vmatprep.subr.mxu0 0.0
    %3480 = vmatpush1.msra.mxu0 0.0
    %3481 = vmatprep.subr.mxu0 0.0
    %3482 = vmatpush1.msra.mxu0 0.0
    %3483 = vmatprep.subr.mxu0 0.0
    %3484 = vmatpush1.msra.mxu0 0.0
    %3485 = vmatprep.subr.mxu0 0.0
    %3486 = vmatpush1.msra.mxu0 0.0
    %3487 = vmatprep.subr.mxu0 0.0
    %3488 = vmatpush1.msra.mxu0 0.0
    %3489 = vmatprep.subr.mxu0 0.0
    %3490 = vmatpush1.msra.mxu0 0.0
    %3491 = vmatprep.subr.mxu0 0.0
    %3492 = vmatpush1.msra.mxu0 0.0
    %3493 = vmatprep.subr.mxu0 0.0
    %3494 = vmatpush1.msra.mxu0 0.0
    %3495 = vmatprep.subr.mxu0 0.0
    %3496 = vmatpush1.msra.mxu0 0.0
    %3497 = vmatprep.subr.mxu0 0.0
    %3498 = vmatpush1.msra.mxu0 0.0
    %3499 = vmatprep.subr.mxu0 0.0
    %3500 = vmatpush1.msra.mxu0 0.0
    %3501 = vmatprep.subr.mxu0 0.0
    %3502 = vmatpush1.msra.mxu0 0.0
    %3503 = vmatprep.subr.mxu0 0.0
    %3504 = vmatpush1.msra.mxu0 0.0
    %3505 = vmatprep.subr.mxu0 0.0
    %3506 = vmatpush1.msra.mxu0 0.0
    %3507 = vmatprep.subr.mxu0 0.0
    %3508 = vmatpush1.msra.mxu0 0.0
    %3509 = vmatprep.subr.mxu0 0.0
    %3510 = vmatpush1.msra.mxu0 0.0
    %3511 = vmatprep.subr.mxu0 0.0
    %3512 = vmatpush1.msra.mxu0 0.0
    %3513 = vmatprep.subr.mxu0 0.0
    %3514 = vmatpush1.msra.mxu0 0.0
    %3515 = vmatprep.subr.mxu0 0.0
    %3516 = vmatpush1.msra.mxu0 0.0
    %3517 = vmatprep.subr.mxu0 0.0
    %3518 = vmatpush1.msra.mxu0 0.0
    %3519 = vmatprep.subr.mxu0 0.0
    %3520 = vmatpush1.msra.mxu0 0.0
    %3521 = vmatprep.subr.mxu0 0.0
    %3522 = vmatpush1.msra.mxu0 0.0
    %3523 = vmatprep.subr.mxu0 0.0
    %3524 = vmatpush1.msra.mxu0 0.0
    %3525 = vmatprep.subr.mxu0 0.0
    %3526 = vmatpush1.msra.mxu0 0.0
    %3527 = vmatprep.mubr.f32.mxu0 0.0
    %3528 = vmatmul.mubr.f32.gmra.mrb[0].mxu0 %v3461
    %v3529 = vpop.f32.mrb[0].mxu0
    %v3530 = vadd.f32 0.0, %v3529
    %v3531 = vpop.f32.mrb[0].mxu0
    %3532 = vdwg.mxu0
    %v3533 = vmax.f32 %v3530, 0.0
    %v3534 = vld [vmem:[%s10] sm:$0xff]
    %v3535 = vld [vmem:[%s10 + $0x8] sm:$0xff]
    %v3536 = vld [vmem:[%s10 + $0x10] sm:$0xff]
    %v3537 = vld [vmem:[%s10 + $0x18] sm:$0xff]
    %v3539 = vsel %vm148, %v3533, 0
    %3541 = vmatprep.subr.mxu0 0.0
    %3542 = vmatpush1.msra.mxu0 %v3534
    %3543 = vmatprep.subr.mxu0 0.0
    %3544 = vmatpush1.msra.mxu0 %v3535
    %3545 = vmatprep.subr.mxu0 0.0
    %3546 = vmatpush1.msra.mxu0 %v3536
    %3547 = vmatprep.subr.mxu0 0.0
    %3548 = vmatpush1.msra.mxu0 %v3537
    %3549 = vmatprep.subr.mxu0 0.0
    %3550 = vmatpush1.msra.mxu0 0.0
    %3551 = vmatprep.subr.mxu0 0.0
    %3552 = vmatpush1.msra.mxu0 0.0
    %3553 = vmatprep.subr.mxu0 0.0
    %3554 = vmatpush1.msra.mxu0 0.0
    %3555 = vmatprep.subr.mxu0 0.0
    %3556 = vmatpush1.msra.mxu0 0.0
    %3557 = vmatprep.subr.mxu0 0.0
    %3558 = vmatpush1.msra.mxu0 0.0
    %3559 = vmatprep.subr.mxu0 0.0
    %3560 = vmatpush1.msra.mxu0 0.0
    %3561 = vmatprep.subr.mxu0 0.0
    %3562 = vmatpush1.msra.mxu0 0.0
    %3563 = vmatprep.subr.mxu0 0.0
    %3564 = vmatpush1.msra.mxu0 0.0
    %3565 = vmatprep.subr.mxu0 0.0
    %3566 = vmatpush1.msra.mxu0 0.0
    %3567 = vmatprep.subr.mxu0 0.0
    %3568 = vmatpush1.msra.mxu0 0.0
    %3569 = vmatprep.subr.mxu0 0.0
    %3570 = vmatpush1.msra.mxu0 0.0
    %3571 = vmatprep.subr.mxu0 0.0
    %3572 = vmatpush1.msra.mxu0 0.0
    %3573 = vmatprep.subr.mxu0 0.0
    %3574 = vmatpush1.msra.mxu0 0.0
    %3575 = vmatprep.subr.mxu0 0.0
    %3576 = vmatpush1.msra.mxu0 0.0
    %3577 = vmatprep.subr.mxu0 0.0
    %3578 = vmatpush1.msra.mxu0 0.0
    %3579 = vmatprep.subr.mxu0 0.0
    %3580 = vmatpush1.msra.mxu0 0.0
    %3581 = vmatprep.subr.mxu0 0.0
    %3582 = vmatpush1.msra.mxu0 0.0
    %3583 = vmatprep.subr.mxu0 0.0
    %3584 = vmatpush1.msra.mxu0 0.0
    %3585 = vmatprep.subr.mxu0 0.0
    %3586 = vmatpush1.msra.mxu0 0.0
    %3587 = vmatprep.subr.mxu0 0.0
    %3588 = vmatpush1.msra.mxu0 0.0
    %3589 = vmatprep.subr.mxu0 0.0
    %3590 = vmatpush1.msra.mxu0 0.0
    %3591 = vmatprep.subr.mxu0 0.0
    %3592 = vmatpush1.msra.mxu0 0.0
    %3593 = vmatprep.subr.mxu0 0.0
    %3594 = vmatpush1.msra.mxu0 0.0
    %3595 = vmatprep.subr.mxu0 0.0
    %3596 = vmatpush1.msra.mxu0 0.0
    %3597 = vmatprep.subr.mxu0 0.0
    %3598 = vmatpush1.msra.mxu0 0.0
    %3599 = vmatprep.subr.mxu0 0.0
    %3600 = vmatpush1.msra.mxu0 0.0
    %3601 = vmatprep.subr.mxu0 0.0
    %3602 = vmatpush1.msra.mxu0 0.0
    %3603 = vmatprep.subr.mxu0 0.0
    %3604 = vmatpush1.msra.mxu0 0.0
    %3605 = vmatprep.mubr.f32.mxu0 0.0
    %3606 = vmatmul.mubr.f32.gmra.mrb[0].mxu0 %v3539
    %v3607 = vpop.f32.mrb[0].mxu0
    %v3608 = vadd.f32 0.0, %v3607
    %v3609 = vpop.f32.mrb[0].mxu0
    %3610 = vdwg.mxu0
    %vm3611 = vcmask 66560
    %3612 = vst.msk [vmem:[#allocation19] sm:$0x3] %vm3611, %v3608
    // Predicated region
    $region78: #{sequence_model_forward.1} parent=1 // pred_check
      _
    $region79: #{sequence_model_forward.1} parent=1 // pred_check_branch
      %3614 = sbr.rel (0) target = $region81
    $region80: #{sequence_model_forward.1} parent=1 // pred_region
      %s3616 = ssub.s32 32, 32
      %3617 = vsyncadd [#allocation9], %s3616
      %s3619 = sshll.u32 [#allocation18], 4
      %s3620 = int_to_ptr.vmem [resolvable:$true] %s3619
      %3622 = dma.vmem_to_hbm [thread:$0]  %s3620, 32, %s13, [#allocation9]
    $region81: #{sequence_model_forward.1} parent=1 // pred_fallthru
      _
    // Predicated region
    $region82: #{sequence_model_forward.1} parent=1 // pred_check
      _
    $region83: #{sequence_model_forward.1} parent=1 // pred_check_branch
      %3624 = sbr.rel (0) target = $region85
    $region84: #{sequence_model_forward.1} parent=1 // pred_region
      %s3626 = ssub.s32 32, 32
      %3627 = vsyncadd [#allocation20], %s3626
      %s3629 = sshll.u32 [#allocation19], 4
      %s3630 = int_to_ptr.vmem [resolvable:$true] %s3629
      %3632 = dma.vmem_to_hbm [thread:$0]  %s3630, 32, %s14, [#allocation20]
    $region85: #{sequence_model_forward.1} parent=1 // pred_fallthru
      _
    // Predicated region
    $region86: #{sequence_model_forward.1} parent=1 // pred_check
      _
    $region87: #{sequence_model_forward.1} parent=1 // pred_check_branch
      %3634 = sbr.rel (0) target = $region89
    $region88: #{sequence_model_forward.1} parent=1 // pred_region
      %3635 = dma.done [#allocation9], 32
    $region89: #{sequence_model_forward.1} parent=1 // pred_fallthru
      _
    // Predicated region
    $region90: #{sequence_model_forward.1} parent=1 // pred_check
      _
    $region91: #{sequence_model_forward.1} parent=1 // pred_check_branch
      %3637 = sbr.rel (0) target = $region93
    $region92: #{sequence_model_forward.1} parent=1 // pred_region
      %3638 = dma.done [#allocation20], 32
    $region93: #{sequence_model_forward.1} parent=1 // pred_fallthru
      _
    %3639 = vsyncpa [#allocation8], 1
    %3640 = vsyncpa [#allocation11], 1
    %3641 = vsyncpa [#allocation14], 1
    %3642 = vsyncpa [#allocation17], 1
    %3643 = vsyncpa [#allocation9], 1
    %3644 = vsyncpa [#allocation20], 1

</llo_original>
